<compile_context>
chip_gen: v6e
topology: v6e:2x2x1
jax: 0.10.0
libtpu: 0.0.40
codegen_flags: <defaults>
</compile_context>

<pallas_src>
import math

import jax
import jax.numpy as jnp
from jax.experimental import pallas as pl
from jax.experimental.pallas import tpu as pltpu


def _gru_calibrate_kernel(x0_ref, x1_ref, ea_ref, idx_ref, dstrow_ref, hexp_ref,
                          wq_ref, bq_ref, wkve_ref, wkvx_ref, bkv_ref,
                          ww_ref, bw_ref, wih_ref, whh_ref, bih_ref, bhh_ref,
                          out_ref, acc_ref, l_ref, m_ref):
    f32 = jnp.float32
    bf16 = jnp.bfloat16
    TN, D = x0_ref.shape            # node tile
    NP = x1_ref.shape[0]            # all (padded) nodes, for the source gather
    TE = ea_ref.shape[0]            # edge tile
    H, HD = hexp_ref.shape          # heads, heads*hidden

    ei = pl.program_id(1)
    node_start = pl.program_id(0) * TN

    # ---- init accumulators at the start of each node tile's edge sweep -----
    @pl.when(ei == 0)
    def _init():
        acc_ref[...] = jnp.zeros_like(acc_ref)
        l_ref[...] = jnp.zeros_like(l_ref)
        m_ref[...] = jnp.full_like(m_ref, -1e30)

    hexp = hexp_ref[...]                              # [H, HD] f32, hexp[h, h*D:(h+1)*D]=1
    src_col = idx_ref[:, 0:1]                         # [TE, 1] i32
    dst_col = idx_ref[:, 1:2]                         # [TE, 1] i32
    dst_row = dstrow_ref[...]                         # [1, TE] i32

    # ---- one-hot masks rebuilt in-kernel (bf16 0/1 is exact) ----------------
    tile_iota = jax.lax.broadcasted_iota(jnp.int32, (TE, TN), 1) + node_start
    mask_dst_en = tile_iota == dst_col                # [TE, TN] bool (dst in this tile)
    mask_dst_en_b = mask_dst_en.astype(bf16)
    full_iota = jax.lax.broadcasted_iota(jnp.int32, (TE, NP), 1)
    mask_src_en_b = (full_iota == src_col).astype(bf16)   # [TE, NP]
    ne_iota = jax.lax.broadcasted_iota(jnp.int32, (TN, TE), 0) + node_start
    mask_dst_ne = ne_iota == dst_row                  # [TN, TE] bool
    mask_dst_ne_b = mask_dst_ne.astype(bf16)

    # ---- gathers as bf16 mask matmuls, f32 accumulate -----------------------
    # NOTE: out-of-range / out-of-tile dst rows gather zeros; those edges are
    # masked out of every sum below, so this is harmless.
    x0_i = jnp.dot(mask_dst_en_b, x0_ref[...], preferred_element_type=f32)   # x_0[dst]
    x1_j = jnp.dot(mask_src_en_b, x1_ref[...], preferred_element_type=f32)   # x_1[src]

    # ---- split projections: q and fused K|V (no zero blocks, no concat) -----
    q = jnp.dot(x0_i.astype(bf16), wq_ref[...],
                preferred_element_type=f32) + bq_ref[...]                    # [TE, HD]
    kv = (jnp.dot(ea_ref[...], wkve_ref[...], preferred_element_type=f32)
          + jnp.dot(x1_j.astype(bf16), wkvx_ref[...], preferred_element_type=f32)
          + bkv_ref[...])                                                    # [TE, 2HD]
    k = kv[:, :HD]
    v = kv[:, HD:]

    # ---- per-head attention logits (head-sum as MXU contractions) -----------
    qk = q * k                                                               # [TE, HD] f32
    scale = 1.0 / math.sqrt(D)
    dn = (((1,), (1,)), ((), ()))
    a_eh = jax.lax.dot_general(qk, hexp, dn, preferred_element_type=f32) * scale   # [TE, H]
    a_he = jax.lax.dot_general(hexp, qk, dn, preferred_element_type=f32) * scale   # [H, TE]
    a_eh = jnp.where(a_eh > 0, a_eh, 0.2 * a_eh)      # leaky_relu(0.2)
    a_he = jnp.where(a_he > 0, a_he, 0.2 * a_he)

    # ---- online per-target-node segment max ---------------------------------
    neg = jnp.float32(-1e30)
    cols = []
    for h in range(H):      # H static & tiny; one [TN,TE] where-buffer at a time
        masked = jnp.where(mask_dst_ne, a_he[h:h + 1, :], neg)     # [TN, TE]
        cols.append(jnp.max(masked, axis=1, keepdims=True))        # [TN, 1]
    tile_max = jnp.concatenate(cols, axis=1)                       # [TN, H]
    m_old = m_ref[...]
    m_new = jnp.maximum(m_old, tile_max)
    m_ref[...] = m_new
    rescale = jnp.exp(m_old - m_new)                               # [TN, H]

    # gather m_new back to the edges (f32 mask -> shift is exactly consistent)
    edge_max = jnp.dot(mask_dst_en.astype(f32), m_new, preferred_element_type=f32)
    exp_a = jnp.exp(jnp.minimum(a_eh - edge_max, 0.0))             # [TE, H], <= 1

    # ---- weighted messages + two scatter matmuls (same mask LHS) ------------
    # (exp_rep / rescale_rep K=H head-broadcast matmuls are tiny; on v5e they
    #  could be VPU broadcasts instead.)
    exp_rep = jnp.dot(exp_a, hexp, preferred_element_type=f32)     # [TE, HD]
    wv = (exp_rep * v).astype(bf16)
    rescale_rep = jnp.dot(rescale, hexp, preferred_element_type=f32)   # [TN, HD]
    acc_ref[...] = acc_ref[...] * rescale_rep + jnp.dot(
        mask_dst_ne_b, wv, preferred_element_type=f32)
    l_ref[...] = l_ref[...] * rescale + jnp.dot(
        mask_dst_ne_b, exp_a.astype(bf16), preferred_element_type=f32)

    # ---- finalize: normalize, W projection, GRUCell --------------------------
    @pl.when(ei == pl.num_programs(1) - 1)
    def _finalize():
        inv = 1.0 / (l_ref[...] + 1e-16)                           # exact divide
        inv_rep = jnp.dot(inv, hexp, preferred_element_type=f32)   # [TN, HD]
        aggr = acc_ref[...] * inv_rep
        attn = jnp.dot(aggr.astype(bf16), ww_ref[...],
                       preferred_element_type=f32) + bw_ref[...]   # [TN, D]
        gi = jnp.dot(x0_ref[...], wih_ref[...],
                     preferred_element_type=f32) + bih_ref[...]    # [TN, 3D]
        gh = jnp.dot(attn.astype(bf16), whh_ref[...],
                     preferred_element_type=f32) + bhh_ref[...]    # [TN, 3D]
        r = jax.nn.sigmoid(gi[:, :D] + gh[:, :D])
        z = jax.nn.sigmoid(gi[:, D:2 * D] + gh[:, D:2 * D])
        n = jnp.tanh(gi[:, 2 * D:] + r * gh[:, 2 * D:])
        out_ref[...] = ((1.0 - z) * n + z * attn).astype(out_ref.dtype)


def _round_up(x, m):
    return (x + m - 1) // m * m


def gru_calibrate_forward(params, x_0, x_1, edges, edge_types, edge_attr,
                          target_idxes=None, num_heads=1, *,
                          node_tile=None, edge_tile=128):
    """GRUCalibrate.forward — fused AttnConv + GRUCell, grid-tiled pallas_call."""
    del edge_types  # AttnConv.message receives edge_type but never uses it
    N, D = x_0.shape
    E = edge_attr.shape[0]
    H = num_heads
    HD = H * D

    # ---- tiling -------------------------------------------------------------
    TN = node_tile if node_tile is not None else min(_round_up(N, 8), 256)
    TN = _round_up(TN, 8)
    NP = _round_up(max(N, TN), TN)
    if _round_up(E, 8) <= edge_tile:
        TE = _round_up(max(E, 8), 8)      # single edge tile: block == full array
    else:
        assert edge_tile % 128 == 0, "edge_tile must be a multiple of 128"
        TE = edge_tile
    EP = _round_up(E, TE)
    n_node_tiles = NP // TN
    n_edge_tiles = EP // TE

    # ---- pad + pack (bf16 features, lane-dense / compact indices) -----------
    bf16 = jnp.bfloat16
    x0_p = jnp.zeros((NP, D), bf16).at[:N].set(x_0.astype(bf16))
    x1_p = jnp.zeros((NP, D), bf16).at[:N].set(x_1.astype(bf16))
    ea_p = jnp.zeros((EP, D), bf16).at[:E].set(edge_attr.astype(bf16))
    src = edges[0].astype(jnp.int32)
    dst = edges[1].astype(jnp.int32)
    pad_idx = jnp.full((EP,), NP, jnp.int32)      # index NP matches no node
    src_p = pad_idx.at[:E].set(src)
    dst_p = pad_idx.at[:E].set(dst)
    idx_col = jnp.stack([src_p, dst_p], axis=1)               # [EP, 2]
    dst_row = dst_p.reshape(1, EP)                            # [1, EP] lane-dense
    hexp = jnp.repeat(jnp.eye(H, dtype=jnp.float32), D, axis=1)   # [H, HD]

    w = lambda name: params[name].astype(bf16)
    b = lambda name: params[name].astype(jnp.float32)

    def _const_spec(shape):
        return pl.BlockSpec(shape, lambda ni, ei: (0, 0))

    in_specs = [
        pl.BlockSpec((TN, D), lambda ni, ei: (ni, 0)),        # x_0 node tile
        _const_spec((NP, D)),                                  # x_1 (full: src is global)
        pl.BlockSpec((TE, D), lambda ni, ei: (ei, 0)),         # edge_attr tile
        pl.BlockSpec((TE, 2), lambda ni, ei: (ei, 0)),         # [src | dst] per edge
        pl.BlockSpec((1, TE), lambda ni, ei: (0, ei)),         # dst, lane-dense
        _const_spec((H, HD)),                                  # head expander
        _const_spec((D, HD)), _const_spec((1, HD)),            # Wq, bq
        _const_spec((D, 2 * HD)), _const_spec((D, 2 * HD)),    # Wkv_e, Wkv_x
        _const_spec((1, 2 * HD)),                              # bkv
        _const_spec((HD, D)), _const_spec((1, D)),             # Ww, bw
        _const_spec((D, 3 * D)), _const_spec((D, 3 * D)),      # W_ih, W_hh
        _const_spec((1, 3 * D)), _const_spec((1, 3 * D)),      # b_ih, b_hh
    ]

    grid_spec = pltpu.PrefetchScalarGridSpec(
        num_scalar_prefetch=0,
        grid=(n_node_tiles, n_edge_tiles),
        in_specs=in_specs,
        out_specs=pl.BlockSpec((TN, D), lambda ni, ei: (ni, 0)),
        scratch_shapes=[pltpu.VMEM((TN, HD), jnp.float32),     # acc (numerator)
                        pltpu.VMEM((TN, H), jnp.float32),      # l   (denominator)
                        pltpu.VMEM((TN, H), jnp.float32)],     # m   (running max)
    )

    blocks = n_node_tiles * n_edge_tiles
    mm_flops = 2 * blocks * (TE * TN * D + TE * NP * D + TE * D * HD
                             + 2 * TE * D * 2 * HD + 2 * TE * HD * H
                             + TE * TN * H + TE * H * HD + TN * H * HD
                             + TN * TE * (HD + H))
    mm_flops += 2 * n_node_tiles * (TN * H * HD + TN * HD * D + 2 * TN * D * 3 * D)
    trans = blocks * (TE * H + TN * H) + n_node_tiles * TN * (3 * D + H)
    bytes_acc = 2 * (2 * NP * D + EP * D) + 4 * 3 * EP + 4 * NP * D + 2 * (
        D * HD + 2 * D * 2 * HD + HD * D + 2 * D * 3 * D)
    cost = pl.CostEstimate(flops=int(mm_flops), transcendentals=int(trans),
                           bytes_accessed=int(bytes_acc))

    # vmem limit sized from the per-tile working set (double-buffered tiles
    # + full-resident constants + scratch), capped with headroom for v7x.
    tile_bytes = 2 * (TN * D * 2 + TE * D * 2 + TE * 128 * 4 + 128 * 4 + TN * D * 4)
    const_bytes = NP * D * 2 + 4 * max(H, 8) * max(HD, 128) + 2 * (
        D * HD + 2 * D * 2 * HD + HD * D + 2 * D * 3 * D) + 4 * 12 * max(D, 128)
    scratch_bytes = 4 * (TN * max(HD, 128) + 2 * TN * 128)
    vmem_limit = int(min(max(2 * (tile_bytes + const_bytes + scratch_bytes)
                             + (4 << 20), 16 << 20), 56 << 20))

    out = pl.pallas_call(
        _gru_calibrate_kernel,
        out_shape=jax.ShapeDtypeStruct((NP, D), jnp.float32),
        grid_spec=grid_spec,
        compiler_params=pltpu.CompilerParams(
            dimension_semantics=("parallel", "arbitrary"),
            vmem_limit_bytes=vmem_limit),
        cost_estimate=cost,
    )(x0_p, x1_p, ea_p, idx_col, dst_row, hexp,
      w("Wq"), b("bq"), w("Wkv_e"), w("Wkv_x"), b("bkv"),
      w("Ww"), b("bw"), w("W_ih"), w("W_hh"), b("b_ih"), b("b_hh"))

    out = out[:N]
    if target_idxes is not None:
        # GRUCell is row-wise, so computing all nodes then selecting rows is
        # identical to gathering x_0 / attn_message first.
        out = out[jnp.asarray(target_idxes)]
    return out


def init_params(key, hidden_dim, num_heads):
    D, H = hidden_dim, num_heads
    HD = H * D
    ks = jax.random.split(key, 8)

    def glorot(k, fan_in, fan_out):
        a = math.sqrt(6.0 / (fan_in + fan_out))
        return jax.random.uniform(k, (fan_in, fan_out), jnp.float32, -a, a)

    # AttnConv linears (glorot weights, zero biases), stored [in, out].
    Wq = glorot(ks[0], D, HD)
    Wk = glorot(ks[1], 2 * D, HD)          # input = cat(edge_attr, x_1_j)
    Wv = glorot(ks[2], 2 * D, HD)
    Ww = glorot(ks[3], HD, D)

    # GRUCell: torch-style U(-1/sqrt(D), 1/sqrt(D)), gate order (r, z, n).
    s = 1.0 / math.sqrt(D)
    W_ih = jax.random.uniform(ks[4], (D, 3 * D), jnp.float32, -s, s)
    W_hh = jax.random.uniform(ks[5], (D, 3 * D), jnp.float32, -s, s)
    b_ih = jax.random.uniform(ks[6], (1, 3 * D), jnp.float32, -s, s)
    b_hh = jax.random.uniform(ks[7], (1, 3 * D), jnp.float32, -s, s)

    return {
        "Wq": Wq, "bq": jnp.zeros((1, HD), jnp.float32),
        "Wkv_e": jnp.concatenate([Wk[:D], Wv[:D]], axis=1),    # edge_attr rows of K|V
        "Wkv_x": jnp.concatenate([Wk[D:], Wv[D:]], axis=1),    # x_1_j rows of K|V
        "bkv": jnp.zeros((1, 2 * HD), jnp.float32),
        "Ww": Ww, "bw": jnp.zeros((1, D), jnp.float32),
        "W_ih": W_ih, "W_hh": W_hh, "b_ih": b_ih, "b_hh": b_hh,
    }


def _reference_forward(params, x0, x1, src, dst, ea, H):
    """Pure-JAX f32 reference (torch_geometric semantics) for validation."""
    N, D = x0.shape
    HD = H * D
    E = ea.shape[0]
    q = x0[dst] @ params["Wq"] + params["bq"]
    k = ea @ params["Wkv_e"][:, :HD] + x1[src] @ params["Wkv_x"][:, :HD] + params["bkv"][:, :HD]
    v = ea @ params["Wkv_e"][:, HD:] + x1[src] @ params["Wkv_x"][:, HD:] + params["bkv"][:, HD:]
    alpha = (q * k).reshape(E, H, D).sum(-1) / math.sqrt(D)
    alpha = jnp.where(alpha > 0, alpha, 0.2 * alpha)
    seg_max = jax.ops.segment_max(alpha, dst, num_segments=N)
    seg_max = jnp.where(jnp.isfinite(seg_max), seg_max, 0.0)
    e = jnp.exp(alpha - seg_max[dst])
    denom = jax.ops.segment_sum(e, dst, num_segments=N) + 1e-16
    coef = e / denom[dst]
    msg = (coef[:, :, None] * v.reshape(E, H, D)).reshape(E, HD)
    aggr = jax.ops.segment_sum(msg, dst, num_segments=N)
    attn = aggr @ params["Ww"] + params["bw"]
    gi = x0 @ params["W_ih"] + params["b_ih"]
    gh = attn @ params["W_hh"] + params["b_hh"]
    r = jax.nn.sigmoid(gi[:, :D] + gh[:, :D])
    z = jax.nn.sigmoid(gi[:, D:2 * D] + gh[:, D:2 * D])
    n = jnp.tanh(gi[:, 2 * D:] + r * gh[:, 2 * D:])
    return (1.0 - z) * n + z * attn


if __name__ == "__main__":
    key = jax.random.PRNGKey(0)
    N, D, H, E = 16, 32, 2, 200   # nodes, hidden_dim, num_heads, edges

    k_p, k_x0, k_x1, k_ea, k_src, k_dst = jax.random.split(key, 6)
    params = init_params(k_p, D, H)

    x_0 = jax.random.normal(k_x0, (N, D), jnp.float32)
    x_1 = jax.random.normal(k_x1, (N, D), jnp.float32)
    edge_attr = jax.random.normal(k_ea, (E, D), jnp.float32)
    src = jax.random.randint(k_src, (E,), 0, N, jnp.int32)
    dst = jax.random.randint(k_dst, (E,), 0, N, jnp.int32)
    edges = jnp.stack([src, dst], axis=0)                 # [2, E]
    edge_types = jnp.zeros((E,), jnp.int32)               # unused by forward

    # node_tile=8 / edge_tile=128 -> grid (2 node tiles "parallel", 2 edge tiles "arbitrary")
    out = gru_calibrate_forward(params, x_0, x_1, edges, edge_types, edge_attr,
                                target_idxes=None, num_heads=H,
                                node_tile=8, edge_tile=128)
    jax.block_until_ready(out)
    assert out.shape == (N, D)

    ref = _reference_forward(params, x_0, x_1, src, dst, edge_attr, H)
    err = float(jnp.max(jnp.abs(out - ref)))
    assert err < 0.25, f"max abs error vs f32 reference too large: {err}"
    print("KERNEL_OK")
</pallas_src>

<mosaic_0001>
module attributes {stable_mosaic.version = 11 : i64} {
  func.func @_gru_calibrate_kernel(%arg0: i32, %arg1: i32, %arg2: memref<8x32xbf16, #tpu.memory_space<vmem>>, %arg3: memref<16x32xbf16, #tpu.memory_space<vmem>>, %arg4: memref<128x32xbf16, #tpu.memory_space<vmem>>, %arg5: memref<128x2xi32, #tpu.memory_space<vmem>>, %arg6: memref<1x128xi32, #tpu.memory_space<vmem>>, %arg7: memref<2x64xf32, #tpu.memory_space<vmem>>, %arg8: memref<32x64xbf16, #tpu.memory_space<vmem>>, %arg9: memref<1x64xf32, #tpu.memory_space<vmem>>, %arg10: memref<32x128xbf16, #tpu.memory_space<vmem>>, %arg11: memref<32x128xbf16, #tpu.memory_space<vmem>>, %arg12: memref<1x128xf32, #tpu.memory_space<vmem>>, %arg13: memref<64x32xbf16, #tpu.memory_space<vmem>>, %arg14: memref<1x32xf32, #tpu.memory_space<vmem>>, %arg15: memref<32x96xbf16, #tpu.memory_space<vmem>>, %arg16: memref<32x96xbf16, #tpu.memory_space<vmem>>, %arg17: memref<1x96xf32, #tpu.memory_space<vmem>>, %arg18: memref<1x96xf32, #tpu.memory_space<vmem>>, %arg19: memref<8x32xf32, #tpu.memory_space<vmem>>, %arg20: memref<8x64xf32, #tpu.memory_space<vmem>>, %arg21: memref<8x2xf32, #tpu.memory_space<vmem>>, %arg22: memref<8x2xf32, #tpu.memory_space<vmem>>) attributes {dimension_semantics = [#tpu.dimension_semantics<parallel>, #tpu.dimension_semantics<arbitrary>], iteration_bounds = array<i64: 2, 2>, scalar_prefetch = 0 : i64, scratch_operands = 3 : i64, tpu.core_type = #tpu.core_type<tc>, window_params = [{transform_indices = @transform_0, window_bounds = array<i64: 8, 32>}, {pipeline_mode = #tpu.pipeline_mode<synchronous>, transform_indices = @transform_1, window_bounds = array<i64: 16, 32>}, {transform_indices = @transform_2, window_bounds = array<i64: 128, 32>}, {transform_indices = @transform_3, window_bounds = array<i64: 128, 2>}, {transform_indices = @transform_4, window_bounds = array<i64: 1, 128>}, {pipeline_mode = #tpu.pipeline_mode<synchronous>, transform_indices = @transform_5, window_bounds = array<i64: 2, 64>}, {pipeline_mode = #tpu.pipeline_mode<synchronous>, transform_indices = @transform_6, window_bounds = array<i64: 32, 64>}, {pipeline_mode = #tpu.pipeline_mode<synchronous>, transform_indices = @transform_7, window_bounds = array<i64: 1, 64>}, {pipeline_mode = #tpu.pipeline_mode<synchronous>, transform_indices = @transform_8, window_bounds = array<i64: 32, 128>}, {pipeline_mode = #tpu.pipeline_mode<synchronous>, transform_indices = @transform_9, window_bounds = array<i64: 32, 128>}, {pipeline_mode = #tpu.pipeline_mode<synchronous>, transform_indices = @transform_10, window_bounds = array<i64: 1, 128>}, {pipeline_mode = #tpu.pipeline_mode<synchronous>, transform_indices = @transform_11, window_bounds = array<i64: 64, 32>}, {pipeline_mode = #tpu.pipeline_mode<synchronous>, transform_indices = @transform_12, window_bounds = array<i64: 1, 32>}, {pipeline_mode = #tpu.pipeline_mode<synchronous>, transform_indices = @transform_13, window_bounds = array<i64: 32, 96>}, {pipeline_mode = #tpu.pipeline_mode<synchronous>, transform_indices = @transform_14, window_bounds = array<i64: 32, 96>}, {pipeline_mode = #tpu.pipeline_mode<synchronous>, transform_indices = @transform_15, window_bounds = array<i64: 1, 96>}, {pipeline_mode = #tpu.pipeline_mode<synchronous>, transform_indices = @transform_16, window_bounds = array<i64: 1, 96>}, {transform_indices = @transform_17, window_bounds = array<i64: 8, 32>}]} {
    %c8_i32 = arith.constant 8 : i32
    %0 = arith.muli %arg0, %c8_i32 : i32
    %c0_i32 = arith.constant 0 : i32
    %1 = arith.cmpi eq, %arg1, %c0_i32 : i32
    %2 = arith.extui %1 : i1 to i32
    %c0_i32_0 = arith.constant 0 : i32
    %3 = arith.cmpi ne, %2, %c0_i32_0 : i32
    scf.if %3 {
      %cst_58 = arith.constant 0.000000e+00 : f32
      %114 = vector.broadcast %cst_58 : f32 to vector<8x64xf32>
      %c0_59 = arith.constant 0 : index
      %c0_60 = arith.constant 0 : index
      %115 = vector.load %arg20[%c0_59, %c0_60] : memref<8x64xf32, #tpu.memory_space<vmem>>, vector<8x64xf32>
      tpu.vector_store %arg20[%c0_59, %c0_60], %114 {strides = array<i32>} : memref<8x64xf32, #tpu.memory_space<vmem>>, vector<8x64xf32>,
      %cst_61 = arith.constant 0.000000e+00 : f32
      %116 = vector.broadcast %cst_61 : f32 to vector<8x2xf32>
      %c0_62 = arith.constant 0 : index
      %c0_63 = arith.constant 0 : index
      %117 = vector.load %arg21[%c0_62, %c0_63] : memref<8x2xf32, #tpu.memory_space<vmem>>, vector<8x2xf32>
      tpu.vector_store %arg21[%c0_62, %c0_63], %116 {strides = array<i32>} : memref<8x2xf32, #tpu.memory_space<vmem>>, vector<8x2xf32>,
      %cst_64 = arith.constant -1.000000e+30 : f32
      %118 = vector.broadcast %cst_64 : f32 to vector<8x2xf32>
      %c0_65 = arith.constant 0 : index
      %c0_66 = arith.constant 0 : index
      %119 = vector.load %arg22[%c0_65, %c0_66] : memref<8x2xf32, #tpu.memory_space<vmem>>, vector<8x2xf32>
      tpu.vector_store %arg22[%c0_65, %c0_66], %118 {strides = array<i32>} : memref<8x2xf32, #tpu.memory_space<vmem>>, vector<8x2xf32>,
    } else {
    }
    %c0 = arith.constant 0 : index
    %c0_1 = arith.constant 0 : index
    %4 = vector.load %arg7[%c0, %c0_1] : memref<2x64xf32, #tpu.memory_space<vmem>>, vector<2x64xf32>
    %c0_2 = arith.constant 0 : index
    %c0_3 = arith.constant 0 : index
    %5 = vector.load %arg5[%c0_2, %c0_3] : memref<128x2xi32, #tpu.memory_space<vmem>>, vector<128x1xi32>
    %c0_4 = arith.constant 0 : index
    %c1 = arith.constant 1 : index
    %6 = vector.load %arg5[%c0_4, %c1] : memref<128x2xi32, #tpu.memory_space<vmem>>, vector<128x1xi32>
    %c0_5 = arith.constant 0 : index
    %c0_6 = arith.constant 0 : index
    %7 = vector.load %arg6[%c0_5, %c0_6] : memref<1x128xi32, #tpu.memory_space<vmem>>, vector<1x128xi32>
    %8 = tpu.iota {dimensions = array<i32: 1>} : vector<128x8xi32>
    %9 = vector.broadcast %0 : i32 to vector<128x8xi32>
    %10 = arith.addi %8, %9 : vector<128x8xi32>
    %11 = vector.broadcast %6 : vector<128x1xi32> to vector<128x8xi32>
    %12 = arith.cmpi eq, %10, %11 : vector<128x8xi32>
    %13 = arith.extui %12 : vector<128x8xi1> to vector<128x8xi32>
    %14 = arith.sitofp %13 : vector<128x8xi32> to vector<128x8xf32>
    %15 = arith.truncf %14 : vector<128x8xf32> to vector<128x8xbf16>
    %16 = tpu.iota {dimensions = array<i32: 1>} : vector<128x16xi32>
    %17 = vector.broadcast %5 : vector<128x1xi32> to vector<128x16xi32>
    %18 = arith.cmpi eq, %16, %17 : vector<128x16xi32>
    %19 = arith.extui %18 : vector<128x16xi1> to vector<128x16xi32>
    %20 = arith.sitofp %19 : vector<128x16xi32> to vector<128x16xf32>
    %21 = arith.truncf %20 : vector<128x16xf32> to vector<128x16xbf16>
    %22 = tpu.iota {dimensions = array<i32: 0>} : vector<8x128xi32>
    %23 = vector.broadcast %0 : i32 to vector<8x128xi32>
    %24 = arith.addi %22, %23 : vector<8x128xi32>
    %25 = vector.broadcast %7 : vector<1x128xi32> to vector<8x128xi32>
    %26 = arith.cmpi eq, %24, %25 : vector<8x128xi32>
    %27 = arith.extui %26 : vector<8x128xi1> to vector<8x128xi32>
    %28 = arith.sitofp %27 : vector<8x128xi32> to vector<8x128xf32>
    %29 = arith.truncf %28 : vector<8x128xf32> to vector<8x128xbf16>
    %c0_7 = arith.constant 0 : index
    %c0_8 = arith.constant 0 : index
    %30 = vector.load %arg2[%c0_7, %c0_8] : memref<8x32xbf16, #tpu.memory_space<vmem>>, vector<8x32xbf16>
    %cst = arith.constant dense<0.000000e+00> : vector<128x32xf32>
    %31 = tpu.matmul %15, %30, %cst {dimension_numbers = #tpu.dot_dimension_numbers<[1], [0], [0], [1], [0, 0, 1, 1], [], []>} : vector<128x8xbf16>, vector<8x32xbf16>, vector<128x32xf32> -> vector<128x32xf32>
    %c0_9 = arith.constant 0 : index
    %c0_10 = arith.constant 0 : index
    %32 = vector.load %arg3[%c0_9, %c0_10] : memref<16x32xbf16, #tpu.memory_space<vmem>>, vector<16x32xbf16>
    %cst_11 = arith.constant dense<0.000000e+00> : vector<128x32xf32>
    %33 = tpu.matmul %21, %32, %cst_11 {dimension_numbers = #tpu.dot_dimension_numbers<[1], [0], [0], [1], [0, 0, 1, 1], [], []>} : vector<128x16xbf16>, vector<16x32xbf16>, vector<128x32xf32> -> vector<128x32xf32>
    %34 = arith.truncf %31 : vector<128x32xf32> to vector<128x32xbf16>
    %c0_12 = arith.constant 0 : index
    %c0_13 = arith.constant 0 : index
    %35 = vector.load %arg8[%c0_12, %c0_13] : memref<32x64xbf16, #tpu.memory_space<vmem>>, vector<32x64xbf16>
    %cst_14 = arith.constant dense<0.000000e+00> : vector<128x64xf32>
    %36 = tpu.matmul %34, %35, %cst_14 {dimension_numbers = #tpu.dot_dimension_numbers<[1], [0], [0], [1], [0, 0, 1, 1], [], []>} : vector<128x32xbf16>, vector<32x64xbf16>, vector<128x64xf32> -> vector<128x64xf32>
    %c0_15 = arith.constant 0 : index
    %c0_16 = arith.constant 0 : index
    %37 = vector.load %arg9[%c0_15, %c0_16] : memref<1x64xf32, #tpu.memory_space<vmem>>, vector<1x64xf32>
    %38 = vector.broadcast %37 : vector<1x64xf32> to vector<128x64xf32>
    %39 = arith.addf %36, %38 : vector<128x64xf32>
    %c0_17 = arith.constant 0 : index
    %c0_18 = arith.constant 0 : index
    %40 = vector.load %arg4[%c0_17, %c0_18] : memref<128x32xbf16, #tpu.memory_space<vmem>>, vector<128x32xbf16>
    %c0_19 = arith.constant 0 : index
    %c0_20 = arith.constant 0 : index
    %41 = vector.load %arg10[%c0_19, %c0_20] : memref<32x128xbf16, #tpu.memory_space<vmem>>, vector<32x128xbf16>
    %cst_21 = arith.constant dense<0.000000e+00> : vector<128x128xf32>
    %42 = tpu.matmul %40, %41, %cst_21 {dimension_numbers = #tpu.dot_dimension_numbers<[1], [0], [0], [1], [0, 0, 1, 1], [], []>} : vector<128x32xbf16>, vector<32x128xbf16>, vector<128x128xf32> -> vector<128x128xf32>
    %43 = arith.truncf %33 : vector<128x32xf32> to vector<128x32xbf16>
    %c0_22 = arith.constant 0 : index
    %c0_23 = arith.constant 0 : index
    %44 = vector.load %arg11[%c0_22, %c0_23] : memref<32x128xbf16, #tpu.memory_space<vmem>>, vector<32x128xbf16>
    %cst_24 = arith.constant dense<0.000000e+00> : vector<128x128xf32>
    %45 = tpu.matmul %43, %44, %cst_24 {dimension_numbers = #tpu.dot_dimension_numbers<[1], [0], [0], [1], [0, 0, 1, 1], [], []>} : vector<128x32xbf16>, vector<32x128xbf16>, vector<128x128xf32> -> vector<128x128xf32>
    %46 = arith.addf %42, %45 : vector<128x128xf32>
    %c0_25 = arith.constant 0 : index
    %c0_26 = arith.constant 0 : index
    %47 = vector.load %arg12[%c0_25, %c0_26] : memref<1x128xf32, #tpu.memory_space<vmem>>, vector<1x128xf32>
    %48 = vector.broadcast %47 : vector<1x128xf32> to vector<128x128xf32>
    %49 = arith.addf %46, %48 : vector<128x128xf32>
    %50 = vector.extract_strided_slice %49 {offsets = [0, 0], sizes = [128, 64], strides = [1, 1]} : vector<128x128xf32> to vector<128x64xf32>
    %51 = vector.extract_strided_slice %49 {offsets = [0, 64], sizes = [128, 64], strides = [1, 1]} : vector<128x128xf32> to vector<128x64xf32>
    %52 = arith.mulf %39, %50 : vector<128x64xf32>
    %cst_27 = arith.constant dense<0.000000e+00> : vector<128x2xf32>
    %53 = tpu.matmul %52, %4, %cst_27 {dimension_numbers = #tpu.dot_dimension_numbers<[1], [1], [0], [0], [0, 0, 1, 0], [], []>} : vector<128x64xf32>, vector<2x64xf32>, vector<128x2xf32> -> vector<128x2xf32>
    %cst_28 = arith.constant 0.176776692 : f32
    %54 = vector.broadcast %cst_28 : f32 to vector<128x2xf32>
    %55 = arith.mulf %53, %54 : vector<128x2xf32>
    %cst_29 = arith.constant dense<0.000000e+00> : vector<2x128xf32>
    %56 = tpu.matmul %4, %52, %cst_29 {dimension_numbers = #tpu.dot_dimension_numbers<[1], [1], [0], [0], [0, 0, 1, 0], [], []>} : vector<2x64xf32>, vector<128x64xf32>, vector<2x128xf32> -> vector<2x128xf32>
    %cst_30 = arith.constant 0.176776692 : f32
    %57 = vector.broadcast %cst_30 : f32 to vector<2x128xf32>
    %58 = arith.mulf %56, %57 : vector<2x128xf32>
    %cst_31 = arith.constant 0.000000e+00 : f32
    %59 = vector.broadcast %cst_31 : f32 to vector<128x2xf32>
    %60 = arith.cmpf ogt, %55, %59 : vector<128x2xf32>
    %cst_32 = arith.constant 2.000000e-01 : f32
    %61 = vector.broadcast %cst_32 : f32 to vector<128x2xf32>
    %62 = arith.mulf %61, %55 : vector<128x2xf32>
    %63 = arith.select %60, %55, %62 : vector<128x2xi1>, vector<128x2xf32>
    %cst_33 = arith.constant 0.000000e+00 : f32
    %64 = vector.broadcast %cst_33 : f32 to vector<2x128xf32>
    %65 = arith.cmpf ogt, %58, %64 : vector<2x128xf32>
    %cst_34 = arith.constant 2.000000e-01 : f32
    %66 = vector.broadcast %cst_34 : f32 to vector<2x128xf32>
    %67 = arith.mulf %66, %58 : vector<2x128xf32>
    %68 = arith.select %65, %58, %67 : vector<2x128xi1>, vector<2x128xf32>
    %69 = vector.extract_strided_slice %68 {offsets = [0, 0], sizes = [1, 128], strides = [1, 1]} : vector<2x128xf32> to vector<1x128xf32>
    %cst_35 = arith.constant -1.000000e+30 : f32
    %70 = vector.shape_cast %69 : vector<1x128xf32> to vector<1x128xf32>
    %71 = vector.broadcast %70 : vector<1x128xf32> to vector<8x128xf32>
    %72 = vector.broadcast %cst_35 : f32 to vector<8x128xf32>
    %73 = arith.select %26, %71, %72 : vector<8x128xi1>, vector<8x128xf32>
    %cst_36 = arith.constant dense<0xFF800000> : vector<8xf32>
    %74 = vector.multi_reduction <maximumf>, %73, %cst_36 [1] : vector<8x128xf32> to vector<8xf32>
    %75 = vector.shape_cast %74 : vector<8xf32> to vector<8x1xf32>
    %76 = vector.extract_strided_slice %68 {offsets = [1, 0], sizes = [1, 128], strides = [1, 1]} : vector<2x128xf32> to vector<1x128xf32>
    %cst_37 = arith.constant -1.000000e+30 : f32
    %77 = vector.shape_cast %76 : vector<1x128xf32> to vector<1x128xf32>
    %78 = vector.broadcast %77 : vector<1x128xf32> to vector<8x128xf32>
    %79 = vector.broadcast %cst_37 : f32 to vector<8x128xf32>
    %80 = arith.select %26, %78, %79 : vector<8x128xi1>, vector<8x128xf32>
    %cst_38 = arith.constant dense<0xFF800000> : vector<8xf32>
    %81 = vector.multi_reduction <maximumf>, %80, %cst_38 [1] : vector<8x128xf32> to vector<8xf32>
    %82 = vector.shape_cast %81 : vector<8xf32> to vector<8x1xf32>
    %83 = tpu.concatenate %75, %82 in 1 : vector<8x1xf32>, vector<8x1xf32> -> vector<8x2xf32>
    %c0_39 = arith.constant 0 : index
    %c0_40 = arith.constant 0 : index
    %84 = vector.load %arg22[%c0_39, %c0_40] : memref<8x2xf32, #tpu.memory_space<vmem>>, vector<8x2xf32>
    %85 = arith.maximumf %84, %83 : vector<8x2xf32>
    %c0_41 = arith.constant 0 : index
    %c0_42 = arith.constant 0 : index
    %86 = vector.load %arg22[%c0_41, %c0_42] : memref<8x2xf32, #tpu.memory_space<vmem>>, vector<8x2xf32>
    tpu.vector_store %arg22[%c0_41, %c0_42], %85 {strides = array<i32>} : memref<8x2xf32, #tpu.memory_space<vmem>>, vector<8x2xf32>,
    %87 = arith.subf %84, %85 : vector<8x2xf32>
    %88 = math.exp %87 : vector<8x2xf32>
    %89 = arith.extui %12 : vector<128x8xi1> to vector<128x8xi32>
    %90 = arith.sitofp %89 : vector<128x8xi32> to vector<128x8xf32>
    %cst_43 = arith.constant dense<0.000000e+00> : vector<128x2xf32>
    %91 = tpu.matmul %90, %85, %cst_43 {dimension_numbers = #tpu.dot_dimension_numbers<[1], [0], [0], [1], [0, 0, 1, 1], [], []>} : vector<128x8xf32>, vector<8x2xf32>, vector<128x2xf32> -> vector<128x2xf32>
    %92 = arith.subf %63, %91 : vector<128x2xf32>
    %cst_44 = arith.constant 0.000000e+00 : f32
    %93 = vector.broadcast %cst_44 : f32 to vector<128x2xf32>
    %94 = arith.minimumf %92, %93 : vector<128x2xf32>
    %95 = math.exp %94 : vector<128x2xf32>
    %cst_45 = arith.constant dense<0.000000e+00> : vector<128x64xf32>
    %96 = tpu.matmul %95, %4, %cst_45 {dimension_numbers = #tpu.dot_dimension_numbers<[1], [0], [0], [1], [0, 0, 1, 1], [], []>} : vector<128x2xf32>, vector<2x64xf32>, vector<128x64xf32> -> vector<128x64xf32>
    %97 = arith.mulf %96, %51 : vector<128x64xf32>
    %98 = arith.truncf %97 : vector<128x64xf32> to vector<128x64xbf16>
    %cst_46 = arith.constant dense<0.000000e+00> : vector<8x64xf32>
    %99 = tpu.matmul %88, %4, %cst_46 {dimension_numbers = #tpu.dot_dimension_numbers<[1], [0], [0], [1], [0, 0, 1, 1], [], []>} : vector<8x2xf32>, vector<2x64xf32>, vector<8x64xf32> -> vector<8x64xf32>
    %c0_47 = arith.constant 0 : index
    %c0_48 = arith.constant 0 : index
    %100 = vector.load %arg20[%c0_47, %c0_48] : memref<8x64xf32, #tpu.memory_space<vmem>>, vector<8x64xf32>
    %101 = arith.mulf %100, %99 : vector<8x64xf32>
    %cst_49 = arith.constant dense<0.000000e+00> : vector<8x64xf32>
    %102 = tpu.matmul %29, %98, %cst_49 {dimension_numbers = #tpu.dot_dimension_numbers<[1], [0], [0], [1], [0, 0, 1, 1], [], []>} : vector<8x128xbf16>, vector<128x64xbf16>, vector<8x64xf32> -> vector<8x64xf32>
    %103 = arith.addf %101, %102 : vector<8x64xf32>
    %c0_50 = arith.constant 0 : index
    %c0_51 = arith.constant 0 : index
    %104 = vector.load %arg20[%c0_50, %c0_51] : memref<8x64xf32, #tpu.memory_space<vmem>>, vector<8x64xf32>
    tpu.vector_store %arg20[%c0_50, %c0_51], %103 {strides = array<i32>} : memref<8x64xf32, #tpu.memory_space<vmem>>, vector<8x64xf32>,
    %c0_52 = arith.constant 0 : index
    %c0_53 = arith.constant 0 : index
    %105 = vector.load %arg21[%c0_52, %c0_53] : memref<8x2xf32, #tpu.memory_space<vmem>>, vector<8x2xf32>
    %106 = arith.mulf %105, %88 : vector<8x2xf32>
    %107 = arith.truncf %95 : vector<128x2xf32> to vector<128x2xbf16>
    %cst_54 = arith.constant dense<0.000000e+00> : vector<8x2xf32>
    %108 = tpu.matmul %29, %107, %cst_54 {dimension_numbers = #tpu.dot_dimension_numbers<[1], [0], [0], [1], [0, 0, 1, 1], [], []>} : vector<8x128xbf16>, vector<128x2xbf16>, vector<8x2xf32> -> vector<8x2xf32>
    %109 = arith.addf %106, %108 : vector<8x2xf32>
    %c0_55 = arith.constant 0 : index
    %c0_56 = arith.constant 0 : index
    %110 = vector.load %arg21[%c0_55, %c0_56] : memref<8x2xf32, #tpu.memory_space<vmem>>, vector<8x2xf32>
    tpu.vector_store %arg21[%c0_55, %c0_56], %109 {strides = array<i32>} : memref<8x2xf32, #tpu.memory_space<vmem>>, vector<8x2xf32>,
    %c1_i32 = arith.constant 1 : i32
    %111 = arith.cmpi eq, %arg1, %c1_i32 : i32
    %112 = arith.extui %111 : i1 to i32
    %c0_i32_57 = arith.constant 0 : i32
    %113 = arith.cmpi ne, %112, %c0_i32_57 : i32
    scf.if %113 {
      %c0_58 = arith.constant 0 : index
      %c0_59 = arith.constant 0 : index
      %114 = vector.load %arg21[%c0_58, %c0_59] : memref<8x2xf32, #tpu.memory_space<vmem>>, vector<8x2xf32>
      %cst_60 = arith.constant 1.000000e-16 : f32
      %115 = vector.broadcast %cst_60 : f32 to vector<8x2xf32>
      %116 = arith.addf %114, %115 : vector<8x2xf32>
      %cst_61 = arith.constant 1.000000e+00 : f32
      %117 = vector.broadcast %cst_61 : f32 to vector<8x2xf32>
      %118 = arith.divf %117, %116 : vector<8x2xf32>
      %cst_62 = arith.constant dense<0.000000e+00> : vector<8x64xf32>
      %119 = tpu.matmul %118, %4, %cst_62 {dimension_numbers = #tpu.dot_dimension_numbers<[1], [0], [0], [1], [0, 0, 1, 1], [], []>} : vector<8x2xf32>, vector<2x64xf32>, vector<8x64xf32> -> vector<8x64xf32>
      %c0_63 = arith.constant 0 : index
      %c0_64 = arith.constant 0 : index
      %120 = vector.load %arg20[%c0_63, %c0_64] : memref<8x64xf32, #tpu.memory_space<vmem>>, vector<8x64xf32>
      %121 = arith.mulf %120, %119 : vector<8x64xf32>
      %122 = arith.truncf %121 : vector<8x64xf32> to vector<8x64xbf16>
      %c0_65 = arith.constant 0 : index
      %c0_66 = arith.constant 0 : index
      %123 = vector.load %arg13[%c0_65, %c0_66] : memref<64x32xbf16, #tpu.memory_space<vmem>>, vector<64x32xbf16>
      %cst_67 = arith.constant dense<0.000000e+00> : vector<8x32xf32>
      %124 = tpu.matmul %122, %123, %cst_67 {dimension_numbers = #tpu.dot_dimension_numbers<[1], [0], [0], [1], [0, 0, 1, 1], [], []>} : vector<8x64xbf16>, vector<64x32xbf16>, vector<8x32xf32> -> vector<8x32xf32>
      %c0_68 = arith.constant 0 : index
      %c0_69 = arith.constant 0 : index
      %125 = vector.load %arg14[%c0_68, %c0_69] : memref<1x32xf32, #tpu.memory_space<vmem>>, vector<1x32xf32>
      %126 = vector.broadcast %125 : vector<1x32xf32> to vector<8x32xf32>
      %127 = arith.addf %124, %126 : vector<8x32xf32>
      %c0_70 = arith.constant 0 : index
      %c0_71 = arith.constant 0 : index
      %128 = vector.load %arg2[%c0_70, %c0_71] : memref<8x32xbf16, #tpu.memory_space<vmem>>, vector<8x32xbf16>
      %c0_72 = arith.constant 0 : index
      %c0_73 = arith.constant 0 : index
      %129 = vector.load %arg15[%c0_72, %c0_73] : memref<32x96xbf16, #tpu.memory_space<vmem>>, vector<32x96xbf16>
      %cst_74 = arith.constant dense<0.000000e+00> : vector<8x96xf32>
      %130 = tpu.matmul %128, %129, %cst_74 {dimension_numbers = #tpu.dot_dimension_numbers<[1], [0], [0], [1], [0, 0, 1, 1], [], []>} : vector<8x32xbf16>, vector<32x96xbf16>, vector<8x96xf32> -> vector<8x96xf32>
      %c0_75 = arith.constant 0 : index
      %c0_76 = arith.constant 0 : index
      %131 = vector.load %arg17[%c0_75, %c0_76] : memref<1x96xf32, #tpu.memory_space<vmem>>, vector<1x96xf32>
      %132 = vector.broadcast %131 : vector<1x96xf32> to vector<8x96xf32>
      %133 = arith.addf %130, %132 : vector<8x96xf32>
      %134 = arith.truncf %127 : vector<8x32xf32> to vector<8x32xbf16>
      %c0_77 = arith.constant 0 : index
      %c0_78 = arith.constant 0 : index
      %135 = vector.load %arg16[%c0_77, %c0_78] : memref<32x96xbf16, #tpu.memory_space<vmem>>, vector<32x96xbf16>
      %cst_79 = arith.constant dense<0.000000e+00> : vector<8x96xf32>
      %136 = tpu.matmul %134, %135, %cst_79 {dimension_numbers = #tpu.dot_dimension_numbers<[1], [0], [0], [1], [0, 0, 1, 1], [], []>} : vector<8x32xbf16>, vector<32x96xbf16>, vector<8x96xf32> -> vector<8x96xf32>
      %c0_80 = arith.constant 0 : index
      %c0_81 = arith.constant 0 : index
      %137 = vector.load %arg18[%c0_80, %c0_81] : memref<1x96xf32, #tpu.memory_space<vmem>>, vector<1x96xf32>
      %138 = vector.broadcast %137 : vector<1x96xf32> to vector<8x96xf32>
      %139 = arith.addf %136, %138 : vector<8x96xf32>
      %140 = vector.extract_strided_slice %133 {offsets = [0, 0], sizes = [8, 32], strides = [1, 1]} : vector<8x96xf32> to vector<8x32xf32>
      %141 = vector.extract_strided_slice %139 {offsets = [0, 0], sizes = [8, 32], strides = [1, 1]} : vector<8x96xf32> to vector<8x32xf32>
      %142 = arith.addf %140, %141 : vector<8x32xf32>
      %143 = arith.negf %142 : vector<8x32xf32>
      %144 = math.exp %143 : vector<8x32xf32>
      %cst_82 = arith.constant 1.000000e+00 : f32
      %145 = vector.broadcast %cst_82 : f32 to vector<8x32xf32>
      %146 = arith.addf %145, %144 : vector<8x32xf32>
      %147 = arith.divf %145, %146 : vector<8x32xf32>
      %148 = vector.extract_strided_slice %133 {offsets = [0, 32], sizes = [8, 32], strides = [1, 1]} : vector<8x96xf32> to vector<8x32xf32>
      %149 = vector.extract_strided_slice %139 {offsets = [0, 32], sizes = [8, 32], strides = [1, 1]} : vector<8x96xf32> to vector<8x32xf32>
      %150 = arith.addf %148, %149 : vector<8x32xf32>
      %151 = arith.negf %150 : vector<8x32xf32>
      %152 = math.exp %151 : vector<8x32xf32>
      %cst_83 = arith.constant 1.000000e+00 : f32
      %153 = vector.broadcast %cst_83 : f32 to vector<8x32xf32>
      %154 = arith.addf %153, %152 : vector<8x32xf32>
      %155 = arith.divf %153, %154 : vector<8x32xf32>
      %156 = vector.extract_strided_slice %133 {offsets = [0, 64], sizes = [8, 32], strides = [1, 1]} : vector<8x96xf32> to vector<8x32xf32>
      %157 = vector.extract_strided_slice %139 {offsets = [0, 64], sizes = [8, 32], strides = [1, 1]} : vector<8x96xf32> to vector<8x32xf32>
      %158 = arith.mulf %147, %157 : vector<8x32xf32>
      %159 = arith.addf %156, %158 : vector<8x32xf32>
      %160 = math.tanh %159 : vector<8x32xf32>
      %cst_84 = arith.constant 1.000000e+00 : f32
      %161 = vector.broadcast %cst_84 : f32 to vector<8x32xf32>
      %162 = arith.subf %161, %155 : vector<8x32xf32>
      %163 = arith.mulf %162, %160 : vector<8x32xf32>
      %164 = arith.mulf %155, %127 : vector<8x32xf32>
      %165 = arith.addf %163, %164 : vector<8x32xf32>
      %c0_85 = arith.constant 0 : index
      %c0_86 = arith.constant 0 : index
      %166 = vector.load %arg19[%c0_85, %c0_86] : memref<8x32xf32, #tpu.memory_space<vmem>>, vector<8x32xf32>
      tpu.vector_store %arg19[%c0_85, %c0_86], %165 {strides = array<i32>} : memref<8x32xf32, #tpu.memory_space<vmem>>, vector<8x32xf32>,
    } else {
    }
    return
  }
  func.func @transform_0(%arg0: i32, %arg1: i32) -> (i32, i32) {
    %c0_i32 = arith.constant 0 : i32
    %c0_i32_0 = arith.constant 0 : i32
    return %arg0, %c0_i32 : i32, i32
  }
  func.func @transform_1(%arg0: i32, %arg1: i32) -> (i32, i32) {
    %c0_i32 = arith.constant 0 : i32
    %c0_i32_0 = arith.constant 0 : i32
    %c0_i32_1 = arith.constant 0 : i32
    return %c0_i32, %c0_i32_0 : i32, i32
  }
  func.func @transform_2(%arg0: i32, %arg1: i32) -> (i32, i32) {
    %c0_i32 = arith.constant 0 : i32
    %c0_i32_0 = arith.constant 0 : i32
    return %arg1, %c0_i32 : i32, i32
  }
  func.func @transform_3(%arg0: i32, %arg1: i32) -> (i32, i32) {
    %c0_i32 = arith.constant 0 : i32
    %c0_i32_0 = arith.constant 0 : i32
    return %arg1, %c0_i32 : i32, i32
  }
  func.func @transform_4(%arg0: i32, %arg1: i32) -> (i32, i32) {
    %c0_i32 = arith.constant 0 : i32
    %c0_i32_0 = arith.constant 0 : i32
    return %c0_i32, %arg1 : i32, i32
  }
  func.func @transform_5(%arg0: i32, %arg1: i32) -> (i32, i32) {
    %c0_i32 = arith.constant 0 : i32
    %c0_i32_0 = arith.constant 0 : i32
    %c0_i32_1 = arith.constant 0 : i32
    return %c0_i32, %c0_i32_0 : i32, i32
  }
  func.func @transform_6(%arg0: i32, %arg1: i32) -> (i32, i32) {
    %c0_i32 = arith.constant 0 : i32
    %c0_i32_0 = arith.constant 0 : i32
    %c0_i32_1 = arith.constant 0 : i32
    return %c0_i32, %c0_i32_0 : i32, i32
  }
  func.func @transform_7(%arg0: i32, %arg1: i32) -> (i32, i32) {
    %c0_i32 = arith.constant 0 : i32
    %c0_i32_0 = arith.constant 0 : i32
    %c0_i32_1 = arith.constant 0 : i32
    return %c0_i32, %c0_i32_0 : i32, i32
  }
  func.func @transform_8(%arg0: i32, %arg1: i32) -> (i32, i32) {
    %c0_i32 = arith.constant 0 : i32
    %c0_i32_0 = arith.constant 0 : i32
    %c0_i32_1 = arith.constant 0 : i32
    return %c0_i32, %c0_i32_0 : i32, i32
  }
  func.func @transform_9(%arg0: i32, %arg1: i32) -> (i32, i32) {
    %c0_i32 = arith.constant 0 : i32
    %c0_i32_0 = arith.constant 0 : i32
    %c0_i32_1 = arith.constant 0 : i32
    return %c0_i32, %c0_i32_0 : i32, i32
  }
  func.func @transform_10(%arg0: i32, %arg1: i32) -> (i32, i32) {
    %c0_i32 = arith.constant 0 : i32
    %c0_i32_0 = arith.constant 0 : i32
    %c0_i32_1 = arith.constant 0 : i32
    return %c0_i32, %c0_i32_0 : i32, i32
  }
  func.func @transform_11(%arg0: i32, %arg1: i32) -> (i32, i32) {
    %c0_i32 = arith.constant 0 : i32
    %c0_i32_0 = arith.constant 0 : i32
    %c0_i32_1 = arith.constant 0 : i32
    return %c0_i32, %c0_i32_0 : i32, i32
  }
  func.func @transform_12(%arg0: i32, %arg1: i32) -> (i32, i32) {
    %c0_i32 = arith.constant 0 : i32
    %c0_i32_0 = arith.constant 0 : i32
    %c0_i32_1 = arith.constant 0 : i32
    return %c0_i32, %c0_i32_0 : i32, i32
  }
  func.func @transform_13(%arg0: i32, %arg1: i32) -> (i32, i32) {
    %c0_i32 = arith.constant 0 : i32
    %c0_i32_0 = arith.constant 0 : i32
    %c0_i32_1 = arith.constant 0 : i32
    return %c0_i32, %c0_i32_0 : i32, i32
  }
  func.func @transform_14(%arg0: i32, %arg1: i32) -> (i32, i32) {
    %c0_i32 = arith.constant 0 : i32
    %c0_i32_0 = arith.constant 0 : i32
    %c0_i32_1 = arith.constant 0 : i32
    return %c0_i32, %c0_i32_0 : i32, i32
  }
  func.func @transform_15(%arg0: i32, %arg1: i32) -> (i32, i32) {
    %c0_i32 = arith.constant 0 : i32
    %c0_i32_0 = arith.constant 0 : i32
    %c0_i32_1 = arith.constant 0 : i32
    return %c0_i32, %c0_i32_0 : i32, i32
  }
  func.func @transform_16(%arg0: i32, %arg1: i32) -> (i32, i32) {
    %c0_i32 = arith.constant 0 : i32
    %c0_i32_0 = arith.constant 0 : i32
    %c0_i32_1 = arith.constant 0 : i32
    return %c0_i32, %c0_i32_0 : i32, i32
  }
  func.func @transform_17(%arg0: i32, %arg1: i32) -> (i32, i32) {
    %c0_i32 = arith.constant 0 : i32
    %c0_i32_0 = arith.constant 0 : i32
    return %arg0, %c0_i32 : i32, i32
  }
}

</mosaic_0001>

<llo_original>
// kernel: tpu_custom_call.1
$region0: #{tpu_custom_call.1}
  #allocation0 [shape = 'u32[]', space=smem, size = 0x4, offset = 0x4, fixed_abs, tag = 'smem constant byte address 0x4 - core index']
  #allocation1 [shape = 'u32[144,128]{1,0:T(1,128)}', space=vmem, size = 0x12000, scoped, tag = 'internal scratch']
  #allocation2 [shape = 'f32[8,64]{1,0:T(8,128)}', space=vmem, size = 0x1000, scoped, tag = 'scratch operand']
  #allocation3 [shape = 'f32[8,2]{1,0:T(8,128)}', space=vmem, size = 0x1000, scoped, tag = 'scratch operand']
  #allocation4 [shape = 'f32[8,2]{1,0:T(8,128)}', space=vmem, size = 0x1000, scoped, tag = 'scratch operand']
  %s0 = inlined_call_operand.vmem [shape: bf16[16,32], index: 0, kind: input, shape index: {}]
  %s1 = inlined_call_operand.vmem [shape: bf16[16,32], index: 1, kind: input, shape index: {}]
  %s2 = inlined_call_operand.vmem [shape: bf16[256,32], index: 2, kind: input, shape index: {}]
  %s3 = inlined_call_operand.vmem [shape: s32[256,2], index: 3, kind: input, shape index: {}]
  %s4 = inlined_call_operand.vmem [shape: s32[1,256], index: 4, kind: input, shape index: {}]
  %s5 = inlined_call_operand.vmem [shape: f32[2,64], index: 5, kind: input, shape index: {}]
  %s6 = inlined_call_operand.vmem [shape: bf16[32,64], index: 6, kind: input, shape index: {}]
  %s7 = inlined_call_operand.vmem [shape: f32[1,64], index: 7, kind: input, shape index: {}]
  %s8 = inlined_call_operand.vmem [shape: bf16[32,128], index: 8, kind: input, shape index: {}]
  %s9 = inlined_call_operand.vmem [shape: bf16[32,128], index: 9, kind: input, shape index: {}]
  %s10 = inlined_call_operand.vmem [shape: f32[1,128], index: 10, kind: input, shape index: {}]
  %s11 = inlined_call_operand.vmem [shape: bf16[64,32], index: 11, kind: input, shape index: {}]
  %s12 = inlined_call_operand.vmem [shape: f32[1,32], index: 12, kind: input, shape index: {}]
  %s13 = inlined_call_operand.vmem [shape: bf16[32,96], index: 13, kind: input, shape index: {}]
  %s14 = inlined_call_operand.vmem [shape: bf16[32,96], index: 14, kind: input, shape index: {}]
  %s15 = inlined_call_operand.vmem [shape: f32[1,96], index: 15, kind: input, shape index: {}]
  %s16 = inlined_call_operand.vmem [shape: f32[1,96], index: 16, kind: input, shape index: {}]
  %s17 = inlined_call_operand.hbm [shape: f32[16,32], index: 17, kind: output, shape index: {}]
  %s18 = sld [smem:[#allocation0]]
  $region109: #{tpu_custom_call.1} parent=0
    _
  %s20 = ssub.s32 1, %s18
  %s21 = scalar_select 0, %s20, %s18
  $region1: #{tpu_custom_call.1} parent=0
    #allocation5 [shape = 'u8[8192]{0}', space=vmem, size = 0x2000, scoped, tag = 'output window, operand 0']
    #allocation6 [shape = 's32[2]{0}', space=sflag, size = 0x8, scoped, tag = 'scoped memory for tpu_custom_call.1']
    %22 = vsyncpa [#allocation6], 0
    %s23 = scalar_lea.sflag [#allocation6], 1
    %24 = vsyncpa %s23, 0
    loop: start=0, step=1, limit=6
    $region2: #{tpu_custom_call.1} parent=1 // loop_pre_header
      _
    $region3: #{tpu_custom_call.1} parent=1 // loop_header
      %s26 = sphi 0, %s30
      %p27 = scmp.ge.s32.totalorder %s26, 6
      %s33 = sphi 0, %s45
      %s34 = sphi 0, %s41
      %s35 = sphi 0, %s33
      %s36 = sphi 0, %s34
      %s37 = sphi 0, %s35
      %s38 = sphi 0, %s36
      %s48 = sphi 0, %s50
      %s51 = sphi 0, %s48
      %s52 = sphi 0, %s51
      %s68 = sphi 0, %s52
      %s72 = sphi 0, %s72
      %s74 = sphi 0, %s72
      %s75 = sphi 0, %s74
      %s89 = sphi 0, %s75
      %s95 = sphi 0, %s97
      %s98 = sphi 0, %s95
      %s99 = sphi 0, %s98
      %s115 = sphi 0, %s99
      %s121 = sphi 0, %s123
      %s124 = sphi 0, %s121
      %s125 = sphi 0, %s124
      %s141 = sphi 0, %s125
      %s147 = sphi 0, %s149
      %s150 = sphi 0, %s147
      %s151 = sphi 0, %s150
      %s167 = sphi 0, %s151
      %s171 = sphi 0, %s171
      %s173 = sphi 0, %s171
      %s174 = sphi 0, %s173
      %s188 = sphi 0, %s174
      %s192 = sphi 0, %s192
      %s194 = sphi 0, %s192
      %s195 = sphi 0, %s194
      %s209 = sphi 0, %s195
      %s213 = sphi 0, %s213
      %s215 = sphi 0, %s213
      %s216 = sphi 0, %s215
      %s230 = sphi 0, %s216
      %s234 = sphi 0, %s234
      %s236 = sphi 0, %s234
      %s237 = sphi 0, %s236
      %s251 = sphi 0, %s237
      %s255 = sphi 0, %s255
      %s257 = sphi 0, %s255
      %s258 = sphi 0, %s257
      %s272 = sphi 0, %s258
      %s276 = sphi 0, %s276
      %s278 = sphi 0, %s276
      %s279 = sphi 0, %s278
      %s293 = sphi 0, %s279
      %s297 = sphi 0, %s297
      %s299 = sphi 0, %s297
      %s300 = sphi 0, %s299
      %s314 = sphi 0, %s300
      %s318 = sphi 0, %s318
      %s320 = sphi 0, %s318
      %s321 = sphi 0, %s320
      %s335 = sphi 0, %s321
      %s339 = sphi 0, %s339
      %s341 = sphi 0, %s339
      %s342 = sphi 0, %s341
      %s356 = sphi 0, %s342
      %s360 = sphi 0, %s360
      %s362 = sphi 0, %s360
      %s363 = sphi 0, %s362
      %s377 = sphi 0, %s363
      %s381 = sphi 0, %s381
      %s383 = sphi 0, %s381
      %s384 = sphi 0, %s383
      %s398 = sphi 0, %s384
      %s402 = sphi 0, %s402
      %s404 = sphi 0, %s402
      %s405 = sphi 0, %s404
      %s419 = sphi 0, %s405
      %s425 = sphi 0, %s427
      %s428 = sphi 0, %s425
      %s429 = sphi 0, %s428
      %s445 = sphi 0, %s429
    $region4: #{tpu_custom_call.1} parent=1 // loop_header_branch
      %29 = sbr.rel (%p27) target = $region8
    $region5: #{tpu_custom_call.1} parent=1 // loop_body
      %s31 = ssub.s32 %s26, 1
      %s32 = ssub.s32 %s26, 2
      %s39 = sadd.s32 1, %s34
      %p40 = scmp.ge.s32.totalorder %s39, 2
      %s41 = scalar_select %p40, 0, %s39
      %s42 = sadd.s32 1, %s33
      %s43 = scalar_select %p40, %s42, %s33
      %p44 = scmp.ge.s32.totalorder %s43, 2
      %s45 = scalar_select %p44, 0, %s43
      %s46 = ssub.s32 %s33, %s45
      %p47 = scmp.eq.s32.totalorder %s46, 0
      %s49 = sadd.s32 %s48, 1
      %s50 = scalar_select %p47, %s48, %s49
      %p53 = pneg %p47
      %p54 = scmp.eq.s32.totalorder %s26, 3
      %p55 = por %p53, %p54
      %p56 = scmp.ne.s32.totalorder %s48, %s51
      %p57 = scmp.eq.s32.totalorder %s26, 0
      %p58 = por %p56, %p57
      %p59 = scmp.ne.s32.totalorder %s48, %s51
      %p60 = scmp.eq.s32.totalorder %s31, 3
      %p61 = por %p59, %p60
      %p62 = scmp.ne.s32.totalorder %s51, %s52
      %p63 = scmp.eq.s32.totalorder %s31, 0
      %p64 = por %p62, %p63
      %p65 = scmp.ne.s32.totalorder %s51, %s52
      %p66 = scmp.eq.s32.totalorder %s32, 3
      %p67 = por %p65, %p66
      %p69 = scmp.ne.s32.totalorder %s52, %s68
      %p70 = scmp.eq.s32.totalorder %s32, 0
      %p71 = por %p69, %p70
      %s73 = sadd.s32 %s72, 1
      %p76 = scmp.eq.s32.totalorder %s26, 3
      %p77 = scmp.ne.s32.totalorder %s72, %s74
      %p78 = scmp.eq.s32.totalorder %s26, 0
      %p79 = por %p77, %p78
      %p80 = scmp.ne.s32.totalorder %s72, %s74
      %p81 = scmp.eq.s32.totalorder %s31, 3
      %p82 = por %p80, %p81
      %p83 = scmp.ne.s32.totalorder %s74, %s75
      %p84 = scmp.eq.s32.totalorder %s31, 0
      %p85 = por %p83, %p84
      %p86 = scmp.ne.s32.totalorder %s74, %s75
      %p87 = scmp.eq.s32.totalorder %s32, 3
      %p88 = por %p86, %p87
      %p90 = scmp.ne.s32.totalorder %s75, %s89
      %p91 = scmp.eq.s32.totalorder %s32, 0
      %p92 = por %p90, %p91
      %s93 = ssub.s32 %s34, %s41
      %p94 = scmp.eq.s32.totalorder %s93, 0
      %s96 = sadd.s32 %s95, 1
      %s97 = scalar_select %p94, %s95, %s96
      %p100 = pneg %p94
      %p101 = scmp.eq.s32.totalorder %s26, 3
      %p102 = por %p100, %p101
      %p103 = scmp.ne.s32.totalorder %s95, %s98
      %p104 = scmp.eq.s32.totalorder %s26, 0
      %p105 = por %p103, %p104
      %p106 = scmp.ne.s32.totalorder %s95, %s98
      %p107 = scmp.eq.s32.totalorder %s31, 3
      %p108 = por %p106, %p107
      %p109 = scmp.ne.s32.totalorder %s98, %s99
      %p110 = scmp.eq.s32.totalorder %s31, 0
      %p111 = por %p109, %p110
      %p112 = scmp.ne.s32.totalorder %s98, %s99
      %p113 = scmp.eq.s32.totalorder %s32, 3
      %p114 = por %p112, %p113
      %p116 = scmp.ne.s32.totalorder %s99, %s115
      %p117 = scmp.eq.s32.totalorder %s32, 0
      %p118 = por %p116, %p117
      %s119 = ssub.s32 %s34, %s41
      %p120 = scmp.eq.s32.totalorder %s119, 0
      %s122 = sadd.s32 %s121, 1
      %s123 = scalar_select %p120, %s121, %s122
      %p126 = pneg %p120
      %p127 = scmp.eq.s32.totalorder %s26, 3
      %p128 = por %p126, %p127
      %p129 = scmp.ne.s32.totalorder %s121, %s124
      %p130 = scmp.eq.s32.totalorder %s26, 0
      %p131 = por %p129, %p130
      %p132 = scmp.ne.s32.totalorder %s121, %s124
      %p133 = scmp.eq.s32.totalorder %s31, 3
      %p134 = por %p132, %p133
      %p135 = scmp.ne.s32.totalorder %s124, %s125
      %p136 = scmp.eq.s32.totalorder %s31, 0
      %p137 = por %p135, %p136
      %p138 = scmp.ne.s32.totalorder %s124, %s125
      %p139 = scmp.eq.s32.totalorder %s32, 3
      %p140 = por %p138, %p139
      %p142 = scmp.ne.s32.totalorder %s125, %s141
      %p143 = scmp.eq.s32.totalorder %s32, 0
      %p144 = por %p142, %p143
      %s145 = ssub.s32 %s34, %s41
      %p146 = scmp.eq.s32.totalorder %s145, 0
      %s148 = sadd.s32 %s147, 1
      %s149 = scalar_select %p146, %s147, %s148
      %p152 = pneg %p146
      %p153 = scmp.eq.s32.totalorder %s26, 3
      %p154 = por %p152, %p153
      %p155 = scmp.ne.s32.totalorder %s147, %s150
      %p156 = scmp.eq.s32.totalorder %s26, 0
      %p157 = por %p155, %p156
      %p158 = scmp.ne.s32.totalorder %s147, %s150
      %p159 = scmp.eq.s32.totalorder %s31, 3
      %p160 = por %p158, %p159
      %p161 = scmp.ne.s32.totalorder %s150, %s151
      %p162 = scmp.eq.s32.totalorder %s31, 0
      %p163 = por %p161, %p162
      %p164 = scmp.ne.s32.totalorder %s150, %s151
      %p165 = scmp.eq.s32.totalorder %s32, 3
      %p166 = por %p164, %p165
      %p168 = scmp.ne.s32.totalorder %s151, %s167
      %p169 = scmp.eq.s32.totalorder %s32, 0
      %p170 = por %p168, %p169
      %s172 = sadd.s32 %s171, 1
      %p175 = scmp.eq.s32.totalorder %s26, 3
      %p176 = scmp.ne.s32.totalorder %s171, %s173
      %p177 = scmp.eq.s32.totalorder %s26, 0
      %p178 = por %p176, %p177
      %p179 = scmp.ne.s32.totalorder %s171, %s173
      %p180 = scmp.eq.s32.totalorder %s31, 3
      %p181 = por %p179, %p180
      %p182 = scmp.ne.s32.totalorder %s173, %s174
      %p183 = scmp.eq.s32.totalorder %s31, 0
      %p184 = por %p182, %p183
      %p185 = scmp.ne.s32.totalorder %s173, %s174
      %p186 = scmp.eq.s32.totalorder %s32, 3
      %p187 = por %p185, %p186
      %p189 = scmp.ne.s32.totalorder %s174, %s188
      %p190 = scmp.eq.s32.totalorder %s32, 0
      %p191 = por %p189, %p190
      %s193 = sadd.s32 %s192, 1
      %p196 = scmp.eq.s32.totalorder %s26, 3
      %p197 = scmp.ne.s32.totalorder %s192, %s194
      %p198 = scmp.eq.s32.totalorder %s26, 0
      %p199 = por %p197, %p198
      %p200 = scmp.ne.s32.totalorder %s192, %s194
      %p201 = scmp.eq.s32.totalorder %s31, 3
      %p202 = por %p200, %p201
      %p203 = scmp.ne.s32.totalorder %s194, %s195
      %p204 = scmp.eq.s32.totalorder %s31, 0
      %p205 = por %p203, %p204
      %p206 = scmp.ne.s32.totalorder %s194, %s195
      %p207 = scmp.eq.s32.totalorder %s32, 3
      %p208 = por %p206, %p207
      %p210 = scmp.ne.s32.totalorder %s195, %s209
      %p211 = scmp.eq.s32.totalorder %s32, 0
      %p212 = por %p210, %p211
      %s214 = sadd.s32 %s213, 1
      %p217 = scmp.eq.s32.totalorder %s26, 3
      %p218 = scmp.ne.s32.totalorder %s213, %s215
      %p219 = scmp.eq.s32.totalorder %s26, 0
      %p220 = por %p218, %p219
      %p221 = scmp.ne.s32.totalorder %s213, %s215
      %p222 = scmp.eq.s32.totalorder %s31, 3
      %p223 = por %p221, %p222
      %p224 = scmp.ne.s32.totalorder %s215, %s216
      %p225 = scmp.eq.s32.totalorder %s31, 0
      %p226 = por %p224, %p225
      %p227 = scmp.ne.s32.totalorder %s215, %s216
      %p228 = scmp.eq.s32.totalorder %s32, 3
      %p229 = por %p227, %p228
      %p231 = scmp.ne.s32.totalorder %s216, %s230
      %p232 = scmp.eq.s32.totalorder %s32, 0
      %p233 = por %p231, %p232
      %s235 = sadd.s32 %s234, 1
      %p238 = scmp.eq.s32.totalorder %s26, 3
      %p239 = scmp.ne.s32.totalorder %s234, %s236
      %p240 = scmp.eq.s32.totalorder %s26, 0
      %p241 = por %p239, %p240
      %p242 = scmp.ne.s32.totalorder %s234, %s236
      %p243 = scmp.eq.s32.totalorder %s31, 3
      %p244 = por %p242, %p243
      %p245 = scmp.ne.s32.totalorder %s236, %s237
      %p246 = scmp.eq.s32.totalorder %s31, 0
      %p247 = por %p245, %p246
      %p248 = scmp.ne.s32.totalorder %s236, %s237
      %p249 = scmp.eq.s32.totalorder %s32, 3
      %p250 = por %p248, %p249
      %p252 = scmp.ne.s32.totalorder %s237, %s251
      %p253 = scmp.eq.s32.totalorder %s32, 0
      %p254 = por %p252, %p253
      %s256 = sadd.s32 %s255, 1
      %p259 = scmp.eq.s32.totalorder %s26, 3
      %p260 = scmp.ne.s32.totalorder %s255, %s257
      %p261 = scmp.eq.s32.totalorder %s26, 0
      %p262 = por %p260, %p261
      %p263 = scmp.ne.s32.totalorder %s255, %s257
      %p264 = scmp.eq.s32.totalorder %s31, 3
      %p265 = por %p263, %p264
      %p266 = scmp.ne.s32.totalorder %s257, %s258
      %p267 = scmp.eq.s32.totalorder %s31, 0
      %p268 = por %p266, %p267
      %p269 = scmp.ne.s32.totalorder %s257, %s258
      %p270 = scmp.eq.s32.totalorder %s32, 3
      %p271 = por %p269, %p270
      %p273 = scmp.ne.s32.totalorder %s258, %s272
      %p274 = scmp.eq.s32.totalorder %s32, 0
      %p275 = por %p273, %p274
      %s277 = sadd.s32 %s276, 1
      %p280 = scmp.eq.s32.totalorder %s26, 3
      %p281 = scmp.ne.s32.totalorder %s276, %s278
      %p282 = scmp.eq.s32.totalorder %s26, 0
      %p283 = por %p281, %p282
      %p284 = scmp.ne.s32.totalorder %s276, %s278
      %p285 = scmp.eq.s32.totalorder %s31, 3
      %p286 = por %p284, %p285
      %p287 = scmp.ne.s32.totalorder %s278, %s279
      %p288 = scmp.eq.s32.totalorder %s31, 0
      %p289 = por %p287, %p288
      %p290 = scmp.ne.s32.totalorder %s278, %s279
      %p291 = scmp.eq.s32.totalorder %s32, 3
      %p292 = por %p290, %p291
      %p294 = scmp.ne.s32.totalorder %s279, %s293
      %p295 = scmp.eq.s32.totalorder %s32, 0
      %p296 = por %p294, %p295
      %s298 = sadd.s32 %s297, 1
      %p301 = scmp.eq.s32.totalorder %s26, 3
      %p302 = scmp.ne.s32.totalorder %s297, %s299
      %p303 = scmp.eq.s32.totalorder %s26, 0
      %p304 = por %p302, %p303
      %p305 = scmp.ne.s32.totalorder %s297, %s299
      %p306 = scmp.eq.s32.totalorder %s31, 3
      %p307 = por %p305, %p306
      %p308 = scmp.ne.s32.totalorder %s299, %s300
      %p309 = scmp.eq.s32.totalorder %s31, 0
      %p310 = por %p308, %p309
      %p311 = scmp.ne.s32.totalorder %s299, %s300
      %p312 = scmp.eq.s32.totalorder %s32, 3
      %p313 = por %p311, %p312
      %p315 = scmp.ne.s32.totalorder %s300, %s314
      %p316 = scmp.eq.s32.totalorder %s32, 0
      %p317 = por %p315, %p316
      %s319 = sadd.s32 %s318, 1
      %p322 = scmp.eq.s32.totalorder %s26, 3
      %p323 = scmp.ne.s32.totalorder %s318, %s320
      %p324 = scmp.eq.s32.totalorder %s26, 0
      %p325 = por %p323, %p324
      %p326 = scmp.ne.s32.totalorder %s318, %s320
      %p327 = scmp.eq.s32.totalorder %s31, 3
      %p328 = por %p326, %p327
      %p329 = scmp.ne.s32.totalorder %s320, %s321
      %p330 = scmp.eq.s32.totalorder %s31, 0
      %p331 = por %p329, %p330
      %p332 = scmp.ne.s32.totalorder %s320, %s321
      %p333 = scmp.eq.s32.totalorder %s32, 3
      %p334 = por %p332, %p333
      %p336 = scmp.ne.s32.totalorder %s321, %s335
      %p337 = scmp.eq.s32.totalorder %s32, 0
      %p338 = por %p336, %p337
      %s340 = sadd.s32 %s339, 1
      %p343 = scmp.eq.s32.totalorder %s26, 3
      %p344 = scmp.ne.s32.totalorder %s339, %s341
      %p345 = scmp.eq.s32.totalorder %s26, 0
      %p346 = por %p344, %p345
      %p347 = scmp.ne.s32.totalorder %s339, %s341
      %p348 = scmp.eq.s32.totalorder %s31, 3
      %p349 = por %p347, %p348
      %p350 = scmp.ne.s32.totalorder %s341, %s342
      %p351 = scmp.eq.s32.totalorder %s31, 0
      %p352 = por %p350, %p351
      %p353 = scmp.ne.s32.totalorder %s341, %s342
      %p354 = scmp.eq.s32.totalorder %s32, 3
      %p355 = por %p353, %p354
      %p357 = scmp.ne.s32.totalorder %s342, %s356
      %p358 = scmp.eq.s32.totalorder %s32, 0
      %p359 = por %p357, %p358
      %s361 = sadd.s32 %s360, 1
      %p364 = scmp.eq.s32.totalorder %s26, 3
      %p365 = scmp.ne.s32.totalorder %s360, %s362
      %p366 = scmp.eq.s32.totalorder %s26, 0
      %p367 = por %p365, %p366
      %p368 = scmp.ne.s32.totalorder %s360, %s362
      %p369 = scmp.eq.s32.totalorder %s31, 3
      %p370 = por %p368, %p369
      %p371 = scmp.ne.s32.totalorder %s362, %s363
      %p372 = scmp.eq.s32.totalorder %s31, 0
      %p373 = por %p371, %p372
      %p374 = scmp.ne.s32.totalorder %s362, %s363
      %p375 = scmp.eq.s32.totalorder %s32, 3
      %p376 = por %p374, %p375
      %p378 = scmp.ne.s32.totalorder %s363, %s377
      %p379 = scmp.eq.s32.totalorder %s32, 0
      %p380 = por %p378, %p379
      %s382 = sadd.s32 %s381, 1
      %p385 = scmp.eq.s32.totalorder %s26, 3
      %p386 = scmp.ne.s32.totalorder %s381, %s383
      %p387 = scmp.eq.s32.totalorder %s26, 0
      %p388 = por %p386, %p387
      %p389 = scmp.ne.s32.totalorder %s381, %s383
      %p390 = scmp.eq.s32.totalorder %s31, 3
      %p391 = por %p389, %p390
      %p392 = scmp.ne.s32.totalorder %s383, %s384
      %p393 = scmp.eq.s32.totalorder %s31, 0
      %p394 = por %p392, %p393
      %p395 = scmp.ne.s32.totalorder %s383, %s384
      %p396 = scmp.eq.s32.totalorder %s32, 3
      %p397 = por %p395, %p396
      %p399 = scmp.ne.s32.totalorder %s384, %s398
      %p400 = scmp.eq.s32.totalorder %s32, 0
      %p401 = por %p399, %p400
      %s403 = sadd.s32 %s402, 1
      %p406 = scmp.eq.s32.totalorder %s26, 3
      %p407 = scmp.ne.s32.totalorder %s402, %s404
      %p408 = scmp.eq.s32.totalorder %s26, 0
      %p409 = por %p407, %p408
      %p410 = scmp.ne.s32.totalorder %s402, %s404
      %p411 = scmp.eq.s32.totalorder %s31, 3
      %p412 = por %p410, %p411
      %p413 = scmp.ne.s32.totalorder %s404, %s405
      %p414 = scmp.eq.s32.totalorder %s31, 0
      %p415 = por %p413, %p414
      %p416 = scmp.ne.s32.totalorder %s404, %s405
      %p417 = scmp.eq.s32.totalorder %s32, 3
      %p418 = por %p416, %p417
      %p420 = scmp.ne.s32.totalorder %s405, %s419
      %p421 = scmp.eq.s32.totalorder %s32, 0
      %p422 = por %p420, %p421
      %s423 = ssub.s32 %s33, %s45
      %p424 = scmp.eq.s32.totalorder %s423, 0
      %s426 = sadd.s32 %s425, 1
      %s427 = scalar_select %p424, %s425, %s426
      %p430 = pneg %p424
      %p431 = scmp.eq.s32.totalorder %s26, 3
      %p432 = por %p430, %p431
      %p433 = scmp.ne.s32.totalorder %s425, %s428
      %p434 = scmp.eq.s32.totalorder %s26, 0
      %p435 = por %p433, %p434
      %p436 = scmp.ne.s32.totalorder %s425, %s428
      %p437 = scmp.eq.s32.totalorder %s31, 3
      %p438 = por %p436, %p437
      %p439 = scmp.ne.s32.totalorder %s428, %s429
      %p440 = scmp.eq.s32.totalorder %s31, 0
      %p441 = por %p439, %p440
      %p442 = scmp.ne.s32.totalorder %s428, %s429
      %p443 = scmp.eq.s32.totalorder %s32, 3
      %p444 = por %p442, %p443
      %p446 = scmp.ne.s32.totalorder %s429, %s445
      %p447 = scmp.eq.s32.totalorder %s32, 0
      %p448 = por %p446, %p447
      %p449 = scmp.le.s32.totalorder 1, %s26
      %p450 = scmp.lt.s32.totalorder %s26, 5
      %p451 = pnand %p449, %p450
      %p452 = pneg %p451
      // Predicated region
      $region9: #{tpu_custom_call.1} parent=5 // pred_check
        _
      $region10: #{tpu_custom_call.1} parent=5 // pred_check_branch
        %454 = sbr.rel (%p451) target = $region12
      $region11: #{tpu_custom_call.1} parent=5 // pred_region
        %s455 = ssub.s32 %s26, 1
        // Predicated region
        $region13: #{tpu_custom_call.1} parent=11 // pred_check
          %p456 = pneg %p85
        $region14: #{tpu_custom_call.1} parent=11 // pred_check_branch
          %458 = sbr.rel (%p456) target = $region16
        $region15: #{tpu_custom_call.1} parent=11 // pred_region
          _
        $region16: #{tpu_custom_call.1} parent=11 // pred_fallthru
          _
        // Predicated region
        $region17: #{tpu_custom_call.1} parent=11 // pred_check
          %p459 = pneg %p184
        $region18: #{tpu_custom_call.1} parent=11 // pred_check_branch
          %461 = sbr.rel (%p459) target = $region20
        $region19: #{tpu_custom_call.1} parent=11 // pred_region
          _
        $region20: #{tpu_custom_call.1} parent=11 // pred_fallthru
          _
        // Predicated region
        $region21: #{tpu_custom_call.1} parent=11 // pred_check
          %p462 = pneg %p205
        $region22: #{tpu_custom_call.1} parent=11 // pred_check_branch
          %464 = sbr.rel (%p462) target = $region24
        $region23: #{tpu_custom_call.1} parent=11 // pred_region
          _
        $region24: #{tpu_custom_call.1} parent=11 // pred_fallthru
          _
        // Predicated region
        $region25: #{tpu_custom_call.1} parent=11 // pred_check
          %p465 = pneg %p226
        $region26: #{tpu_custom_call.1} parent=11 // pred_check_branch
          %467 = sbr.rel (%p465) target = $region28
        $region27: #{tpu_custom_call.1} parent=11 // pred_region
          _
        $region28: #{tpu_custom_call.1} parent=11 // pred_fallthru
          _
        // Predicated region
        $region29: #{tpu_custom_call.1} parent=11 // pred_check
          %p468 = pneg %p247
        $region30: #{tpu_custom_call.1} parent=11 // pred_check_branch
          %470 = sbr.rel (%p468) target = $region32
        $region31: #{tpu_custom_call.1} parent=11 // pred_region
          _
        $region32: #{tpu_custom_call.1} parent=11 // pred_fallthru
          _
        // Predicated region
        $region33: #{tpu_custom_call.1} parent=11 // pred_check
          %p471 = pneg %p268
        $region34: #{tpu_custom_call.1} parent=11 // pred_check_branch
          %473 = sbr.rel (%p471) target = $region36
        $region35: #{tpu_custom_call.1} parent=11 // pred_region
          _
        $region36: #{tpu_custom_call.1} parent=11 // pred_fallthru
          _
        // Predicated region
        $region37: #{tpu_custom_call.1} parent=11 // pred_check
          %p474 = pneg %p289
        $region38: #{tpu_custom_call.1} parent=11 // pred_check_branch
          %476 = sbr.rel (%p474) target = $region40
        $region39: #{tpu_custom_call.1} parent=11 // pred_region
          _
        $region40: #{tpu_custom_call.1} parent=11 // pred_fallthru
          _
        // Predicated region
        $region41: #{tpu_custom_call.1} parent=11 // pred_check
          %p477 = pneg %p310
        $region42: #{tpu_custom_call.1} parent=11 // pred_check_branch
          %479 = sbr.rel (%p477) target = $region44
        $region43: #{tpu_custom_call.1} parent=11 // pred_region
          _
        $region44: #{tpu_custom_call.1} parent=11 // pred_fallthru
          _
        // Predicated region
        $region45: #{tpu_custom_call.1} parent=11 // pred_check
          %p480 = pneg %p331
        $region46: #{tpu_custom_call.1} parent=11 // pred_check_branch
          %482 = sbr.rel (%p480) target = $region48
        $region47: #{tpu_custom_call.1} parent=11 // pred_region
          _
        $region48: #{tpu_custom_call.1} parent=11 // pred_fallthru
          _
        // Predicated region
        $region49: #{tpu_custom_call.1} parent=11 // pred_check
          %p483 = pneg %p352
        $region50: #{tpu_custom_call.1} parent=11 // pred_check_branch
          %485 = sbr.rel (%p483) target = $region52
        $region51: #{tpu_custom_call.1} parent=11 // pred_region
          _
        $region52: #{tpu_custom_call.1} parent=11 // pred_fallthru
          _
        // Predicated region
        $region53: #{tpu_custom_call.1} parent=11 // pred_check
          %p486 = pneg %p373
        $region54: #{tpu_custom_call.1} parent=11 // pred_check_branch
          %488 = sbr.rel (%p486) target = $region56
        $region55: #{tpu_custom_call.1} parent=11 // pred_region
          _
        $region56: #{tpu_custom_call.1} parent=11 // pred_fallthru
          _
        // Predicated region
        $region57: #{tpu_custom_call.1} parent=11 // pred_check
          %p489 = pneg %p394
        $region58: #{tpu_custom_call.1} parent=11 // pred_check_branch
          %491 = sbr.rel (%p489) target = $region60
        $region59: #{tpu_custom_call.1} parent=11 // pred_region
          _
        $region60: #{tpu_custom_call.1} parent=11 // pred_fallthru
          _
        // Predicated region
        $region61: #{tpu_custom_call.1} parent=11 // pred_check
          %p492 = pneg %p415
        $region62: #{tpu_custom_call.1} parent=11 // pred_check_branch
          %494 = sbr.rel (%p492) target = $region64
        $region63: #{tpu_custom_call.1} parent=11 // pred_region
          _
        $region64: #{tpu_custom_call.1} parent=11 // pred_fallthru
          _
      $region12: #{tpu_custom_call.1} parent=5 // pred_fallthru
        _
      %p495 = scmp.lt.s32.totalorder %s26, 4
      // Predicated region
      $region65: #{tpu_custom_call.1} parent=5 // pred_check
        %p496 = pneg %p495
      $region66: #{tpu_custom_call.1} parent=5 // pred_check_branch
        %498 = sbr.rel (%p496) target = $region68
      $region67: #{tpu_custom_call.1} parent=5 // pred_region
        // Predicated region
        $region69: #{tpu_custom_call.1} parent=67 // pred_check
          %p499 = pneg %p58
        $region70: #{tpu_custom_call.1} parent=67 // pred_check_branch
          %501 = sbr.rel (%p499) target = $region72
        $region71: #{tpu_custom_call.1} parent=67 // pred_region
          %p502 = scmp.lt.s32.totalorder %s33, 1
          %s503 = scalar_select %p502, %s33, 1
          %s504 = smul.addr %s503, 4
          %s505 = scalar_lea.vmem %s0, %s504
        $region72: #{tpu_custom_call.1} parent=67 // pred_fallthru
          _
        // Predicated region
        $region73: #{tpu_custom_call.1} parent=67 // pred_check
          %p506 = pneg %p105
        $region74: #{tpu_custom_call.1} parent=67 // pred_check_branch
          %508 = sbr.rel (%p506) target = $region76
        $region75: #{tpu_custom_call.1} parent=67 // pred_region
          %s509 = smul.u32 16, %s34
          %p510 = scmp.lt.s32.totalorder %s509, 31
          %s511 = scalar_select %p510, %s509, 31
          %s512 = smul.addr %s511, 4
          %s513 = scalar_lea.vmem %s2, %s512
          %s514 = smul.u32 16, %s34
        $region76: #{tpu_custom_call.1} parent=67 // pred_fallthru
          _
        // Predicated region
        $region77: #{tpu_custom_call.1} parent=67 // pred_check
          %p515 = pneg %p131
        $region78: #{tpu_custom_call.1} parent=67 // pred_check_branch
          %517 = sbr.rel (%p515) target = $region80
        $region79: #{tpu_custom_call.1} parent=67 // pred_region
          %s518 = smul.u32 16, %s34
          %p519 = scmp.lt.s32.totalorder %s518, 31
          %s520 = scalar_select %p519, %s518, 31
          %s521 = smul.addr %s520, 8
          %s522 = scalar_lea.vmem %s3, %s521
          %s523 = smul.u32 16, %s34
        $region80: #{tpu_custom_call.1} parent=67 // pred_fallthru
          _
        // Predicated region
        $region81: #{tpu_custom_call.1} parent=67 // pred_check
          %p524 = pneg %p157
        $region82: #{tpu_custom_call.1} parent=67 // pred_check_branch
          %526 = sbr.rel (%p524) target = $region84
        $region83: #{tpu_custom_call.1} parent=67 // pred_region
          %p527 = scmp.lt.s32.totalorder %s34, 1
          %s528 = scalar_select %p527, %s34, 1
          %s529 = scalar_lea.vmem %s4, %s528
        $region84: #{tpu_custom_call.1} parent=67 // pred_fallthru
          _
      $region68: #{tpu_custom_call.1} parent=5 // pred_fallthru
        _
      %p530 = scmp.le.s32.totalorder 1, %s26
      %p531 = scmp.lt.s32.totalorder %s26, 5
      %p532 = pnand %p530, %p531
      %p533 = pneg %p532
      // Predicated region
      $region85: #{tpu_custom_call.1} parent=5 // pred_check
        _
      $region86: #{tpu_custom_call.1} parent=5 // pred_check_branch
        %535 = sbr.rel (%p532) target = $region88
      $region87: #{tpu_custom_call.1} parent=5 // pred_region
        %s536 = ssub.s32 %s26, 1
        %p537 = scmp.lt.s32.totalorder %s35, 1
        %s538 = scalar_select %p537, %s35, 1
        %s539 = smul.addr %s538, 4
        %s540 = scalar_lea.vmem %s0, %s539
        %p541 = pneg %p64
        %p542 = pneg %p61
        %p543 = pneg %p85
        %p544 = pneg %p82
        %s545 = smul.u32 16, %s36
        %p546 = scmp.lt.s32.totalorder %s545, 31
        %s547 = scalar_select %p546, %s545, 31
        %s548 = smul.addr %s547, 4
        %s549 = scalar_lea.vmem %s2, %s548
        %p550 = pneg %p111
        %p551 = pneg %p108
        %s552 = smul.u32 16, %s36
        %p553 = scmp.lt.s32.totalorder %s552, 31
        %s554 = scalar_select %p553, %s552, 31
        %s555 = smul.addr %s554, 8
        %s556 = scalar_lea.vmem %s3, %s555
        %p557 = pneg %p137
        %p558 = pneg %p134
        %p559 = scmp.lt.s32.totalorder %s36, 1
        %s560 = scalar_select %p559, %s36, 1
        %s561 = scalar_lea.vmem %s4, %s560
        %p562 = pneg %p163
        %p563 = pneg %p160
        %p564 = pneg %p184
        %p565 = pneg %p181
        %p566 = pneg %p205
        %p567 = pneg %p202
        %p568 = pneg %p226
        %p569 = pneg %p223
        %p570 = pneg %p247
        %p571 = pneg %p244
        %p572 = pneg %p268
        %p573 = pneg %p265
        %p574 = pneg %p289
        %p575 = pneg %p286
        %p576 = pneg %p310
        %p577 = pneg %p307
        %p578 = pneg %p331
        %p579 = pneg %p328
        %p580 = pneg %p352
        %p581 = pneg %p349
        %p582 = pneg %p373
        %p583 = pneg %p370
        %p584 = pneg %p394
        %p585 = pneg %p391
        %p586 = pneg %p415
        %p587 = pneg %p412
        %p588 = pneg %p441
        %p589 = pneg %p438
        %s590 = sand.u32 %s428, 1
        %s591 = scalar_lea.sflag [#allocation6], %s590
        %s592 = sand.u32 %s428, 1
        %s593 = smul.addr %s592, 8
        %s594 = scalar_lea.vmem [#allocation5], %s593
        %p595 = scmp.lt.s32.totalorder %s35, 1
        %s596 = scalar_select %p595, %s35, 1
        %s597 = smul.addr %s596, 4
        %s598 = scalar_lea.vmem %s0, %s597
        %s599 = smul.u32 16, %s36
        %p600 = scmp.lt.s32.totalorder %s599, 31
        %s601 = scalar_select %p600, %s599, 31
        %s602 = smul.addr %s601, 4
        %s603 = scalar_lea.vmem %s2, %s602
        %s604 = smul.u32 16, %s36
        %s605 = smul.u32 16, %s36
        %p606 = scmp.lt.s32.totalorder %s605, 31
        %s607 = scalar_select %p606, %s605, 31
        %s608 = smul.addr %s607, 8
        %s609 = scalar_lea.vmem %s3, %s608
        %s610 = smul.u32 16, %s36
        %p611 = scmp.lt.s32.totalorder %s36, 1
        %s612 = scalar_select %p611, %s36, 1
        %s613 = scalar_lea.vmem %s4, %s612
        %s615 = smul.u32 %s35, 8
        %p616 = scmp.eq.s32.totalorder %s36, 0
        // Predicated region
        $region89: #{tpu_custom_call.1} parent=87 // pred_check
          %p617 = pneg %p616
        $region90: #{tpu_custom_call.1} parent=87 // pred_check_branch
          %619 = sbr.rel (%p617) target = $region92
        $region91: #{tpu_custom_call.1} parent=87 // pred_region
          %vm620 = vcmask 523264
          %621 = vst.msk [vmem:[#allocation2] sm:$0xff] %vm620, 0.0
          %vm622 = vcmask 15360
          %623 = vst.msk [vmem:[#allocation3] sm:$0xff] %vm622, 0.0
          %624 = vst.msk [vmem:[#allocation4] sm:$0xff] %vm622, -1e+30
        $region92: #{tpu_custom_call.1} parent=87 // pred_fallthru
          _
        %v625 = vld [vmem:[%s5] sm:$0x3]
        %v626 = vld [vmem:[%s609] sm:$0xff]
        %v627 = vld [vmem:[%s609 + $0x8] sm:$0xff]
        %v628 = vld [vmem:[%s609 + $0x10] sm:$0xff]
        %v629 = vld [vmem:[%s609 + $0x18] sm:$0xff]
        %v630 = vld [vmem:[%s609 + $0x20] sm:$0xff]
        %v631 = vld [vmem:[%s609 + $0x28] sm:$0xff]
        %v632 = vld [vmem:[%s609 + $0x30] sm:$0xff]
        %v633 = vld [vmem:[%s609 + $0x38] sm:$0xff]
        %v634 = vld [vmem:[%s609 + $0x40] sm:$0xff]
        %v635 = vld [vmem:[%s609 + $0x48] sm:$0xff]
        %v636 = vld [vmem:[%s609 + $0x50] sm:$0xff]
        %v637 = vld [vmem:[%s609 + $0x58] sm:$0xff]
        %v638 = vld [vmem:[%s609 + $0x60] sm:$0xff]
        %v639 = vld [vmem:[%s609 + $0x68] sm:$0xff]
        %v640 = vld [vmem:[%s609 + $0x70] sm:$0xff]
        %v641 = vld [vmem:[%s609 + $0x78] sm:$0xff]
        %v642 = vld [vmem:[%s613] sm:$0x1]
        %v643 = vlaneseq
        %v644 = vand.u32 %v643, 127
        %v645 = vstv %s615
        %v646 = vadd.s32 %v644, %v645
        %647 = vset.pattern.permute.xlu0 1
        %648 = vperm.xlu0 %647, %v626
        %v649 = vpop.permute.xlu0 %648
        %650 = vset.pattern.permute.xlu0 1
        %651 = vperm.xlu0 %650, %v627
        %v652 = vpop.permute.xlu0 %651
        %653 = vset.pattern.permute.xlu0 1
        %654 = vperm.xlu0 %653, %v628
        %v655 = vpop.permute.xlu0 %654
        %656 = vset.pattern.permute.xlu0 1
        %657 = vperm.xlu0 %656, %v629
        %v658 = vpop.permute.xlu0 %657
        %659 = vset.pattern.permute.xlu0 1
        %660 = vperm.xlu0 %659, %v630
        %v661 = vpop.permute.xlu0 %660
        %662 = vset.pattern.permute.xlu0 1
        %663 = vperm.xlu0 %662, %v631
        %v664 = vpop.permute.xlu0 %663
        %665 = vset.pattern.permute.xlu0 1
        %666 = vperm.xlu0 %665, %v632
        %v667 = vpop.permute.xlu0 %666
        %668 = vset.pattern.permute.xlu0 1
        %669 = vperm.xlu0 %668, %v633
        %v670 = vpop.permute.xlu0 %669
        %671 = vset.pattern.permute.xlu0 1
        %672 = vperm.xlu0 %671, %v634
        %v673 = vpop.permute.xlu0 %672
        %674 = vset.pattern.permute.xlu0 1
        %675 = vperm.xlu0 %674, %v635
        %v676 = vpop.permute.xlu0 %675
        %677 = vset.pattern.permute.xlu0 1
        %678 = vperm.xlu0 %677, %v636
        %v679 = vpop.permute.xlu0 %678
        %680 = vset.pattern.permute.xlu0 1
        %681 = vperm.xlu0 %680, %v637
        %v682 = vpop.permute.xlu0 %681
        %683 = vset.pattern.permute.xlu0 1
        %684 = vperm.xlu0 %683, %v638
        %v685 = vpop.permute.xlu0 %684
        %686 = vset.pattern.permute.xlu0 1
        %687 = vperm.xlu0 %686, %v639
        %v688 = vpop.permute.xlu0 %687
        %689 = vset.pattern.permute.xlu0 1
        %690 = vperm.xlu0 %689, %v640
        %v691 = vpop.permute.xlu0 %690
        %692 = vset.pattern.permute.xlu0 1
        %693 = vperm.xlu0 %692, %v641
        %v694 = vpop.permute.xlu0 %693
        %vm695 = vcmp.eq.s32.totalorder %v646, %v649
        %vm696 = vcmp.eq.s32.totalorder %v646, %v652
        %vm697 = vcmp.eq.s32.totalorder %v646, %v655
        %vm698 = vcmp.eq.s32.totalorder %v646, %v658
        %vm699 = vcmp.eq.s32.totalorder %v646, %v661
        %vm700 = vcmp.eq.s32.totalorder %v646, %v664
        %vm701 = vcmp.eq.s32.totalorder %v646, %v667
        %vm702 = vcmp.eq.s32.totalorder %v646, %v670
        %vm703 = vcmp.eq.s32.totalorder %v646, %v673
        %vm704 = vcmp.eq.s32.totalorder %v646, %v676
        %vm705 = vcmp.eq.s32.totalorder %v646, %v679
        %vm706 = vcmp.eq.s32.totalorder %v646, %v682
        %vm707 = vcmp.eq.s32.totalorder %v646, %v685
        %vm708 = vcmp.eq.s32.totalorder %v646, %v688
        %vm709 = vcmp.eq.s32.totalorder %v646, %v691
        %vm710 = vcmp.eq.s32.totalorder %v646, %v694
        %v711 = vsel %vm695, 1, 0
        %v712 = vsel %vm696, 1, 0
        %v713 = vsel %vm697, 1, 0
        %v714 = vsel %vm698, 1, 0
        %v715 = vsel %vm699, 1, 0
        %v716 = vsel %vm700, 1, 0
        %v717 = vsel %vm701, 1, 0
        %v718 = vsel %vm702, 1, 0
        %v719 = vsel %vm703, 1, 0
        %v720 = vsel %vm704, 1, 0
        %v721 = vsel %vm705, 1, 0
        %v722 = vsel %vm706, 1, 0
        %v723 = vsel %vm707, 1, 0
        %v724 = vsel %vm708, 1, 0
        %v725 = vsel %vm709, 1, 0
        %v726 = vsel %vm710, 1, 0
        %v727 = vcvt.s32.f32 %v711
        %v728 = vcvt.s32.f32 %v712
        %v729 = vcvt.s32.f32 %v713
        %v730 = vcvt.s32.f32 %v714
        %v731 = vcvt.s32.f32 %v715
        %v732 = vcvt.s32.f32 %v716
        %v733 = vcvt.s32.f32 %v717
        %v734 = vcvt.s32.f32 %v718
        %v735 = vcvt.s32.f32 %v719
        %v736 = vcvt.s32.f32 %v720
        %v737 = vcvt.s32.f32 %v721
        %v738 = vcvt.s32.f32 %v722
        %v739 = vcvt.s32.f32 %v723
        %v740 = vcvt.s32.f32 %v724
        %v741 = vcvt.s32.f32 %v725
        %v742 = vcvt.s32.f32 %v726
        %v743 = vpack.c.bf16 %v728, %v727
        %v744 = vpack.c.bf16 %v730, %v729
        %v745 = vpack.c.bf16 %v732, %v731
        %v746 = vpack.c.bf16 %v734, %v733
        %v747 = vpack.c.bf16 %v736, %v735
        %v748 = vpack.c.bf16 %v738, %v737
        %v749 = vpack.c.bf16 %v740, %v739
        %v750 = vpack.c.bf16 %v742, %v741
        %751 = vset.pattern.permute.xlu0 0
        %752 = vperm.xlu0 %751, %v626
        %v753 = vpop.permute.xlu0 %752
        %754 = vset.pattern.permute.xlu0 0
        %755 = vperm.xlu0 %754, %v627
        %v756 = vpop.permute.xlu0 %755
        %757 = vset.pattern.permute.xlu0 0
        %758 = vperm.xlu0 %757, %v628
        %v759 = vpop.permute.xlu0 %758
        %760 = vset.pattern.permute.xlu0 0
        %761 = vperm.xlu0 %760, %v629
        %v762 = vpop.permute.xlu0 %761
        %763 = vset.pattern.permute.xlu0 0
        %764 = vperm.xlu0 %763, %v630
        %v765 = vpop.permute.xlu0 %764
        %766 = vset.pattern.permute.xlu0 0
        %767 = vperm.xlu0 %766, %v631
        %v768 = vpop.permute.xlu0 %767
        %769 = vset.pattern.permute.xlu0 0
        %770 = vperm.xlu0 %769, %v632
        %v771 = vpop.permute.xlu0 %770
        %772 = vset.pattern.permute.xlu0 0
        %773 = vperm.xlu0 %772, %v633
        %v774 = vpop.permute.xlu0 %773
        %775 = vset.pattern.permute.xlu0 0
        %776 = vperm.xlu0 %775, %v634
        %v777 = vpop.permute.xlu0 %776
        %778 = vset.pattern.permute.xlu0 0
        %779 = vperm.xlu0 %778, %v635
        %v780 = vpop.permute.xlu0 %779
        %781 = vset.pattern.permute.xlu0 0
        %782 = vperm.xlu0 %781, %v636
        %v783 = vpop.permute.xlu0 %782
        %784 = vset.pattern.permute.xlu0 0
        %785 = vperm.xlu0 %784, %v637
        %v786 = vpop.permute.xlu0 %785
        %787 = vset.pattern.permute.xlu0 0
        %788 = vperm.xlu0 %787, %v638
        %v789 = vpop.permute.xlu0 %788
        %790 = vset.pattern.permute.xlu0 0
        %791 = vperm.xlu0 %790, %v639
        %v792 = vpop.permute.xlu0 %791
        %793 = vset.pattern.permute.xlu0 0
        %794 = vperm.xlu0 %793, %v640
        %v795 = vpop.permute.xlu0 %794
        %796 = vset.pattern.permute.xlu0 0
        %797 = vperm.xlu0 %796, %v641
        %v798 = vpop.permute.xlu0 %797
        %vm799 = vcmp.eq.s32.totalorder %v644, %v753
        %vm800 = vcmp.eq.s32.totalorder %v644, %v756
        %vm801 = vcmp.eq.s32.totalorder %v644, %v759
        %vm802 = vcmp.eq.s32.totalorder %v644, %v762
        %vm803 = vcmp.eq.s32.totalorder %v644, %v765
        %vm804 = vcmp.eq.s32.totalorder %v644, %v768
        %vm805 = vcmp.eq.s32.totalorder %v644, %v771
        %vm806 = vcmp.eq.s32.totalorder %v644, %v774
        %vm807 = vcmp.eq.s32.totalorder %v644, %v777
        %vm808 = vcmp.eq.s32.totalorder %v644, %v780
        %vm809 = vcmp.eq.s32.totalorder %v644, %v783
        %vm810 = vcmp.eq.s32.totalorder %v644, %v786
        %vm811 = vcmp.eq.s32.totalorder %v644, %v789
        %vm812 = vcmp.eq.s32.totalorder %v644, %v792
        %vm813 = vcmp.eq.s32.totalorder %v644, %v795
        %vm814 = vcmp.eq.s32.totalorder %v644, %v798
        %v815 = vsel %vm799, 1, 0
        %v816 = vsel %vm800, 1, 0
        %v817 = vsel %vm801, 1, 0
        %v818 = vsel %vm802, 1, 0
        %v819 = vsel %vm803, 1, 0
        %v820 = vsel %vm804, 1, 0
        %v821 = vsel %vm805, 1, 0
        %v822 = vsel %vm806, 1, 0
        %v823 = vsel %vm807, 1, 0
        %v824 = vsel %vm808, 1, 0
        %v825 = vsel %vm809, 1, 0
        %v826 = vsel %vm810, 1, 0
        %v827 = vsel %vm811, 1, 0
        %v828 = vsel %vm812, 1, 0
        %v829 = vsel %vm813, 1, 0
        %v830 = vsel %vm814, 1, 0
        %v831 = vcvt.s32.f32 %v815
        %v832 = vcvt.s32.f32 %v816
        %v833 = vcvt.s32.f32 %v817
        %v834 = vcvt.s32.f32 %v818
        %v835 = vcvt.s32.f32 %v819
        %v836 = vcvt.s32.f32 %v820
        %v837 = vcvt.s32.f32 %v821
        %v838 = vcvt.s32.f32 %v822
        %v839 = vcvt.s32.f32 %v823
        %v840 = vcvt.s32.f32 %v824
        %v841 = vcvt.s32.f32 %v825
        %v842 = vcvt.s32.f32 %v826
        %v843 = vcvt.s32.f32 %v827
        %v844 = vcvt.s32.f32 %v828
        %v845 = vcvt.s32.f32 %v829
        %v846 = vcvt.s32.f32 %v830
        %v847 = vpack.c.bf16 %v832, %v831
        %v848 = vpack.c.bf16 %v834, %v833
        %v849 = vpack.c.bf16 %v836, %v835
        %v850 = vpack.c.bf16 %v838, %v837
        %v851 = vpack.c.bf16 %v840, %v839
        %v852 = vpack.c.bf16 %v842, %v841
        %v853 = vpack.c.bf16 %v844, %v843
        %v854 = vpack.c.bf16 %v846, %v845
        %v855 = vlaneseq
        %v856 = vshrl.u32 %v855, 7
        %v857 = vadd.s32 %v856, %v645
        %v858 = vlaneseq
        %v859 = vshrl.u32 %v858, 7
        %v860 = vsub.s32 0, %v859
        %v861 = vrot.slane %v642, %v860
        %vm862 = vcmp.eq.s32.totalorder %v857, %v861
        %v863 = vsel %vm862, 1, 0
        %v864 = vcvt.s32.f32 %v863
        %v865 = vpack.c.bf16 %v864, %v864
        %v866 = vld [vmem:[%s598] sm:$0xf]
        %vm867 = vcmask 64512
        %v869 = vsel %vm867, %v743, 0
        %v872 = vsel %vm867, %v744, 0
        %v875 = vsel %vm867, %v745, 0
        %v878 = vsel %vm867, %v746, 0
        %v881 = vsel %vm867, %v747, 0
        %v884 = vsel %vm867, %v748, 0
        %v887 = vsel %vm867, %v749, 0
        %v890 = vsel %vm867, %v750, 0
        %vm892 = vcmask 1043456
        %v894 = vsel %vm892, %v866, 0
        %896 = vmatprep.subr.bf16.mxu0 0
        %897 = vmatpush1.bf16.msra.mxu0 0
        %898 = vmatprep.subr.bf16.mxu0 0
        %899 = vmatpush1.bf16.msra.mxu0 0
        %900 = vmatprep.subr.bf16.mxu0 0
        %901 = vmatpush1.bf16.msra.mxu0 0
        %902 = vmatprep.subr.bf16.mxu0 0
        %903 = vmatpush1.bf16.msra.mxu0 0
        %904 = vmatprep.subr.bf16.mxu0 0
        %905 = vmatpush1.bf16.msra.mxu0 0
        %906 = vmatprep.subr.bf16.mxu0 0
        %907 = vmatpush1.bf16.msra.mxu0 0
        %908 = vmatprep.subr.bf16.mxu0 0
        %909 = vmatpush1.bf16.msra.mxu0 0
        %910 = vmatprep.subr.bf16.mxu0 0
        %911 = vmatpush1.bf16.msra.mxu0 %v894
        %912 = vmatprep.subr.bf16.mxu0 0
        %913 = vmatpush2.bf16.msra.mxu0 0
        %914 = vmatprep.subr.bf16.mxu0 0
        %915 = vmatpush2.bf16.msra.mxu0 0
        %916 = vmatprep.subr.bf16.mxu0 0
        %917 = vmatpush2.bf16.msra.mxu0 0
        %918 = vmatprep.subr.bf16.mxu0 0
        %919 = vmatpush2.bf16.msra.mxu0 0
        %920 = vmatprep.subr.bf16.mxu0 0
        %921 = vmatpush2.bf16.msra.mxu0 0
        %922 = vmatprep.subr.bf16.mxu0 0
        %923 = vmatpush2.bf16.msra.mxu0 0
        %924 = vmatprep.subr.bf16.mxu0 0
        %925 = vmatpush2.bf16.msra.mxu0 0
        %926 = vmatprep.subr.bf16.mxu0 0
        %927 = vmatpush2.bf16.msra.mxu0 0
        %928 = vmatprep.mubr.bf16.mxu0 0
        %929 = vmatmul.mubr.bf16.gmra.mxu0 %v869
        %v930 = vpop.f32.mrf.mxu0
        %v931 = vadd.f32 0.0, %v930
        %v932 = vpop.f32.mrf.mxu0
        %v933 = vpop.f32.mrf.mxu0
        %v934 = vadd.f32 0.0, %v933
        %v935 = vpop.f32.mrf.mxu0
        %936 = vmatprep.mubr.bf16.mxu0 0
        %937 = vmatmul.mubr.bf16.gmra.mxu0 %v872
        %v938 = vpop.f32.mrf.mxu0
        %v939 = vadd.f32 0.0, %v938
        %v940 = vpop.f32.mrf.mxu0
        %v941 = vpop.f32.mrf.mxu0
        %v942 = vadd.f32 0.0, %v941
        %v943 = vpop.f32.mrf.mxu0
        %944 = vmatprep.mubr.bf16.mxu0 0
        %945 = vmatmul.mubr.bf16.gmra.mxu0 %v875
        %v946 = vpop.f32.mrf.mxu0
        %v947 = vadd.f32 0.0, %v946
        %v948 = vpop.f32.mrf.mxu0
        %v949 = vpop.f32.mrf.mxu0
        %v950 = vadd.f32 0.0, %v949
        %v951 = vpop.f32.mrf.mxu0
        %952 = vmatprep.mubr.bf16.mxu0 0
        %953 = vmatmul.mubr.bf16.gmra.mxu0 %v878
        %v954 = vpop.f32.mrf.mxu0
        %v955 = vadd.f32 0.0, %v954
        %v956 = vpop.f32.mrf.mxu0
        %v957 = vpop.f32.mrf.mxu0
        %v958 = vadd.f32 0.0, %v957
        %v959 = vpop.f32.mrf.mxu0
        %960 = vmatprep.mubr.bf16.mxu0 0
        %961 = vmatmul.mubr.bf16.gmra.mxu0 %v881
        %v962 = vpop.f32.mrf.mxu0
        %v963 = vadd.f32 0.0, %v962
        %v964 = vpop.f32.mrf.mxu0
        %v965 = vpop.f32.mrf.mxu0
        %v966 = vadd.f32 0.0, %v965
        %v967 = vpop.f32.mrf.mxu0
        %968 = vmatprep.mubr.bf16.mxu0 0
        %969 = vmatmul.mubr.bf16.gmra.mxu0 %v884
        %v970 = vpop.f32.mrf.mxu0
        %v971 = vadd.f32 0.0, %v970
        %v972 = vpop.f32.mrf.mxu0
        %v973 = vpop.f32.mrf.mxu0
        %v974 = vadd.f32 0.0, %v973
        %v975 = vpop.f32.mrf.mxu0
        %976 = vmatprep.mubr.bf16.mxu0 0
        %977 = vmatmul.mubr.bf16.gmra.mxu0 %v887
        %v978 = vpop.f32.mrf.mxu0
        %v979 = vadd.f32 0.0, %v978
        %v980 = vpop.f32.mrf.mxu0
        %v981 = vpop.f32.mrf.mxu0
        %v982 = vadd.f32 0.0, %v981
        %v983 = vpop.f32.mrf.mxu0
        %984 = vmatprep.mubr.bf16.mxu0 0
        %985 = vmatmul.mubr.bf16.gmra.mxu0 %v890
        %v986 = vpop.f32.mrf.mxu0
        %v987 = vadd.f32 0.0, %v986
        %v988 = vpop.f32.mrf.mxu0
        %v989 = vpop.f32.mrf.mxu0
        %v990 = vadd.f32 0.0, %v989
        %v991 = vpop.f32.mrf.mxu0
        %992 = vdwg.mxu0
        %v993 = vld [vmem:[%s1] sm:$0xf]
        %v994 = vld [vmem:[%s1 + $0x4] sm:$0xf]
        %v997 = vunpack.c.l.b16 %v993
        %v998 = vunpack.c.l.b16 %v994
        %v999 = vpack.c.b16 %v998, %v997
        %vm1001 = vcmask 130048
        %v1003 = vsel %vm1001, %v847, 0
        %v1006 = vsel %vm1001, %v848, 0
        %v1009 = vsel %vm1001, %v849, 0
        %v1012 = vsel %vm1001, %v850, 0
        %v1015 = vsel %vm1001, %v851, 0
        %v1018 = vsel %vm1001, %v852, 0
        %v1021 = vsel %vm1001, %v853, 0
        %v1024 = vsel %vm1001, %v854, 0
        %1026 = vmatprep.subr.bf16.mxu0 0
        %1027 = vmatpush1.bf16.msra.mxu0 0
        %1028 = vmatprep.subr.bf16.mxu0 0
        %1029 = vmatpush1.bf16.msra.mxu0 0
        %1030 = vmatprep.subr.bf16.mxu0 0
        %1031 = vmatpush1.bf16.msra.mxu0 0
        %1032 = vmatprep.subr.bf16.mxu0 0
        %1033 = vmatpush1.bf16.msra.mxu0 0
        %1034 = vmatprep.subr.bf16.mxu0 0
        %1035 = vmatpush1.bf16.msra.mxu0 0
        %1036 = vmatprep.subr.bf16.mxu0 0
        %1037 = vmatpush1.bf16.msra.mxu0 0
        %1038 = vmatprep.subr.bf16.mxu0 0
        %1039 = vmatpush1.bf16.msra.mxu0 0
        %1040 = vmatprep.subr.bf16.mxu0 0
        %1041 = vmatpush1.bf16.msra.mxu0 %v999
        %1042 = vmatprep.subr.bf16.mxu0 0
        %1043 = vmatpush2.bf16.msra.mxu0 0
        %1044 = vmatprep.subr.bf16.mxu0 0
        %1045 = vmatpush2.bf16.msra.mxu0 0
        %1046 = vmatprep.subr.bf16.mxu0 0
        %1047 = vmatpush2.bf16.msra.mxu0 0
        %1048 = vmatprep.subr.bf16.mxu0 0
        %1049 = vmatpush2.bf16.msra.mxu0 0
        %1050 = vmatprep.subr.bf16.mxu0 0
        %1051 = vmatpush2.bf16.msra.mxu0 0
        %1052 = vmatprep.subr.bf16.mxu0 0
        %1053 = vmatpush2.bf16.msra.mxu0 0
        %1054 = vmatprep.subr.bf16.mxu0 0
        %1055 = vmatpush2.bf16.msra.mxu0 0
        %1056 = vmatprep.subr.bf16.mxu0 0
        %1057 = vmatpush2.bf16.msra.mxu0 0
        %1058 = vmatprep.mubr.bf16.mxu0 0
        %1059 = vmatmul.mubr.bf16.gmra.mxu0 %v1003
        %v1060 = vpop.f32.mrf.mxu0
        %v1061 = vadd.f32 0.0, %v1060
        %v1062 = vpop.f32.mrf.mxu0
        %v1063 = vpop.f32.mrf.mxu0
        %v1064 = vadd.f32 0.0, %v1063
        %v1065 = vpop.f32.mrf.mxu0
        %1066 = vmatprep.mubr.bf16.mxu0 0
        %1067 = vmatmul.mubr.bf16.gmra.mxu0 %v1006
        %v1068 = vpop.f32.mrf.mxu0
        %v1069 = vadd.f32 0.0, %v1068
        %v1070 = vpop.f32.mrf.mxu0
        %v1071 = vpop.f32.mrf.mxu0
        %v1072 = vadd.f32 0.0, %v1071
        %v1073 = vpop.f32.mrf.mxu0
        %1074 = vmatprep.mubr.bf16.mxu0 0
        %1075 = vmatmul.mubr.bf16.gmra.mxu0 %v1009
        %v1076 = vpop.f32.mrf.mxu0
        %v1077 = vadd.f32 0.0, %v1076
        %v1078 = vpop.f32.mrf.mxu0
        %v1079 = vpop.f32.mrf.mxu0
        %v1080 = vadd.f32 0.0, %v1079
        %v1081 = vpop.f32.mrf.mxu0
        %1082 = vmatprep.mubr.bf16.mxu0 0
        %1083 = vmatmul.mubr.bf16.gmra.mxu0 %v1012
        %v1084 = vpop.f32.mrf.mxu0
        %v1085 = vadd.f32 0.0, %v1084
        %v1086 = vpop.f32.mrf.mxu0
        %v1087 = vpop.f32.mrf.mxu0
        %v1088 = vadd.f32 0.0, %v1087
        %v1089 = vpop.f32.mrf.mxu0
        %1090 = vmatprep.mubr.bf16.mxu0 0
        %1091 = vmatmul.mubr.bf16.gmra.mxu0 %v1015
        %v1092 = vpop.f32.mrf.mxu0
        %v1093 = vadd.f32 0.0, %v1092
        %v1094 = vpop.f32.mrf.mxu0
        %v1095 = vpop.f32.mrf.mxu0
        %v1096 = vadd.f32 0.0, %v1095
        %v1097 = vpop.f32.mrf.mxu0
        %1098 = vmatprep.mubr.bf16.mxu0 0
        %1099 = vmatmul.mubr.bf16.gmra.mxu0 %v1018
        %v1100 = vpop.f32.mrf.mxu0
        %v1101 = vadd.f32 0.0, %v1100
        %v1102 = vpop.f32.mrf.mxu0
        %v1103 = vpop.f32.mrf.mxu0
        %v1104 = vadd.f32 0.0, %v1103
        %v1105 = vpop.f32.mrf.mxu0
        %1106 = vmatprep.mubr.bf16.mxu0 0
        %1107 = vmatmul.mubr.bf16.gmra.mxu0 %v1021
        %v1108 = vpop.f32.mrf.mxu0
        %v1109 = vadd.f32 0.0, %v1108
        %v1110 = vpop.f32.mrf.mxu0
        %v1111 = vpop.f32.mrf.mxu0
        %v1112 = vadd.f32 0.0, %v1111
        %v1113 = vpop.f32.mrf.mxu0
        %1114 = vmatprep.mubr.bf16.mxu0 0
        %1115 = vmatmul.mubr.bf16.gmra.mxu0 %v1024
        %v1116 = vpop.f32.mrf.mxu0
        %v1117 = vadd.f32 0.0, %v1116
        %v1118 = vpop.f32.mrf.mxu0
        %v1119 = vpop.f32.mrf.mxu0
        %v1120 = vadd.f32 0.0, %v1119
        %v1121 = vpop.f32.mrf.mxu0
        %1122 = vdwg.mxu0
        %v1123 = vpack.c.bf16 %v934, %v931
        %v1124 = vpack.c.bf16 %v942, %v939
        %v1125 = vpack.c.bf16 %v950, %v947
        %v1126 = vpack.c.bf16 %v958, %v955
        %v1127 = vpack.c.bf16 %v966, %v963
        %v1128 = vpack.c.bf16 %v974, %v971
        %v1129 = vpack.c.bf16 %v982, %v979
        %v1130 = vpack.c.bf16 %v990, %v987
        %v1131 = vld [vmem:[%s6] sm:$0xf]
        %v1132 = vld [vmem:[%s6 + $0x4] sm:$0xf]
        %v1133 = vld [vmem:[%s6 + $0x8] sm:$0xf]
        %v1134 = vld [vmem:[%s6 + $0xc] sm:$0xf]
        %v1135 = vld [vmem:[%s7] sm:$0x1]
        %v1137 = vlaneseq
        %v1138 = vshrl.u32 %v1137, 7
        %v1139 = vsub.s32 0, %v1138
        %v1140 = vrot.slane %v1135, %v1139
        %v1146 = vunpack.c.l.b16 %v1131
        %v1147 = vunpack.c.l.b16 %v1132
        %v1148 = vunpack.c.l.b16 %v1133
        %v1149 = vunpack.c.l.b16 %v1134
        %v1150 = vpack.c.b16 %v1147, %v1146
        %v1151 = vpack.c.b16 %v1149, %v1148
        %vm1154 = vcmask 261120
        %v1156 = vsel %vm1154, %v1123, 0
        %v1159 = vsel %vm1154, %v1124, 0
        %v1162 = vsel %vm1154, %v1125, 0
        %v1165 = vsel %vm1154, %v1126, 0
        %v1168 = vsel %vm1154, %v1127, 0
        %v1171 = vsel %vm1154, %v1128, 0
        %v1174 = vsel %vm1154, %v1129, 0
        %v1177 = vsel %vm1154, %v1130, 0
        %1179 = vmatprep.subr.bf16.mxu0 0
        %1180 = vmatpush1.bf16.msra.mxu0 0
        %1181 = vmatprep.subr.bf16.mxu0 0
        %1182 = vmatpush1.bf16.msra.mxu0 0
        %1183 = vmatprep.subr.bf16.mxu0 0
        %1184 = vmatpush1.bf16.msra.mxu0 0
        %1185 = vmatprep.subr.bf16.mxu0 0
        %1186 = vmatpush1.bf16.msra.mxu0 0
        %1187 = vmatprep.subr.bf16.mxu0 0
        %1188 = vmatpush1.bf16.msra.mxu0 0
        %1189 = vmatprep.subr.bf16.mxu0 0
        %1190 = vmatpush1.bf16.msra.mxu0 0
        %1191 = vmatprep.subr.bf16.mxu0 0
        %1192 = vmatpush1.bf16.msra.mxu0 %v1151
        %1193 = vmatprep.subr.bf16.mxu0 0
        %1194 = vmatpush1.bf16.msra.mxu0 %v1150
        %1195 = vmatprep.subr.bf16.mxu0 0
        %1196 = vmatpush2.bf16.msra.mxu0 0
        %1197 = vmatprep.subr.bf16.mxu0 0
        %1198 = vmatpush2.bf16.msra.mxu0 0
        %1199 = vmatprep.subr.bf16.mxu0 0
        %1200 = vmatpush2.bf16.msra.mxu0 0
        %1201 = vmatprep.subr.bf16.mxu0 0
        %1202 = vmatpush2.bf16.msra.mxu0 0
        %1203 = vmatprep.subr.bf16.mxu0 0
        %1204 = vmatpush2.bf16.msra.mxu0 0
        %1205 = vmatprep.subr.bf16.mxu0 0
        %1206 = vmatpush2.bf16.msra.mxu0 0
        %1207 = vmatprep.subr.bf16.mxu0 0
        %1208 = vmatpush2.bf16.msra.mxu0 0
        %1209 = vmatprep.subr.bf16.mxu0 0
        %1210 = vmatpush2.bf16.msra.mxu0 0
        %1211 = vmatprep.mubr.bf16.mxu0 0
        %1212 = vmatmul.mubr.bf16.gmra.mxu0 %v1156
        %v1213 = vpop.f32.mrf.mxu0
        %v1214 = vadd.f32 %v1140, %v1213
        %v1215 = vpop.f32.mrf.mxu0
        %v1216 = vpop.f32.mrf.mxu0
        %v1217 = vadd.f32 %v1140, %v1216
        %v1218 = vpop.f32.mrf.mxu0
        %1219 = vmatprep.mubr.bf16.mxu0 0
        %1220 = vmatmul.mubr.bf16.gmra.mxu0 %v1159
        %v1221 = vpop.f32.mrf.mxu0
        %v1222 = vadd.f32 %v1140, %v1221
        %v1223 = vpop.f32.mrf.mxu0
        %v1224 = vpop.f32.mrf.mxu0
        %v1225 = vadd.f32 %v1140, %v1224
        %v1226 = vpop.f32.mrf.mxu0
        %1227 = vmatprep.mubr.bf16.mxu0 0
        %1228 = vmatmul.mubr.bf16.gmra.mxu0 %v1162
        %v1229 = vpop.f32.mrf.mxu0
        %v1230 = vadd.f32 %v1140, %v1229
        %v1231 = vpop.f32.mrf.mxu0
        %v1232 = vpop.f32.mrf.mxu0
        %v1233 = vadd.f32 %v1140, %v1232
        %v1234 = vpop.f32.mrf.mxu0
        %1235 = vmatprep.mubr.bf16.mxu0 0
        %1236 = vmatmul.mubr.bf16.gmra.mxu0 %v1165
        %v1237 = vpop.f32.mrf.mxu0
        %v1238 = vadd.f32 %v1140, %v1237
        %v1239 = vpop.f32.mrf.mxu0
        %v1240 = vpop.f32.mrf.mxu0
        %v1241 = vadd.f32 %v1140, %v1240
        %v1242 = vpop.f32.mrf.mxu0
        %1243 = vmatprep.mubr.bf16.mxu0 0
        %1244 = vmatmul.mubr.bf16.gmra.mxu0 %v1168
        %v1245 = vpop.f32.mrf.mxu0
        %v1246 = vadd.f32 %v1140, %v1245
        %v1247 = vpop.f32.mrf.mxu0
        %v1248 = vpop.f32.mrf.mxu0
        %v1249 = vadd.f32 %v1140, %v1248
        %v1250 = vpop.f32.mrf.mxu0
        %1251 = vmatprep.mubr.bf16.mxu0 0
        %1252 = vmatmul.mubr.bf16.gmra.mxu0 %v1171
        %v1253 = vpop.f32.mrf.mxu0
        %v1254 = vadd.f32 %v1140, %v1253
        %v1255 = vpop.f32.mrf.mxu0
        %v1256 = vpop.f32.mrf.mxu0
        %v1257 = vadd.f32 %v1140, %v1256
        %v1258 = vpop.f32.mrf.mxu0
        %1259 = vmatprep.mubr.bf16.mxu0 0
        %1260 = vmatmul.mubr.bf16.gmra.mxu0 %v1174
        %v1261 = vpop.f32.mrf.mxu0
        %v1262 = vadd.f32 %v1140, %v1261
        %v1263 = vpop.f32.mrf.mxu0
        %v1264 = vpop.f32.mrf.mxu0
        %v1265 = vadd.f32 %v1140, %v1264
        %v1266 = vpop.f32.mrf.mxu0
        %1267 = vmatprep.mubr.bf16.mxu0 0
        %1268 = vmatmul.mubr.bf16.gmra.mxu0 %v1177
        %v1269 = vpop.f32.mrf.mxu0
        %v1270 = vadd.f32 %v1140, %v1269
        %v1271 = vpop.f32.mrf.mxu0
        %v1272 = vpop.f32.mrf.mxu0
        %v1273 = vadd.f32 %v1140, %v1272
        %v1274 = vpop.f32.mrf.mxu0
        %1275 = vdwg.mxu0
        %v1276 = vld [vmem:[%s603] sm:$0xf]
        %v1277 = vld [vmem:[%s603 + $0x4] sm:$0xf]
        %v1278 = vld [vmem:[%s603 + $0x8] sm:$0xf]
        %v1279 = vld [vmem:[%s603 + $0xc] sm:$0xf]
        %v1280 = vld [vmem:[%s603 + $0x10] sm:$0xf]
        %v1281 = vld [vmem:[%s603 + $0x14] sm:$0xf]
        %v1282 = vld [vmem:[%s603 + $0x18] sm:$0xf]
        %v1283 = vld [vmem:[%s603 + $0x1c] sm:$0xf]
        %v1284 = vld [vmem:[%s603 + $0x20] sm:$0xf]
        %v1285 = vld [vmem:[%s603 + $0x24] sm:$0xf]
        %v1286 = vld [vmem:[%s603 + $0x28] sm:$0xf]
        %v1287 = vld [vmem:[%s603 + $0x2c] sm:$0xf]
        %v1288 = vld [vmem:[%s603 + $0x30] sm:$0xf]
        %v1289 = vld [vmem:[%s603 + $0x34] sm:$0xf]
        %v1290 = vld [vmem:[%s603 + $0x38] sm:$0xf]
        %v1291 = vld [vmem:[%s603 + $0x3c] sm:$0xf]
        %v1292 = vld [vmem:[%s8] sm:$0xf]
        %v1293 = vld [vmem:[%s8 + $0x4] sm:$0xf]
        %v1294 = vld [vmem:[%s8 + $0x8] sm:$0xf]
        %v1295 = vld [vmem:[%s8 + $0xc] sm:$0xf]
        %v1296 = vpack.c.bf16 %v1064, %v1061
        %v1297 = vpack.c.bf16 %v1072, %v1069
        %v1298 = vpack.c.bf16 %v1080, %v1077
        %v1299 = vpack.c.bf16 %v1088, %v1085
        %v1300 = vpack.c.bf16 %v1096, %v1093
        %v1301 = vpack.c.bf16 %v1104, %v1101
        %v1302 = vpack.c.bf16 %v1112, %v1109
        %v1303 = vpack.c.bf16 %v1120, %v1117
        %v1304 = vld [vmem:[%s9] sm:$0xf]
        %v1305 = vld [vmem:[%s9 + $0x4] sm:$0xf]
        %v1306 = vld [vmem:[%s9 + $0x8] sm:$0xf]
        %v1307 = vld [vmem:[%s9 + $0xc] sm:$0xf]
        %v1312 = vunpack.c.l.b16 %v1304
        %v1313 = vunpack.c.l.b16 %v1305
        %v1314 = vunpack.c.l.b16 %v1306
        %v1315 = vunpack.c.l.b16 %v1307
        %v1316 = vpack.c.b16 %v1313, %v1312
        %v1317 = vpack.c.b16 %v1315, %v1314
        %v1321 = vsel %vm1154, %v1296, 0
        %v1324 = vsel %vm1154, %v1297, 0
        %v1327 = vsel %vm1154, %v1298, 0
        %v1330 = vsel %vm1154, %v1299, 0
        %v1333 = vsel %vm1154, %v1300, 0
        %v1336 = vsel %vm1154, %v1301, 0
        %v1339 = vsel %vm1154, %v1302, 0
        %v1342 = vsel %vm1154, %v1303, 0
        %1344 = vmatprep.subr.bf16.mxu0 0
        %1345 = vmatpush1.bf16.msra.mxu0 0
        %1346 = vmatprep.subr.bf16.mxu0 0
        %1347 = vmatpush1.bf16.msra.mxu0 0
        %1348 = vmatprep.subr.bf16.mxu0 0
        %1349 = vmatpush1.bf16.msra.mxu0 0
        %1350 = vmatprep.subr.bf16.mxu0 0
        %1351 = vmatpush1.bf16.msra.mxu0 0
        %1352 = vmatprep.subr.bf16.mxu0 0
        %1353 = vmatpush1.bf16.msra.mxu0 0
        %1354 = vmatprep.subr.bf16.mxu0 0
        %1355 = vmatpush1.bf16.msra.mxu0 0
        %1356 = vmatprep.subr.bf16.mxu0 0
        %1357 = vmatpush1.bf16.msra.mxu0 %v1317
        %1358 = vmatprep.subr.bf16.mxu0 0
        %1359 = vmatpush1.bf16.msra.mxu0 %v1316
        %1360 = vmatprep.subr.bf16.mxu0 0
        %1361 = vmatpush2.bf16.msra.mxu0 0
        %1362 = vmatprep.subr.bf16.mxu0 0
        %1363 = vmatpush2.bf16.msra.mxu0 0
        %1364 = vmatprep.subr.bf16.mxu0 0
        %1365 = vmatpush2.bf16.msra.mxu0 0
        %1366 = vmatprep.subr.bf16.mxu0 0
        %1367 = vmatpush2.bf16.msra.mxu0 0
        %1368 = vmatprep.subr.bf16.mxu0 0
        %1369 = vmatpush2.bf16.msra.mxu0 0
        %1370 = vmatprep.subr.bf16.mxu0 0
        %1371 = vmatpush2.bf16.msra.mxu0 0
        %1372 = vmatprep.subr.bf16.mxu0 0
        %1373 = vmatpush2.bf16.msra.mxu0 0
        %1374 = vmatprep.subr.bf16.mxu0 0
        %1375 = vmatpush2.bf16.msra.mxu0 0
        %1376 = vmatprep.mubr.bf16.mxu0 0
        %1377 = vmatmul.mubr.bf16.gmra.mxu0 %v1321
        %v1378 = vpop.f32.mrf.mxu0
        %v1379 = vadd.f32 0.0, %v1378
        %v1380 = vpop.f32.mrf.mxu0
        %v1381 = vpop.f32.mrf.mxu0
        %v1382 = vadd.f32 0.0, %v1381
        %v1383 = vpop.f32.mrf.mxu0
        %1384 = vmatprep.mubr.bf16.mxu0 0
        %1385 = vmatmul.mubr.bf16.gmra.mxu0 %v1324
        %v1386 = vpop.f32.mrf.mxu0
        %v1387 = vadd.f32 0.0, %v1386
        %v1388 = vpop.f32.mrf.mxu0
        %v1389 = vpop.f32.mrf.mxu0
        %v1390 = vadd.f32 0.0, %v1389
        %v1391 = vpop.f32.mrf.mxu0
        %1392 = vmatprep.mubr.bf16.mxu0 0
        %1393 = vmatmul.mubr.bf16.gmra.mxu0 %v1327
        %v1394 = vpop.f32.mrf.mxu0
        %v1395 = vadd.f32 0.0, %v1394
        %v1396 = vpop.f32.mrf.mxu0
        %v1397 = vpop.f32.mrf.mxu0
        %v1398 = vadd.f32 0.0, %v1397
        %v1399 = vpop.f32.mrf.mxu0
        %1400 = vmatprep.mubr.bf16.mxu0 0
        %1401 = vmatmul.mubr.bf16.gmra.mxu0 %v1330
        %v1402 = vpop.f32.mrf.mxu0
        %v1403 = vadd.f32 0.0, %v1402
        %v1404 = vpop.f32.mrf.mxu0
        %v1405 = vpop.f32.mrf.mxu0
        %v1406 = vadd.f32 0.0, %v1405
        %v1407 = vpop.f32.mrf.mxu0
        %1408 = vmatprep.mubr.bf16.mxu0 0
        %1409 = vmatmul.mubr.bf16.gmra.mxu0 %v1333
        %v1410 = vpop.f32.mrf.mxu0
        %v1411 = vadd.f32 0.0, %v1410
        %v1412 = vpop.f32.mrf.mxu0
        %v1413 = vpop.f32.mrf.mxu0
        %v1414 = vadd.f32 0.0, %v1413
        %v1415 = vpop.f32.mrf.mxu0
        %1416 = vmatprep.mubr.bf16.mxu0 0
        %1417 = vmatmul.mubr.bf16.gmra.mxu0 %v1336
        %v1418 = vpop.f32.mrf.mxu0
        %v1419 = vadd.f32 0.0, %v1418
        %v1420 = vpop.f32.mrf.mxu0
        %v1421 = vpop.f32.mrf.mxu0
        %v1422 = vadd.f32 0.0, %v1421
        %v1423 = vpop.f32.mrf.mxu0
        %1424 = vmatprep.mubr.bf16.mxu0 0
        %1425 = vmatmul.mubr.bf16.gmra.mxu0 %v1339
        %v1426 = vpop.f32.mrf.mxu0
        %v1427 = vadd.f32 0.0, %v1426
        %v1428 = vpop.f32.mrf.mxu0
        %v1429 = vpop.f32.mrf.mxu0
        %v1430 = vadd.f32 0.0, %v1429
        %v1431 = vpop.f32.mrf.mxu0
        %1432 = vmatprep.mubr.bf16.mxu0 0
        %1433 = vmatmul.mubr.bf16.gmra.mxu0 %v1342
        %v1434 = vpop.f32.mrf.mxu0
        %v1435 = vadd.f32 0.0, %v1434
        %v1436 = vpop.f32.mrf.mxu0
        %v1437 = vpop.f32.mrf.mxu0
        %v1438 = vadd.f32 0.0, %v1437
        %v1439 = vpop.f32.mrf.mxu0
        %1440 = vdwg.mxu0
        %v1457 = vunpack.c.l.b16 %v1276
        %v1458 = vunpack.c.l.b16 %v1277
        %v1459 = vunpack.c.l.b16 %v1278
        %v1460 = vunpack.c.l.b16 %v1279
        %v1461 = vunpack.c.l.b16 %v1280
        %v1462 = vunpack.c.l.b16 %v1281
        %v1463 = vunpack.c.l.b16 %v1282
        %v1464 = vunpack.c.l.b16 %v1283
        %v1465 = vunpack.c.l.b16 %v1284
        %v1466 = vunpack.c.l.b16 %v1285
        %v1467 = vunpack.c.l.b16 %v1286
        %v1468 = vunpack.c.l.b16 %v1287
        %v1469 = vunpack.c.l.b16 %v1288
        %v1470 = vunpack.c.l.b16 %v1289
        %v1471 = vunpack.c.l.b16 %v1290
        %v1472 = vunpack.c.l.b16 %v1291
        %v1473 = vpack.c.b16 %v1458, %v1457
        %v1474 = vpack.c.b16 %v1460, %v1459
        %v1475 = vpack.c.b16 %v1462, %v1461
        %v1476 = vpack.c.b16 %v1464, %v1463
        %v1477 = vpack.c.b16 %v1466, %v1465
        %v1478 = vpack.c.b16 %v1468, %v1467
        %v1479 = vpack.c.b16 %v1470, %v1469
        %v1480 = vpack.c.b16 %v1472, %v1471
        %v1485 = vunpack.c.l.b16 %v1292
        %v1486 = vunpack.c.l.b16 %v1293
        %v1487 = vunpack.c.l.b16 %v1294
        %v1488 = vunpack.c.l.b16 %v1295
        %v1489 = vpack.c.b16 %v1486, %v1485
        %v1490 = vpack.c.b16 %v1488, %v1487
        %v1494 = vsel %vm1154, %v1473, 0
        %v1497 = vsel %vm1154, %v1474, 0
        %v1500 = vsel %vm1154, %v1475, 0
        %v1503 = vsel %vm1154, %v1476, 0
        %v1506 = vsel %vm1154, %v1477, 0
        %v1509 = vsel %vm1154, %v1478, 0
        %v1512 = vsel %vm1154, %v1479, 0
        %v1515 = vsel %vm1154, %v1480, 0
        %1517 = vmatprep.subr.bf16.mxu0 0
        %1518 = vmatpush1.bf16.msra.mxu0 0
        %1519 = vmatprep.subr.bf16.mxu0 0
        %1520 = vmatpush1.bf16.msra.mxu0 0
        %1521 = vmatprep.subr.bf16.mxu0 0
        %1522 = vmatpush1.bf16.msra.mxu0 0
        %1523 = vmatprep.subr.bf16.mxu0 0
        %1524 = vmatpush1.bf16.msra.mxu0 0
        %1525 = vmatprep.subr.bf16.mxu0 0
        %1526 = vmatpush1.bf16.msra.mxu0 0
        %1527 = vmatprep.subr.bf16.mxu0 0
        %1528 = vmatpush1.bf16.msra.mxu0 0
        %1529 = vmatprep.subr.bf16.mxu0 0
        %1530 = vmatpush1.bf16.msra.mxu0 %v1490
        %1531 = vmatprep.subr.bf16.mxu0 0
        %1532 = vmatpush1.bf16.msra.mxu0 %v1489
        %1533 = vmatprep.subr.bf16.mxu0 0
        %1534 = vmatpush2.bf16.msra.mxu0 0
        %1535 = vmatprep.subr.bf16.mxu0 0
        %1536 = vmatpush2.bf16.msra.mxu0 0
        %1537 = vmatprep.subr.bf16.mxu0 0
        %1538 = vmatpush2.bf16.msra.mxu0 0
        %1539 = vmatprep.subr.bf16.mxu0 0
        %1540 = vmatpush2.bf16.msra.mxu0 0
        %1541 = vmatprep.subr.bf16.mxu0 0
        %1542 = vmatpush2.bf16.msra.mxu0 0
        %1543 = vmatprep.subr.bf16.mxu0 0
        %1544 = vmatpush2.bf16.msra.mxu0 0
        %1545 = vmatprep.subr.bf16.mxu0 0
        %1546 = vmatpush2.bf16.msra.mxu0 0
        %1547 = vmatprep.subr.bf16.mxu0 0
        %1548 = vmatpush2.bf16.msra.mxu0 0
        %1549 = vmatprep.mubr.bf16.mxu0 0
        %1550 = vmatmul.mubr.bf16.gmra.mxu0 %v1494
        %v1551 = vpop.f32.mrf.mxu0
        %v1552 = vadd.f32 %v1379, %v1551
        %v1553 = vpop.f32.mrf.mxu0
        %v1554 = vpop.f32.mrf.mxu0
        %v1555 = vadd.f32 %v1382, %v1554
        %v1556 = vpop.f32.mrf.mxu0
        %1557 = vmatprep.mubr.bf16.mxu0 0
        %1558 = vmatmul.mubr.bf16.gmra.mxu0 %v1497
        %v1559 = vpop.f32.mrf.mxu0
        %v1560 = vadd.f32 %v1387, %v1559
        %v1561 = vpop.f32.mrf.mxu0
        %v1562 = vpop.f32.mrf.mxu0
        %v1563 = vadd.f32 %v1390, %v1562
        %v1564 = vpop.f32.mrf.mxu0
        %1565 = vmatprep.mubr.bf16.mxu0 0
        %1566 = vmatmul.mubr.bf16.gmra.mxu0 %v1500
        %v1567 = vpop.f32.mrf.mxu0
        %v1568 = vadd.f32 %v1395, %v1567
        %v1569 = vpop.f32.mrf.mxu0
        %v1570 = vpop.f32.mrf.mxu0
        %v1571 = vadd.f32 %v1398, %v1570
        %v1572 = vpop.f32.mrf.mxu0
        %1573 = vmatprep.mubr.bf16.mxu0 0
        %1574 = vmatmul.mubr.bf16.gmra.mxu0 %v1503
        %v1575 = vpop.f32.mrf.mxu0
        %v1576 = vadd.f32 %v1403, %v1575
        %v1577 = vpop.f32.mrf.mxu0
        %v1578 = vpop.f32.mrf.mxu0
        %v1579 = vadd.f32 %v1406, %v1578
        %v1580 = vpop.f32.mrf.mxu0
        %1581 = vmatprep.mubr.bf16.mxu0 0
        %1582 = vmatmul.mubr.bf16.gmra.mxu0 %v1506
        %v1583 = vpop.f32.mrf.mxu0
        %v1584 = vadd.f32 %v1411, %v1583
        %v1585 = vpop.f32.mrf.mxu0
        %v1586 = vpop.f32.mrf.mxu0
        %v1587 = vadd.f32 %v1414, %v1586
        %v1588 = vpop.f32.mrf.mxu0
        %1589 = vmatprep.mubr.bf16.mxu0 0
        %1590 = vmatmul.mubr.bf16.gmra.mxu0 %v1509
        %v1591 = vpop.f32.mrf.mxu0
        %v1592 = vadd.f32 %v1419, %v1591
        %v1593 = vpop.f32.mrf.mxu0
        %v1594 = vpop.f32.mrf.mxu0
        %v1595 = vadd.f32 %v1422, %v1594
        %v1596 = vpop.f32.mrf.mxu0
        %1597 = vmatprep.mubr.bf16.mxu0 0
        %1598 = vmatmul.mubr.bf16.gmra.mxu0 %v1512
        %v1599 = vpop.f32.mrf.mxu0
        %v1600 = vadd.f32 %v1427, %v1599
        %v1601 = vpop.f32.mrf.mxu0
        %v1602 = vpop.f32.mrf.mxu0
        %v1603 = vadd.f32 %v1430, %v1602
        %v1604 = vpop.f32.mrf.mxu0
        %1605 = vmatprep.mubr.bf16.mxu0 0
        %1606 = vmatmul.mubr.bf16.gmra.mxu0 %v1515
        %v1607 = vpop.f32.mrf.mxu0
        %v1608 = vadd.f32 %v1435, %v1607
        %v1609 = vpop.f32.mrf.mxu0
        %v1610 = vpop.f32.mrf.mxu0
        %v1611 = vadd.f32 %v1438, %v1610
        %v1612 = vpop.f32.mrf.mxu0
        %1613 = vdwg.mxu0
        %v1614 = vld [vmem:[%s10] sm:$0x1]
        %v1616 = vlaneseq
        %v1617 = vshrl.u32 %v1616, 7
        %v1618 = vsub.s32 0, %v1617
        %v1619 = vrot.slane %v1614, %v1618
        %v1621 = vadd.f32 %v1552, %v1619
        %v1622 = vadd.f32 %v1555, %v1619
        %v1623 = vadd.f32 %v1560, %v1619
        %v1624 = vadd.f32 %v1563, %v1619
        %v1625 = vadd.f32 %v1568, %v1619
        %v1626 = vadd.f32 %v1571, %v1619
        %v1627 = vadd.f32 %v1576, %v1619
        %v1628 = vadd.f32 %v1579, %v1619
        %v1629 = vadd.f32 %v1584, %v1619
        %v1630 = vadd.f32 %v1587, %v1619
        %v1631 = vadd.f32 %v1592, %v1619
        %v1632 = vadd.f32 %v1595, %v1619
        %v1633 = vadd.f32 %v1600, %v1619
        %v1634 = vadd.f32 %v1603, %v1619
        %v1635 = vadd.f32 %v1608, %v1619
        %v1636 = vadd.f32 %v1611, %v1619
        %v1637 = vmul.f32 %v1214, %v1621
        %v1638 = vmul.f32 %v1217, %v1622
        %v1639 = vmul.f32 %v1222, %v1623
        %v1640 = vmul.f32 %v1225, %v1624
        %v1641 = vmul.f32 %v1230, %v1625
        %v1642 = vmul.f32 %v1233, %v1626
        %v1643 = vmul.f32 %v1238, %v1627
        %v1644 = vmul.f32 %v1241, %v1628
        %v1645 = vmul.f32 %v1246, %v1629
        %v1646 = vmul.f32 %v1249, %v1630
        %v1647 = vmul.f32 %v1254, %v1631
        %v1648 = vmul.f32 %v1257, %v1632
        %v1649 = vmul.f32 %v1262, %v1633
        %v1650 = vmul.f32 %v1265, %v1634
        %v1651 = vmul.f32 %v1270, %v1635
        %v1652 = vmul.f32 %v1273, %v1636
        %vm1653 = vcmask 523264
        %v1655 = vsel %vm1653, %v1637, 0
        %v1658 = vsel %vm1653, %v1638, 0
        %v1661 = vsel %vm1653, %v1639, 0
        %v1664 = vsel %vm1653, %v1640, 0
        %v1667 = vsel %vm1653, %v1641, 0
        %v1670 = vsel %vm1653, %v1642, 0
        %v1673 = vsel %vm1653, %v1643, 0
        %v1676 = vsel %vm1653, %v1644, 0
        %v1679 = vsel %vm1653, %v1645, 0
        %v1682 = vsel %vm1653, %v1646, 0
        %v1685 = vsel %vm1653, %v1647, 0
        %v1688 = vsel %vm1653, %v1648, 0
        %v1691 = vsel %vm1653, %v1649, 0
        %v1694 = vsel %vm1653, %v1650, 0
        %v1697 = vsel %vm1653, %v1651, 0
        %v1700 = vsel %vm1653, %v1652, 0
        %v1703 = vsel %vm1653, %v625, 0
        %1705 = vmatprep.subr.mxu0 0.0
        %1706 = vmatpush1.xpose.msra.mxu0 0.0
        %1707 = vmatprep.subr.mxu0 0.0
        %1708 = vmatpush1.xpose.msra.mxu0 0.0
        %1709 = vmatprep.subr.mxu0 0.0
        %1710 = vmatpush1.xpose.msra.mxu0 0.0
        %1711 = vmatprep.subr.mxu0 0.0
        %1712 = vmatpush1.xpose.msra.mxu0 0.0
        %1713 = vmatprep.subr.mxu0 0.0
        %1714 = vmatpush1.xpose.msra.mxu0 0.0
        %1715 = vmatprep.subr.mxu0 0.0
        %1716 = vmatpush1.xpose.msra.mxu0 0.0
        %1717 = vmatprep.subr.mxu0 0.0
        %1718 = vmatpush1.xpose.msra.mxu0 0.0
        %1719 = vmatprep.subr.mxu0 0.0
        %1720 = vmatpush1.xpose.msra.mxu0 0.0
        %1721 = vmatprep.subr.mxu0 0.0
        %1722 = vmatpush1.xpose.msra.mxu0 0.0
        %1723 = vmatprep.subr.mxu0 0.0
        %1724 = vmatpush1.xpose.msra.mxu0 0.0
        %1725 = vmatprep.subr.mxu0 0.0
        %1726 = vmatpush1.xpose.msra.mxu0 0.0
        %1727 = vmatprep.subr.mxu0 0.0
        %1728 = vmatpush1.xpose.msra.mxu0 0.0
        %1729 = vmatprep.subr.mxu0 0.0
        %1730 = vmatpush1.xpose.msra.mxu0 0.0
        %1731 = vmatprep.subr.mxu0 0.0
        %1732 = vmatpush1.xpose.msra.mxu0 0.0
        %1733 = vmatprep.subr.mxu0 0.0
        %1734 = vmatpush1.xpose.msra.mxu0 0.0
        %1735 = vmatprep.subr.mxu0 0.0
        %1736 = vmatpush1.xpose.msra.mxu0 %v1703
        %1737 = vmatprep.subr.mxu0 0.0
        %1738 = vmatpush2.xpose.msra.mxu0 0.0
        %1739 = vmatprep.subr.mxu0 0.0
        %1740 = vmatpush2.xpose.msra.mxu0 0.0
        %1741 = vmatprep.subr.mxu0 0.0
        %1742 = vmatpush2.xpose.msra.mxu0 0.0
        %1743 = vmatprep.subr.mxu0 0.0
        %1744 = vmatpush2.xpose.msra.mxu0 0.0
        %1745 = vmatprep.subr.mxu0 0.0
        %1746 = vmatpush2.xpose.msra.mxu0 0.0
        %1747 = vmatprep.subr.mxu0 0.0
        %1748 = vmatpush2.xpose.msra.mxu0 0.0
        %1749 = vmatprep.subr.mxu0 0.0
        %1750 = vmatpush2.xpose.msra.mxu0 0.0
        %1751 = vmatprep.subr.mxu0 0.0
        %1752 = vmatpush2.xpose.msra.mxu0 0.0
        %1753 = vmatprep.subr.mxu0 0.0
        %1754 = vmatpush2.xpose.msra.mxu0 0.0
        %1755 = vmatprep.subr.mxu0 0.0
        %1756 = vmatpush2.xpose.msra.mxu0 0.0
        %1757 = vmatprep.subr.mxu0 0.0
        %1758 = vmatpush2.xpose.msra.mxu0 0.0
        %1759 = vmatprep.subr.mxu0 0.0
        %1760 = vmatpush2.xpose.msra.mxu0 0.0
        %1761 = vmatprep.subr.mxu0 0.0
        %1762 = vmatpush2.xpose.msra.mxu0 0.0
        %1763 = vmatprep.subr.mxu0 0.0
        %1764 = vmatpush2.xpose.msra.mxu0 0.0
        %1765 = vmatprep.subr.mxu0 0.0
        %1766 = vmatpush2.xpose.msra.mxu0 0.0
        %1767 = vmatprep.subr.mxu0 0.0
        %1768 = vmatpush2.xpose.msra.mxu0 0.0
        %1769 = vmatprep.mubr.f32.mxu0 0.0
        %1770 = vmatmul.mubr.f32.gmra.mxu0 %v1655
        %v1771 = vpop.f32.mrf.mxu0
        %v1772 = vadd.f32 0.0, %v1771
        %v1773 = vpop.f32.mrf.mxu0
        %1774 = vmatprep.mubr.f32.mxu0 0.0
        %1775 = vmatmul.mubr.f32.gmra.mxu0 %v1658
        %v1776 = vpop.f32.mrf.mxu0
        %v1777 = vadd.f32 0.0, %v1776
        %v1778 = vpop.f32.mrf.mxu0
        %1779 = vmatprep.mubr.f32.mxu0 0.0
        %1780 = vmatmul.mubr.f32.gmra.mxu0 %v1661
        %v1781 = vpop.f32.mrf.mxu0
        %v1782 = vadd.f32 0.0, %v1781
        %v1783 = vpop.f32.mrf.mxu0
        %1784 = vmatprep.mubr.f32.mxu0 0.0
        %1785 = vmatmul.mubr.f32.gmra.mxu0 %v1664
        %v1786 = vpop.f32.mrf.mxu0
        %v1787 = vadd.f32 0.0, %v1786
        %v1788 = vpop.f32.mrf.mxu0
        %1789 = vmatprep.mubr.f32.mxu0 0.0
        %1790 = vmatmul.mubr.f32.gmra.mxu0 %v1667
        %v1791 = vpop.f32.mrf.mxu0
        %v1792 = vadd.f32 0.0, %v1791
        %v1793 = vpop.f32.mrf.mxu0
        %1794 = vmatprep.mubr.f32.mxu0 0.0
        %1795 = vmatmul.mubr.f32.gmra.mxu0 %v1670
        %v1796 = vpop.f32.mrf.mxu0
        %v1797 = vadd.f32 0.0, %v1796
        %v1798 = vpop.f32.mrf.mxu0
        %1799 = vmatprep.mubr.f32.mxu0 0.0
        %1800 = vmatmul.mubr.f32.gmra.mxu0 %v1673
        %v1801 = vpop.f32.mrf.mxu0
        %v1802 = vadd.f32 0.0, %v1801
        %v1803 = vpop.f32.mrf.mxu0
        %1804 = vmatprep.mubr.f32.mxu0 0.0
        %1805 = vmatmul.mubr.f32.gmra.mxu0 %v1676
        %v1806 = vpop.f32.mrf.mxu0
        %v1807 = vadd.f32 0.0, %v1806
        %v1808 = vpop.f32.mrf.mxu0
        %1809 = vmatprep.mubr.f32.mxu0 0.0
        %1810 = vmatmul.mubr.f32.gmra.mxu0 %v1679
        %v1811 = vpop.f32.mrf.mxu0
        %v1812 = vadd.f32 0.0, %v1811
        %v1813 = vpop.f32.mrf.mxu0
        %1814 = vmatprep.mubr.f32.mxu0 0.0
        %1815 = vmatmul.mubr.f32.gmra.mxu0 %v1682
        %v1816 = vpop.f32.mrf.mxu0
        %v1817 = vadd.f32 0.0, %v1816
        %v1818 = vpop.f32.mrf.mxu0
        %1819 = vmatprep.mubr.f32.mxu0 0.0
        %1820 = vmatmul.mubr.f32.gmra.mxu0 %v1685
        %v1821 = vpop.f32.mrf.mxu0
        %v1822 = vadd.f32 0.0, %v1821
        %v1823 = vpop.f32.mrf.mxu0
        %1824 = vmatprep.mubr.f32.mxu0 0.0
        %1825 = vmatmul.mubr.f32.gmra.mxu0 %v1688
        %v1826 = vpop.f32.mrf.mxu0
        %v1827 = vadd.f32 0.0, %v1826
        %v1828 = vpop.f32.mrf.mxu0
        %1829 = vmatprep.mubr.f32.mxu0 0.0
        %1830 = vmatmul.mubr.f32.gmra.mxu0 %v1691
        %v1831 = vpop.f32.mrf.mxu0
        %v1832 = vadd.f32 0.0, %v1831
        %v1833 = vpop.f32.mrf.mxu0
        %1834 = vmatprep.mubr.f32.mxu0 0.0
        %1835 = vmatmul.mubr.f32.gmra.mxu0 %v1694
        %v1836 = vpop.f32.mrf.mxu0
        %v1837 = vadd.f32 0.0, %v1836
        %v1838 = vpop.f32.mrf.mxu0
        %1839 = vmatprep.mubr.f32.mxu0 0.0
        %1840 = vmatmul.mubr.f32.gmra.mxu0 %v1697
        %v1841 = vpop.f32.mrf.mxu0
        %v1842 = vadd.f32 0.0, %v1841
        %v1843 = vpop.f32.mrf.mxu0
        %1844 = vmatprep.mubr.f32.mxu0 0.0
        %1845 = vmatmul.mubr.f32.gmra.mxu0 %v1700
        %v1846 = vpop.f32.mrf.mxu0
        %v1847 = vadd.f32 0.0, %v1846
        %v1848 = vpop.f32.mrf.mxu0
        %1849 = vdwg.mxu0
        %v1850 = vmul.f32 %v1772, 0.17677669
        %v1851 = vmul.f32 %v1777, 0.17677669
        %v1852 = vmul.f32 %v1782, 0.17677669
        %v1853 = vmul.f32 %v1787, 0.17677669
        %v1854 = vmul.f32 %v1792, 0.17677669
        %v1855 = vmul.f32 %v1797, 0.17677669
        %v1856 = vmul.f32 %v1802, 0.17677669
        %v1857 = vmul.f32 %v1807, 0.17677669
        %v1858 = vmul.f32 %v1812, 0.17677669
        %v1859 = vmul.f32 %v1817, 0.17677669
        %v1860 = vmul.f32 %v1822, 0.17677669
        %v1861 = vmul.f32 %v1827, 0.17677669
        %v1862 = vmul.f32 %v1832, 0.17677669
        %v1863 = vmul.f32 %v1837, 0.17677669
        %v1864 = vmul.f32 %v1842, 0.17677669
        %v1865 = vmul.f32 %v1847, 0.17677669
        %1866 = vmatprep.subr.mxu0 0.0
        %1867 = vmatpush1.xpose.msra.mxu0 %v1700
        %1868 = vmatprep.subr.mxu0 0.0
        %1869 = vmatpush1.xpose.msra.mxu0 %v1697
        %1870 = vmatprep.subr.mxu0 0.0
        %1871 = vmatpush1.xpose.msra.mxu0 %v1694
        %1872 = vmatprep.subr.mxu0 0.0
        %1873 = vmatpush1.xpose.msra.mxu0 %v1691
        %1874 = vmatprep.subr.mxu0 0.0
        %1875 = vmatpush1.xpose.msra.mxu0 %v1688
        %1876 = vmatprep.subr.mxu0 0.0
        %1877 = vmatpush1.xpose.msra.mxu0 %v1685
        %1878 = vmatprep.subr.mxu0 0.0
        %1879 = vmatpush1.xpose.msra.mxu0 %v1682
        %1880 = vmatprep.subr.mxu0 0.0
        %1881 = vmatpush1.xpose.msra.mxu0 %v1679
        %1882 = vmatprep.subr.mxu0 0.0
        %1883 = vmatpush1.xpose.msra.mxu0 %v1676
        %1884 = vmatprep.subr.mxu0 0.0
        %1885 = vmatpush1.xpose.msra.mxu0 %v1673
        %1886 = vmatprep.subr.mxu0 0.0
        %1887 = vmatpush1.xpose.msra.mxu0 %v1670
        %1888 = vmatprep.subr.mxu0 0.0
        %1889 = vmatpush1.xpose.msra.mxu0 %v1667
        %1890 = vmatprep.subr.mxu0 0.0
        %1891 = vmatpush1.xpose.msra.mxu0 %v1664
        %1892 = vmatprep.subr.mxu0 0.0
        %1893 = vmatpush1.xpose.msra.mxu0 %v1661
        %1894 = vmatprep.subr.mxu0 0.0
        %1895 = vmatpush1.xpose.msra.mxu0 %v1658
        %1896 = vmatprep.subr.mxu0 0.0
        %1897 = vmatpush1.xpose.msra.mxu0 %v1655
        %1898 = vmatprep.subr.mxu0 0.0
        %1899 = vmatpush2.xpose.msra.mxu0 0.0
        %1900 = vmatprep.subr.mxu0 0.0
        %1901 = vmatpush2.xpose.msra.mxu0 0.0
        %1902 = vmatprep.subr.mxu0 0.0
        %1903 = vmatpush2.xpose.msra.mxu0 0.0
        %1904 = vmatprep.subr.mxu0 0.0
        %1905 = vmatpush2.xpose.msra.mxu0 0.0
        %1906 = vmatprep.subr.mxu0 0.0
        %1907 = vmatpush2.xpose.msra.mxu0 0.0
        %1908 = vmatprep.subr.mxu0 0.0
        %1909 = vmatpush2.xpose.msra.mxu0 0.0
        %1910 = vmatprep.subr.mxu0 0.0
        %1911 = vmatpush2.xpose.msra.mxu0 0.0
        %1912 = vmatprep.subr.mxu0 0.0
        %1913 = vmatpush2.xpose.msra.mxu0 0.0
        %1914 = vmatprep.subr.mxu0 0.0
        %1915 = vmatpush2.xpose.msra.mxu0 0.0
        %1916 = vmatprep.subr.mxu0 0.0
        %1917 = vmatpush2.xpose.msra.mxu0 0.0
        %1918 = vmatprep.subr.mxu0 0.0
        %1919 = vmatpush2.xpose.msra.mxu0 0.0
        %1920 = vmatprep.subr.mxu0 0.0
        %1921 = vmatpush2.xpose.msra.mxu0 0.0
        %1922 = vmatprep.subr.mxu0 0.0
        %1923 = vmatpush2.xpose.msra.mxu0 0.0
        %1924 = vmatprep.subr.mxu0 0.0
        %1925 = vmatpush2.xpose.msra.mxu0 0.0
        %1926 = vmatprep.subr.mxu0 0.0
        %1927 = vmatpush2.xpose.msra.mxu0 0.0
        %1928 = vmatprep.subr.mxu0 0.0
        %1929 = vmatpush2.xpose.msra.mxu0 0.0
        %1930 = vmatprep.mubr.f32.mxu0 0.0
        %1931 = vmatmul.mubr.f32.gmra.mxu0 %v1703
        %v1932 = vpop.f32.mrf.mxu0
        %v1933 = vadd.f32 0.0, %v1932
        %v1934 = vpop.f32.mrf.mxu0
        %1935 = vdwg.mxu0
        %v1936 = vmul.f32 %v1933, 0.17677669
        %vm1937 = vcmp.gt.f32.partialorder %v1850, 0.0
        %vm1938 = vcmp.gt.f32.partialorder %v1851, 0.0
        %vm1939 = vcmp.gt.f32.partialorder %v1852, 0.0
        %vm1940 = vcmp.gt.f32.partialorder %v1853, 0.0
        %vm1941 = vcmp.gt.f32.partialorder %v1854, 0.0
        %vm1942 = vcmp.gt.f32.partialorder %v1855, 0.0
        %vm1943 = vcmp.gt.f32.partialorder %v1856, 0.0
        %vm1944 = vcmp.gt.f32.partialorder %v1857, 0.0
        %vm1945 = vcmp.gt.f32.partialorder %v1858, 0.0
        %vm1946 = vcmp.gt.f32.partialorder %v1859, 0.0
        %vm1947 = vcmp.gt.f32.partialorder %v1860, 0.0
        %vm1948 = vcmp.gt.f32.partialorder %v1861, 0.0
        %vm1949 = vcmp.gt.f32.partialorder %v1862, 0.0
        %vm1950 = vcmp.gt.f32.partialorder %v1863, 0.0
        %vm1951 = vcmp.gt.f32.partialorder %v1864, 0.0
        %vm1952 = vcmp.gt.f32.partialorder %v1865, 0.0
        %v1953 = vmul.f32 %v1850, 0.2
        %v1954 = vmul.f32 %v1851, 0.2
        %v1955 = vmul.f32 %v1852, 0.2
        %v1956 = vmul.f32 %v1853, 0.2
        %v1957 = vmul.f32 %v1854, 0.2
        %v1958 = vmul.f32 %v1855, 0.2
        %v1959 = vmul.f32 %v1856, 0.2
        %v1960 = vmul.f32 %v1857, 0.2
        %v1961 = vmul.f32 %v1858, 0.2
        %v1962 = vmul.f32 %v1859, 0.2
        %v1963 = vmul.f32 %v1860, 0.2
        %v1964 = vmul.f32 %v1861, 0.2
        %v1965 = vmul.f32 %v1862, 0.2
        %v1966 = vmul.f32 %v1863, 0.2
        %v1967 = vmul.f32 %v1864, 0.2
        %v1968 = vmul.f32 %v1865, 0.2
        %v1969 = vsel %vm1937, %v1850, %v1953
        %v1970 = vsel %vm1938, %v1851, %v1954
        %v1971 = vsel %vm1939, %v1852, %v1955
        %v1972 = vsel %vm1940, %v1853, %v1956
        %v1973 = vsel %vm1941, %v1854, %v1957
        %v1974 = vsel %vm1942, %v1855, %v1958
        %v1975 = vsel %vm1943, %v1856, %v1959
        %v1976 = vsel %vm1944, %v1857, %v1960
        %v1977 = vsel %vm1945, %v1858, %v1961
        %v1978 = vsel %vm1946, %v1859, %v1962
        %v1979 = vsel %vm1947, %v1860, %v1963
        %v1980 = vsel %vm1948, %v1861, %v1964
        %v1981 = vsel %vm1949, %v1862, %v1965
        %v1982 = vsel %vm1950, %v1863, %v1966
        %v1983 = vsel %vm1951, %v1864, %v1967
        %v1984 = vsel %vm1952, %v1865, %v1968
        %vm1985 = vcmp.gt.f32.partialorder %v1936, 0.0
        %v1986 = vmul.f32 %v1936, 0.2
        %v1987 = vsel %vm1985, %v1936, %v1986
        %v1988 = vlaneseq
        %v1989 = vshrl.u32 %v1988, 7
        %v1990 = vsub.s32 0, %v1989
        %v1991 = vrot.slane %v1987, %v1990
        %v1992 = vsel %vm862, %v1991, -1e+30
        %1993 = vmax.xlane.f32.xlu0 %v1992
        %v1994 = vpop.xlane.xlu0 %1993
        %v1995 = vlaneseq
        %v1996 = vshrl.u32 %v1995, 7
        %v1997 = vsub.s32 1, %v1996
        %v1998 = vrot.slane %v1987, %v1997
        %v1999 = vsel %vm862, %v1998, -1e+30
        %2000 = vmax.xlane.f32.xlu0 %v1999
        %v2001 = vpop.xlane.xlu0 %2000
        %vm2002 = vcmask 7168
        %v2003 = vsel %vm2002, %v1994, %v2001
        %v2004 = vld [vmem:[#allocation4] sm:$0xff]
        %v2005 = vmax.f32 %v2004, %v2003
        %vm2006 = vcmask 15360
        %2007 = vst.msk [vmem:[#allocation4] sm:$0xff] %vm2006, %v2005
        %v2008 = vsub.f32 %v2004, %v2005
        %v2009 = vmul.f32 %v2008, 1.442695
        %v2010 = vpow.pop %v2009
        %v2012 = vsel %vm867, %v727, 0
        %v2015 = vsel %vm867, %v728, 0
        %v2018 = vsel %vm867, %v729, 0
        %v2021 = vsel %vm867, %v730, 0
        %v2024 = vsel %vm867, %v731, 0
        %v2027 = vsel %vm867, %v732, 0
        %v2030 = vsel %vm867, %v733, 0
        %v2033 = vsel %vm867, %v734, 0
        %v2036 = vsel %vm867, %v735, 0
        %v2039 = vsel %vm867, %v736, 0
        %v2042 = vsel %vm867, %v737, 0
        %v2045 = vsel %vm867, %v738, 0
        %v2048 = vsel %vm867, %v739, 0
        %v2051 = vsel %vm867, %v740, 0
        %v2054 = vsel %vm867, %v741, 0
        %v2057 = vsel %vm867, %v742, 0
        %2059 = vmatprep.subr.mxu0 0.0
        %2060 = vmatpush1.msra.mxu0 0.0
        %2061 = vmatprep.subr.mxu0 0.0
        %2062 = vmatpush1.msra.mxu0 0.0
        %2063 = vmatprep.subr.mxu0 0.0
        %2064 = vmatpush1.msra.mxu0 0.0
        %2065 = vmatprep.subr.mxu0 0.0
        %2066 = vmatpush1.msra.mxu0 0.0
        %2067 = vmatprep.subr.mxu0 0.0
        %2068 = vmatpush1.msra.mxu0 0.0
        %2069 = vmatprep.subr.mxu0 0.0
        %2070 = vmatpush1.msra.mxu0 0.0
        %2071 = vmatprep.subr.mxu0 0.0
        %2072 = vmatpush1.msra.mxu0 0.0
        %2073 = vmatprep.subr.mxu0 0.0
        %2074 = vmatpush1.msra.mxu0 0.0
        %2075 = vmatprep.subr.mxu0 0.0
        %2076 = vmatpush1.msra.mxu0 0.0
        %2077 = vmatprep.subr.mxu0 0.0
        %2078 = vmatpush1.msra.mxu0 0.0
        %2079 = vmatprep.subr.mxu0 0.0
        %2080 = vmatpush1.msra.mxu0 0.0
        %2081 = vmatprep.subr.mxu0 0.0
        %2082 = vmatpush1.msra.mxu0 0.0
        %2083 = vmatprep.subr.mxu0 0.0
        %2084 = vmatpush1.msra.mxu0 0.0
        %2085 = vmatprep.subr.mxu0 0.0
        %2086 = vmatpush1.msra.mxu0 0.0
        %2087 = vmatprep.subr.mxu0 0.0
        %2088 = vmatpush1.msra.mxu0 0.0
        %2089 = vmatprep.subr.mxu0 0.0
        %2090 = vmatpush1.msra.mxu0 %v2005
        %2091 = vmatprep.subr.mxu0 0.0
        %2092 = vmatpush2.msra.mxu0 0.0
        %2093 = vmatprep.subr.mxu0 0.0
        %2094 = vmatpush2.msra.mxu0 0.0
        %2095 = vmatprep.subr.mxu0 0.0
        %2096 = vmatpush2.msra.mxu0 0.0
        %2097 = vmatprep.subr.mxu0 0.0
        %2098 = vmatpush2.msra.mxu0 0.0
        %2099 = vmatprep.subr.mxu0 0.0
        %2100 = vmatpush2.msra.mxu0 0.0
        %2101 = vmatprep.subr.mxu0 0.0
        %2102 = vmatpush2.msra.mxu0 0.0
        %2103 = vmatprep.subr.mxu0 0.0
        %2104 = vmatpush2.msra.mxu0 0.0
        %2105 = vmatprep.subr.mxu0 0.0
        %2106 = vmatpush2.msra.mxu0 0.0
        %2107 = vmatprep.subr.mxu0 0.0
        %2108 = vmatpush2.msra.mxu0 0.0
        %2109 = vmatprep.subr.mxu0 0.0
        %2110 = vmatpush2.msra.mxu0 0.0
        %2111 = vmatprep.subr.mxu0 0.0
        %2112 = vmatpush2.msra.mxu0 0.0
        %2113 = vmatprep.subr.mxu0 0.0
        %2114 = vmatpush2.msra.mxu0 0.0
        %2115 = vmatprep.subr.mxu0 0.0
        %2116 = vmatpush2.msra.mxu0 0.0
        %2117 = vmatprep.subr.mxu0 0.0
        %2118 = vmatpush2.msra.mxu0 0.0
        %2119 = vmatprep.subr.mxu0 0.0
        %2120 = vmatpush2.msra.mxu0 0.0
        %2121 = vmatprep.subr.mxu0 0.0
        %2122 = vmatpush2.msra.mxu0 0.0
        %2123 = vmatprep.mubr.f32.mxu0 0.0
        %2124 = vmatmul.mubr.f32.gmra.mxu0 %v2012
        %v2125 = vpop.f32.mrf.mxu0
        %v2126 = vadd.f32 0.0, %v2125
        %v2127 = vpop.f32.mrf.mxu0
        %2128 = vmatprep.mubr.f32.mxu0 0.0
        %2129 = vmatmul.mubr.f32.gmra.mxu0 %v2015
        %v2130 = vpop.f32.mrf.mxu0
        %v2131 = vadd.f32 0.0, %v2130
        %v2132 = vpop.f32.mrf.mxu0
        %2133 = vmatprep.mubr.f32.mxu0 0.0
        %2134 = vmatmul.mubr.f32.gmra.mxu0 %v2018
        %v2135 = vpop.f32.mrf.mxu0
        %v2136 = vadd.f32 0.0, %v2135
        %v2137 = vpop.f32.mrf.mxu0
        %2138 = vmatprep.mubr.f32.mxu0 0.0
        %2139 = vmatmul.mubr.f32.gmra.mxu0 %v2021
        %v2140 = vpop.f32.mrf.mxu0
        %v2141 = vadd.f32 0.0, %v2140
        %v2142 = vpop.f32.mrf.mxu0
        %2143 = vmatprep.mubr.f32.mxu0 0.0
        %2144 = vmatmul.mubr.f32.gmra.mxu0 %v2024
        %v2145 = vpop.f32.mrf.mxu0
        %v2146 = vadd.f32 0.0, %v2145
        %v2147 = vpop.f32.mrf.mxu0
        %2148 = vmatprep.mubr.f32.mxu0 0.0
        %2149 = vmatmul.mubr.f32.gmra.mxu0 %v2027
        %v2150 = vpop.f32.mrf.mxu0
        %v2151 = vadd.f32 0.0, %v2150
        %v2152 = vpop.f32.mrf.mxu0
        %2153 = vmatprep.mubr.f32.mxu0 0.0
        %2154 = vmatmul.mubr.f32.gmra.mxu0 %v2030
        %v2155 = vpop.f32.mrf.mxu0
        %v2156 = vadd.f32 0.0, %v2155
        %v2157 = vpop.f32.mrf.mxu0
        %2158 = vmatprep.mubr.f32.mxu0 0.0
        %2159 = vmatmul.mubr.f32.gmra.mxu0 %v2033
        %v2160 = vpop.f32.mrf.mxu0
        %v2161 = vadd.f32 0.0, %v2160
        %v2162 = vpop.f32.mrf.mxu0
        %2163 = vmatprep.mubr.f32.mxu0 0.0
        %2164 = vmatmul.mubr.f32.gmra.mxu0 %v2036
        %v2165 = vpop.f32.mrf.mxu0
        %v2166 = vadd.f32 0.0, %v2165
        %v2167 = vpop.f32.mrf.mxu0
        %2168 = vmatprep.mubr.f32.mxu0 0.0
        %2169 = vmatmul.mubr.f32.gmra.mxu0 %v2039
        %v2170 = vpop.f32.mrf.mxu0
        %v2171 = vadd.f32 0.0, %v2170
        %v2172 = vpop.f32.mrf.mxu0
        %2173 = vmatprep.mubr.f32.mxu0 0.0
        %2174 = vmatmul.mubr.f32.gmra.mxu0 %v2042
        %v2175 = vpop.f32.mrf.mxu0
        %v2176 = vadd.f32 0.0, %v2175
        %v2177 = vpop.f32.mrf.mxu0
        %2178 = vmatprep.mubr.f32.mxu0 0.0
        %2179 = vmatmul.mubr.f32.gmra.mxu0 %v2045
        %v2180 = vpop.f32.mrf.mxu0
        %v2181 = vadd.f32 0.0, %v2180
        %v2182 = vpop.f32.mrf.mxu0
        %2183 = vmatprep.mubr.f32.mxu0 0.0
        %2184 = vmatmul.mubr.f32.gmra.mxu0 %v2048
        %v2185 = vpop.f32.mrf.mxu0
        %v2186 = vadd.f32 0.0, %v2185
        %v2187 = vpop.f32.mrf.mxu0
        %2188 = vmatprep.mubr.f32.mxu0 0.0
        %2189 = vmatmul.mubr.f32.gmra.mxu0 %v2051
        %v2190 = vpop.f32.mrf.mxu0
        %v2191 = vadd.f32 0.0, %v2190
        %v2192 = vpop.f32.mrf.mxu0
        %2193 = vmatprep.mubr.f32.mxu0 0.0
        %2194 = vmatmul.mubr.f32.gmra.mxu0 %v2054
        %v2195 = vpop.f32.mrf.mxu0
        %v2196 = vadd.f32 0.0, %v2195
        %v2197 = vpop.f32.mrf.mxu0
        %2198 = vmatprep.mubr.f32.mxu0 0.0
        %2199 = vmatmul.mubr.f32.gmra.mxu0 %v2057
        %v2200 = vpop.f32.mrf.mxu0
        %v2201 = vadd.f32 0.0, %v2200
        %v2202 = vpop.f32.mrf.mxu0
        %2203 = vdwg.mxu0
        %v2204 = vsub.f32 %v1969, %v2126
        %v2205 = vsub.f32 %v1970, %v2131
        %v2206 = vsub.f32 %v1971, %v2136
        %v2207 = vsub.f32 %v1972, %v2141
        %v2208 = vsub.f32 %v1973, %v2146
        %v2209 = vsub.f32 %v1974, %v2151
        %v2210 = vsub.f32 %v1975, %v2156
        %v2211 = vsub.f32 %v1976, %v2161
        %v2212 = vsub.f32 %v1977, %v2166
        %v2213 = vsub.f32 %v1978, %v2171
        %v2214 = vsub.f32 %v1979, %v2176
        %v2215 = vsub.f32 %v1980, %v2181
        %v2216 = vsub.f32 %v1981, %v2186
        %v2217 = vsub.f32 %v1982, %v2191
        %v2218 = vsub.f32 %v1983, %v2196
        %v2219 = vsub.f32 %v1984, %v2201
        %v2220 = vmin.f32 %v2204, 0.0
        %v2221 = vmin.f32 %v2205, 0.0
        %v2222 = vmin.f32 %v2206, 0.0
        %v2223 = vmin.f32 %v2207, 0.0
        %v2224 = vmin.f32 %v2208, 0.0
        %v2225 = vmin.f32 %v2209, 0.0
        %v2226 = vmin.f32 %v2210, 0.0
        %v2227 = vmin.f32 %v2211, 0.0
        %v2228 = vmin.f32 %v2212, 0.0
        %v2229 = vmin.f32 %v2213, 0.0
        %v2230 = vmin.f32 %v2214, 0.0
        %v2231 = vmin.f32 %v2215, 0.0
        %v2232 = vmin.f32 %v2216, 0.0
        %v2233 = vmin.f32 %v2217, 0.0
        %v2234 = vmin.f32 %v2218, 0.0
        %v2235 = vmin.f32 %v2219, 0.0
        %v2236 = vmul.f32 %v2220, 1.442695
        %v2237 = vpow.pop %v2236
        %v2238 = vmul.f32 %v2221, 1.442695
        %v2239 = vpow.pop %v2238
        %v2240 = vmul.f32 %v2222, 1.442695
        %v2241 = vpow.pop %v2240
        %v2242 = vmul.f32 %v2223, 1.442695
        %v2243 = vpow.pop %v2242
        %v2244 = vmul.f32 %v2224, 1.442695
        %v2245 = vpow.pop %v2244
        %v2246 = vmul.f32 %v2225, 1.442695
        %v2247 = vpow.pop %v2246
        %v2248 = vmul.f32 %v2226, 1.442695
        %v2249 = vpow.pop %v2248
        %v2250 = vmul.f32 %v2227, 1.442695
        %v2251 = vpow.pop %v2250
        %v2252 = vmul.f32 %v2228, 1.442695
        %v2253 = vpow.pop %v2252
        %v2254 = vmul.f32 %v2229, 1.442695
        %v2255 = vpow.pop %v2254
        %v2256 = vmul.f32 %v2230, 1.442695
        %v2257 = vpow.pop %v2256
        %v2258 = vmul.f32 %v2231, 1.442695
        %v2259 = vpow.pop %v2258
        %v2260 = vmul.f32 %v2232, 1.442695
        %v2261 = vpow.pop %v2260
        %v2262 = vmul.f32 %v2233, 1.442695
        %v2263 = vpow.pop %v2262
        %v2264 = vmul.f32 %v2234, 1.442695
        %v2265 = vpow.pop %v2264
        %v2266 = vmul.f32 %v2235, 1.442695
        %v2267 = vpow.pop %v2266
        %v2269 = vsel %vm2006, %v2237, 0
        %v2272 = vsel %vm2006, %v2239, 0
        %v2275 = vsel %vm2006, %v2241, 0
        %v2278 = vsel %vm2006, %v2243, 0
        %v2281 = vsel %vm2006, %v2245, 0
        %v2284 = vsel %vm2006, %v2247, 0
        %v2287 = vsel %vm2006, %v2249, 0
        %v2290 = vsel %vm2006, %v2251, 0
        %v2293 = vsel %vm2006, %v2253, 0
        %v2296 = vsel %vm2006, %v2255, 0
        %v2299 = vsel %vm2006, %v2257, 0
        %v2302 = vsel %vm2006, %v2259, 0
        %v2305 = vsel %vm2006, %v2261, 0
        %v2308 = vsel %vm2006, %v2263, 0
        %v2311 = vsel %vm2006, %v2265, 0
        %v2314 = vsel %vm2006, %v2267, 0
        %vm2316 = vcmask 1041408
        %v2317 = vsel %vm2316, %v625, 0
        %2319 = vmatprep.subr.mxu0 0.0
        %2320 = vmatpush1.msra.mxu0 0.0
        %2321 = vmatprep.subr.mxu0 0.0
        %2322 = vmatpush1.msra.mxu0 0.0
        %2323 = vmatprep.subr.mxu0 0.0
        %2324 = vmatpush1.msra.mxu0 0.0
        %2325 = vmatprep.subr.mxu0 0.0
        %2326 = vmatpush1.msra.mxu0 0.0
        %2327 = vmatprep.subr.mxu0 0.0
        %2328 = vmatpush1.msra.mxu0 0.0
        %2329 = vmatprep.subr.mxu0 0.0
        %2330 = vmatpush1.msra.mxu0 0.0
        %2331 = vmatprep.subr.mxu0 0.0
        %2332 = vmatpush1.msra.mxu0 0.0
        %2333 = vmatprep.subr.mxu0 0.0
        %2334 = vmatpush1.msra.mxu0 0.0
        %2335 = vmatprep.subr.mxu0 0.0
        %2336 = vmatpush1.msra.mxu0 0.0
        %2337 = vmatprep.subr.mxu0 0.0
        %2338 = vmatpush1.msra.mxu0 0.0
        %2339 = vmatprep.subr.mxu0 0.0
        %2340 = vmatpush1.msra.mxu0 0.0
        %2341 = vmatprep.subr.mxu0 0.0
        %2342 = vmatpush1.msra.mxu0 0.0
        %2343 = vmatprep.subr.mxu0 0.0
        %2344 = vmatpush1.msra.mxu0 0.0
        %2345 = vmatprep.subr.mxu0 0.0
        %2346 = vmatpush1.msra.mxu0 0.0
        %2347 = vmatprep.subr.mxu0 0.0
        %2348 = vmatpush1.msra.mxu0 0.0
        %2349 = vmatprep.subr.mxu0 0.0
        %2350 = vmatpush1.msra.mxu0 %v2317
        %2351 = vmatprep.subr.mxu0 0.0
        %2352 = vmatpush2.msra.mxu0 0.0
        %2353 = vmatprep.subr.mxu0 0.0
        %2354 = vmatpush2.msra.mxu0 0.0
        %2355 = vmatprep.subr.mxu0 0.0
        %2356 = vmatpush2.msra.mxu0 0.0
        %2357 = vmatprep.subr.mxu0 0.0
        %2358 = vmatpush2.msra.mxu0 0.0
        %2359 = vmatprep.subr.mxu0 0.0
        %2360 = vmatpush2.msra.mxu0 0.0
        %2361 = vmatprep.subr.mxu0 0.0
        %2362 = vmatpush2.msra.mxu0 0.0
        %2363 = vmatprep.subr.mxu0 0.0
        %2364 = vmatpush2.msra.mxu0 0.0
        %2365 = vmatprep.subr.mxu0 0.0
        %2366 = vmatpush2.msra.mxu0 0.0
        %2367 = vmatprep.subr.mxu0 0.0
        %2368 = vmatpush2.msra.mxu0 0.0
        %2369 = vmatprep.subr.mxu0 0.0
        %2370 = vmatpush2.msra.mxu0 0.0
        %2371 = vmatprep.subr.mxu0 0.0
        %2372 = vmatpush2.msra.mxu0 0.0
        %2373 = vmatprep.subr.mxu0 0.0
        %2374 = vmatpush2.msra.mxu0 0.0
        %2375 = vmatprep.subr.mxu0 0.0
        %2376 = vmatpush2.msra.mxu0 0.0
        %2377 = vmatprep.subr.mxu0 0.0
        %2378 = vmatpush2.msra.mxu0 0.0
        %2379 = vmatprep.subr.mxu0 0.0
        %2380 = vmatpush2.msra.mxu0 0.0
        %2381 = vmatprep.subr.mxu0 0.0
        %2382 = vmatpush2.msra.mxu0 0.0
        %2383 = vmatprep.mubr.f32.mxu0 0.0
        %2384 = vmatmul.mubr.f32.gmra.mxu0 %v2269
        %v2385 = vpop.f32.mrf.mxu0
        %v2386 = vadd.f32 0.0, %v2385
        %v2387 = vpop.f32.mrf.mxu0
        %2388 = vmatprep.mubr.f32.mxu0 0.0
        %2389 = vmatmul.mubr.f32.gmra.mxu0 %v2272
        %v2390 = vpop.f32.mrf.mxu0
        %v2391 = vadd.f32 0.0, %v2390
        %v2392 = vpop.f32.mrf.mxu0
        %2393 = vmatprep.mubr.f32.mxu0 0.0
        %2394 = vmatmul.mubr.f32.gmra.mxu0 %v2275
        %v2395 = vpop.f32.mrf.mxu0
        %v2396 = vadd.f32 0.0, %v2395
        %v2397 = vpop.f32.mrf.mxu0
        %2398 = vmatprep.mubr.f32.mxu0 0.0
        %2399 = vmatmul.mubr.f32.gmra.mxu0 %v2278
        %v2400 = vpop.f32.mrf.mxu0
        %v2401 = vadd.f32 0.0, %v2400
        %v2402 = vpop.f32.mrf.mxu0
        %2403 = vmatprep.mubr.f32.mxu0 0.0
        %2404 = vmatmul.mubr.f32.gmra.mxu0 %v2281
        %v2405 = vpop.f32.mrf.mxu0
        %v2406 = vadd.f32 0.0, %v2405
        %v2407 = vpop.f32.mrf.mxu0
        %2408 = vmatprep.mubr.f32.mxu0 0.0
        %2409 = vmatmul.mubr.f32.gmra.mxu0 %v2284
        %v2410 = vpop.f32.mrf.mxu0
        %v2411 = vadd.f32 0.0, %v2410
        %v2412 = vpop.f32.mrf.mxu0
        %2413 = vmatprep.mubr.f32.mxu0 0.0
        %2414 = vmatmul.mubr.f32.gmra.mxu0 %v2287
        %v2415 = vpop.f32.mrf.mxu0
        %v2416 = vadd.f32 0.0, %v2415
        %v2417 = vpop.f32.mrf.mxu0
        %2418 = vmatprep.mubr.f32.mxu0 0.0
        %2419 = vmatmul.mubr.f32.gmra.mxu0 %v2290
        %v2420 = vpop.f32.mrf.mxu0
        %v2421 = vadd.f32 0.0, %v2420
        %v2422 = vpop.f32.mrf.mxu0
        %2423 = vmatprep.mubr.f32.mxu0 0.0
        %2424 = vmatmul.mubr.f32.gmra.mxu0 %v2293
        %v2425 = vpop.f32.mrf.mxu0
        %v2426 = vadd.f32 0.0, %v2425
        %v2427 = vpop.f32.mrf.mxu0
        %2428 = vmatprep.mubr.f32.mxu0 0.0
        %2429 = vmatmul.mubr.f32.gmra.mxu0 %v2296
        %v2430 = vpop.f32.mrf.mxu0
        %v2431 = vadd.f32 0.0, %v2430
        %v2432 = vpop.f32.mrf.mxu0
        %2433 = vmatprep.mubr.f32.mxu0 0.0
        %2434 = vmatmul.mubr.f32.gmra.mxu0 %v2299
        %v2435 = vpop.f32.mrf.mxu0
        %v2436 = vadd.f32 0.0, %v2435
        %v2437 = vpop.f32.mrf.mxu0
        %2438 = vmatprep.mubr.f32.mxu0 0.0
        %2439 = vmatmul.mubr.f32.gmra.mxu0 %v2302
        %v2440 = vpop.f32.mrf.mxu0
        %v2441 = vadd.f32 0.0, %v2440
        %v2442 = vpop.f32.mrf.mxu0
        %2443 = vmatprep.mubr.f32.mxu0 0.0
        %2444 = vmatmul.mubr.f32.gmra.mxu0 %v2305
        %v2445 = vpop.f32.mrf.mxu0
        %v2446 = vadd.f32 0.0, %v2445
        %v2447 = vpop.f32.mrf.mxu0
        %2448 = vmatprep.mubr.f32.mxu0 0.0
        %2449 = vmatmul.mubr.f32.gmra.mxu0 %v2308
        %v2450 = vpop.f32.mrf.mxu0
        %v2451 = vadd.f32 0.0, %v2450
        %v2452 = vpop.f32.mrf.mxu0
        %2453 = vmatprep.mubr.f32.mxu0 0.0
        %2454 = vmatmul.mubr.f32.gmra.mxu0 %v2311
        %v2455 = vpop.f32.mrf.mxu0
        %v2456 = vadd.f32 0.0, %v2455
        %v2457 = vpop.f32.mrf.mxu0
        %2458 = vmatprep.mubr.f32.mxu0 0.0
        %2459 = vmatmul.mubr.f32.gmra.mxu0 %v2314
        %v2460 = vpop.f32.mrf.mxu0
        %v2461 = vadd.f32 0.0, %v2460
        %v2462 = vpop.f32.mrf.mxu0
        %2463 = vdwg.mxu0
        %2480 = vrot.lane.b32.xlu0 %v1621, 64
        %v2481 = vpop.permute.xlu0 %2480
        %2482 = vrot.lane.b32.xlu0 %v1622, 64
        %v2483 = vpop.permute.xlu0 %2482
        %2484 = vrot.lane.b32.xlu0 %v1623, 64
        %v2485 = vpop.permute.xlu0 %2484
        %2486 = vrot.lane.b32.xlu0 %v1624, 64
        %v2487 = vpop.permute.xlu0 %2486
        %2488 = vrot.lane.b32.xlu0 %v1625, 64
        %v2489 = vpop.permute.xlu0 %2488
        %2490 = vrot.lane.b32.xlu0 %v1626, 64
        %v2491 = vpop.permute.xlu0 %2490
        %2492 = vrot.lane.b32.xlu0 %v1627, 64
        %v2493 = vpop.permute.xlu0 %2492
        %2494 = vrot.lane.b32.xlu0 %v1628, 64
        %v2495 = vpop.permute.xlu0 %2494
        %2496 = vrot.lane.b32.xlu0 %v1629, 64
        %v2497 = vpop.permute.xlu0 %2496
        %2498 = vrot.lane.b32.xlu0 %v1630, 64
        %v2499 = vpop.permute.xlu0 %2498
        %2500 = vrot.lane.b32.xlu0 %v1631, 64
        %v2501 = vpop.permute.xlu0 %2500
        %2502 = vrot.lane.b32.xlu0 %v1632, 64
        %v2503 = vpop.permute.xlu0 %2502
        %2504 = vrot.lane.b32.xlu0 %v1633, 64
        %v2505 = vpop.permute.xlu0 %2504
        %2506 = vrot.lane.b32.xlu0 %v1634, 64
        %v2507 = vpop.permute.xlu0 %2506
        %2508 = vrot.lane.b32.xlu0 %v1635, 64
        %v2509 = vpop.permute.xlu0 %2508
        %2510 = vrot.lane.b32.xlu0 %v1636, 64
        %v2511 = vpop.permute.xlu0 %2510
        %v2528 = vmul.f32 %v2386, %v2481
        %v2529 = vmul.f32 %v2391, %v2483
        %v2530 = vmul.f32 %v2396, %v2485
        %v2531 = vmul.f32 %v2401, %v2487
        %v2532 = vmul.f32 %v2406, %v2489
        %v2533 = vmul.f32 %v2411, %v2491
        %v2534 = vmul.f32 %v2416, %v2493
        %v2535 = vmul.f32 %v2421, %v2495
        %v2536 = vmul.f32 %v2426, %v2497
        %v2537 = vmul.f32 %v2431, %v2499
        %v2538 = vmul.f32 %v2436, %v2501
        %v2539 = vmul.f32 %v2441, %v2503
        %v2540 = vmul.f32 %v2446, %v2505
        %v2541 = vmul.f32 %v2451, %v2507
        %v2542 = vmul.f32 %v2456, %v2509
        %v2543 = vmul.f32 %v2461, %v2511
        %v2544 = vpack.c.bf16 %v2529, %v2528
        %v2545 = vpack.c.bf16 %v2531, %v2530
        %v2546 = vpack.c.bf16 %v2533, %v2532
        %v2547 = vpack.c.bf16 %v2535, %v2534
        %v2548 = vpack.c.bf16 %v2537, %v2536
        %v2549 = vpack.c.bf16 %v2539, %v2538
        %v2550 = vpack.c.bf16 %v2541, %v2540
        %v2551 = vpack.c.bf16 %v2543, %v2542
        %v2553 = vsel %vm2006, %v2010, 0
        %2555 = vmatprep.subr.mxu0 0.0
        %2556 = vmatpush1.msra.mxu0 0.0
        %2557 = vmatprep.subr.mxu0 0.0
        %2558 = vmatpush1.msra.mxu0 0.0
        %2559 = vmatprep.subr.mxu0 0.0
        %2560 = vmatpush1.msra.mxu0 0.0
        %2561 = vmatprep.subr.mxu0 0.0
        %2562 = vmatpush1.msra.mxu0 0.0
        %2563 = vmatprep.subr.mxu0 0.0
        %2564 = vmatpush1.msra.mxu0 0.0
        %2565 = vmatprep.subr.mxu0 0.0
        %2566 = vmatpush1.msra.mxu0 0.0
        %2567 = vmatprep.subr.mxu0 0.0
        %2568 = vmatpush1.msra.mxu0 0.0
        %2569 = vmatprep.subr.mxu0 0.0
        %2570 = vmatpush1.msra.mxu0 0.0
        %2571 = vmatprep.subr.mxu0 0.0
        %2572 = vmatpush1.msra.mxu0 0.0
        %2573 = vmatprep.subr.mxu0 0.0
        %2574 = vmatpush1.msra.mxu0 0.0
        %2575 = vmatprep.subr.mxu0 0.0
        %2576 = vmatpush1.msra.mxu0 0.0
        %2577 = vmatprep.subr.mxu0 0.0
        %2578 = vmatpush1.msra.mxu0 0.0
        %2579 = vmatprep.subr.mxu0 0.0
        %2580 = vmatpush1.msra.mxu0 0.0
        %2581 = vmatprep.subr.mxu0 0.0
        %2582 = vmatpush1.msra.mxu0 0.0
        %2583 = vmatprep.subr.mxu0 0.0
        %2584 = vmatpush1.msra.mxu0 0.0
        %2585 = vmatprep.subr.mxu0 0.0
        %2586 = vmatpush1.msra.mxu0 %v2317
        %2587 = vmatprep.subr.mxu0 0.0
        %2588 = vmatpush2.msra.mxu0 0.0
        %2589 = vmatprep.subr.mxu0 0.0
        %2590 = vmatpush2.msra.mxu0 0.0
        %2591 = vmatprep.subr.mxu0 0.0
        %2592 = vmatpush2.msra.mxu0 0.0
        %2593 = vmatprep.subr.mxu0 0.0
        %2594 = vmatpush2.msra.mxu0 0.0
        %2595 = vmatprep.subr.mxu0 0.0
        %2596 = vmatpush2.msra.mxu0 0.0
        %2597 = vmatprep.subr.mxu0 0.0
        %2598 = vmatpush2.msra.mxu0 0.0
        %2599 = vmatprep.subr.mxu0 0.0
        %2600 = vmatpush2.msra.mxu0 0.0
        %2601 = vmatprep.subr.mxu0 0.0
        %2602 = vmatpush2.msra.mxu0 0.0
        %2603 = vmatprep.subr.mxu0 0.0
        %2604 = vmatpush2.msra.mxu0 0.0
        %2605 = vmatprep.subr.mxu0 0.0
        %2606 = vmatpush2.msra.mxu0 0.0
        %2607 = vmatprep.subr.mxu0 0.0
        %2608 = vmatpush2.msra.mxu0 0.0
        %2609 = vmatprep.subr.mxu0 0.0
        %2610 = vmatpush2.msra.mxu0 0.0
        %2611 = vmatprep.subr.mxu0 0.0
        %2612 = vmatpush2.msra.mxu0 0.0
        %2613 = vmatprep.subr.mxu0 0.0
        %2614 = vmatpush2.msra.mxu0 0.0
        %2615 = vmatprep.subr.mxu0 0.0
        %2616 = vmatpush2.msra.mxu0 0.0
        %2617 = vmatprep.subr.mxu0 0.0
        %2618 = vmatpush2.msra.mxu0 0.0
        %2619 = vmatprep.mubr.f32.mxu0 0.0
        %2620 = vmatmul.mubr.f32.gmra.mxu0 %v2553
        %v2621 = vpop.f32.mrf.mxu0
        %v2622 = vadd.f32 0.0, %v2621
        %v2623 = vpop.f32.mrf.mxu0
        %2624 = vdwg.mxu0
        %v2625 = vld [vmem:[#allocation2] sm:$0xff]
        %v2626 = vmul.f32 %v2625, %v2622
        %2627 = vmatprep.subr.bf16.mxu0 0
        %2628 = vmatpush1.bf16.msra.mxu0 %v2551
        %2629 = vmatprep.subr.bf16.mxu0 0
        %2630 = vmatpush1.bf16.msra.mxu0 %v2550
        %2631 = vmatprep.subr.bf16.mxu0 0
        %2632 = vmatpush1.bf16.msra.mxu0 %v2549
        %2633 = vmatprep.subr.bf16.mxu0 0
        %2634 = vmatpush1.bf16.msra.mxu0 %v2548
        %2635 = vmatprep.subr.bf16.mxu0 0
        %2636 = vmatpush1.bf16.msra.mxu0 %v2547
        %2637 = vmatprep.subr.bf16.mxu0 0
        %2638 = vmatpush1.bf16.msra.mxu0 %v2546
        %2639 = vmatprep.subr.bf16.mxu0 0
        %2640 = vmatpush1.bf16.msra.mxu0 %v2545
        %2641 = vmatprep.subr.bf16.mxu0 0
        %2642 = vmatpush1.bf16.msra.mxu0 %v2544
        %2643 = vmatprep.subr.bf16.mxu0 0
        %2644 = vmatpush2.bf16.msra.mxu0 0
        %2645 = vmatprep.subr.bf16.mxu0 0
        %2646 = vmatpush2.bf16.msra.mxu0 0
        %2647 = vmatprep.subr.bf16.mxu0 0
        %2648 = vmatpush2.bf16.msra.mxu0 0
        %2649 = vmatprep.subr.bf16.mxu0 0
        %2650 = vmatpush2.bf16.msra.mxu0 0
        %2651 = vmatprep.subr.bf16.mxu0 0
        %2652 = vmatpush2.bf16.msra.mxu0 0
        %2653 = vmatprep.subr.bf16.mxu0 0
        %2654 = vmatpush2.bf16.msra.mxu0 0
        %2655 = vmatprep.subr.bf16.mxu0 0
        %2656 = vmatpush2.bf16.msra.mxu0 0
        %2657 = vmatprep.subr.bf16.mxu0 0
        %2658 = vmatpush2.bf16.msra.mxu0 0
        %2659 = vmatprep.mubr.bf16.mxu0 0
        %2660 = vmatmul.mubr.bf16.gmra.mxu0 %v865
        %v2661 = vpop.f32.mrf.mxu0
        %v2662 = vadd.f32 0.0, %v2661
        %v2663 = vpop.f32.mrf.mxu0
        %v2664 = vpop.f32.mrf.mxu0
        %v2665 = vpop.f32.mrf.mxu0
        %2666 = vdwg.mxu0
        %v2667 = vadd.f32 %v2626, %v2662
        %2668 = vst.msk [vmem:[#allocation2] sm:$0xff] %vm1653, %v2667
        %v2669 = vld [vmem:[#allocation3] sm:$0xff]
        %v2670 = vmul.f32 %v2669, %v2010
        %v2671 = vpack.c.bf16 %v2239, %v2237
        %v2672 = vpack.c.bf16 %v2243, %v2241
        %v2673 = vpack.c.bf16 %v2247, %v2245
        %v2674 = vpack.c.bf16 %v2251, %v2249
        %v2675 = vpack.c.bf16 %v2255, %v2253
        %v2676 = vpack.c.bf16 %v2259, %v2257
        %v2677 = vpack.c.bf16 %v2263, %v2261
        %v2678 = vpack.c.bf16 %v2267, %v2265
        %2679 = vmatprep.subr.bf16.mxu0 0
        %2680 = vmatpush1.bf16.msra.mxu0 %v2678
        %2681 = vmatprep.subr.bf16.mxu0 0
        %2682 = vmatpush1.bf16.msra.mxu0 %v2677
        %2683 = vmatprep.subr.bf16.mxu0 0
        %2684 = vmatpush1.bf16.msra.mxu0 %v2676
        %2685 = vmatprep.subr.bf16.mxu0 0
        %2686 = vmatpush1.bf16.msra.mxu0 %v2675
        %2687 = vmatprep.subr.bf16.mxu0 0
        %2688 = vmatpush1.bf16.msra.mxu0 %v2674
        %2689 = vmatprep.subr.bf16.mxu0 0
        %2690 = vmatpush1.bf16.msra.mxu0 %v2673
        %2691 = vmatprep.subr.bf16.mxu0 0
        %2692 = vmatpush1.bf16.msra.mxu0 %v2672
        %2693 = vmatprep.subr.bf16.mxu0 0
        %2694 = vmatpush1.bf16.msra.mxu0 %v2671
        %2695 = vmatprep.subr.bf16.mxu0 0
        %2696 = vmatpush2.bf16.msra.mxu0 0
        %2697 = vmatprep.subr.bf16.mxu0 0
        %2698 = vmatpush2.bf16.msra.mxu0 0
        %2699 = vmatprep.subr.bf16.mxu0 0
        %2700 = vmatpush2.bf16.msra.mxu0 0
        %2701 = vmatprep.subr.bf16.mxu0 0
        %2702 = vmatpush2.bf16.msra.mxu0 0
        %2703 = vmatprep.subr.bf16.mxu0 0
        %2704 = vmatpush2.bf16.msra.mxu0 0
        %2705 = vmatprep.subr.bf16.mxu0 0
        %2706 = vmatpush2.bf16.msra.mxu0 0
        %2707 = vmatprep.subr.bf16.mxu0 0
        %2708 = vmatpush2.bf16.msra.mxu0 0
        %2709 = vmatprep.subr.bf16.mxu0 0
        %2710 = vmatpush2.bf16.msra.mxu0 0
        %2711 = vmatprep.mubr.bf16.mxu0 0
        %2712 = vmatmul.mubr.bf16.gmra.mxu0 %v865
        %v2713 = vpop.f32.mrf.mxu0
        %v2714 = vadd.f32 0.0, %v2713
        %v2715 = vpop.f32.mrf.mxu0
        %v2716 = vpop.f32.mrf.mxu0
        %v2717 = vpop.f32.mrf.mxu0
        %2718 = vdwg.mxu0
        %v2719 = vadd.f32 %v2670, %v2714
        %2720 = vst.msk [vmem:[#allocation3] sm:$0xff] %vm2006, %v2719
        %p2721 = scmp.eq.s32.totalorder %s36, 1
        // Predicated region
        $region93: #{tpu_custom_call.1} parent=87 // pred_check
          %p2722 = pneg %p2721
        $region94: #{tpu_custom_call.1} parent=87 // pred_check_branch
          %2724 = sbr.rel (%p2722) target = $region96
        $region95: #{tpu_custom_call.1} parent=87 // pred_region
          %v2725 = vld [vmem:[#allocation3] sm:$0xff]
          %v2726 = vadd.f32 %v2725, 1e-16
          %v2727 = vrcp.pop %v2726
          %v2728 = vmul.f32 1.0, %v2727
          %v2730 = vsel %vm2006, %v2728, 0
          %2732 = vmatprep.subr.mxu0 0.0
          %2733 = vmatpush1.msra.mxu0 0.0
          %2734 = vmatprep.subr.mxu0 0.0
          %2735 = vmatpush1.msra.mxu0 0.0
          %2736 = vmatprep.subr.mxu0 0.0
          %2737 = vmatpush1.msra.mxu0 0.0
          %2738 = vmatprep.subr.mxu0 0.0
          %2739 = vmatpush1.msra.mxu0 0.0
          %2740 = vmatprep.subr.mxu0 0.0
          %2741 = vmatpush1.msra.mxu0 0.0
          %2742 = vmatprep.subr.mxu0 0.0
          %2743 = vmatpush1.msra.mxu0 0.0
          %2744 = vmatprep.subr.mxu0 0.0
          %2745 = vmatpush1.msra.mxu0 0.0
          %2746 = vmatprep.subr.mxu0 0.0
          %2747 = vmatpush1.msra.mxu0 0.0
          %2748 = vmatprep.subr.mxu0 0.0
          %2749 = vmatpush1.msra.mxu0 0.0
          %2750 = vmatprep.subr.mxu0 0.0
          %2751 = vmatpush1.msra.mxu0 0.0
          %2752 = vmatprep.subr.mxu0 0.0
          %2753 = vmatpush1.msra.mxu0 0.0
          %2754 = vmatprep.subr.mxu0 0.0
          %2755 = vmatpush1.msra.mxu0 0.0
          %2756 = vmatprep.subr.mxu0 0.0
          %2757 = vmatpush1.msra.mxu0 0.0
          %2758 = vmatprep.subr.mxu0 0.0
          %2759 = vmatpush1.msra.mxu0 0.0
          %2760 = vmatprep.subr.mxu0 0.0
          %2761 = vmatpush1.msra.mxu0 0.0
          %2762 = vmatprep.subr.mxu0 0.0
          %2763 = vmatpush1.msra.mxu0 %v2317
          %2764 = vmatprep.subr.mxu0 0.0
          %2765 = vmatpush2.msra.mxu0 0.0
          %2766 = vmatprep.subr.mxu0 0.0
          %2767 = vmatpush2.msra.mxu0 0.0
          %2768 = vmatprep.subr.mxu0 0.0
          %2769 = vmatpush2.msra.mxu0 0.0
          %2770 = vmatprep.subr.mxu0 0.0
          %2771 = vmatpush2.msra.mxu0 0.0
          %2772 = vmatprep.subr.mxu0 0.0
          %2773 = vmatpush2.msra.mxu0 0.0
          %2774 = vmatprep.subr.mxu0 0.0
          %2775 = vmatpush2.msra.mxu0 0.0
          %2776 = vmatprep.subr.mxu0 0.0
          %2777 = vmatpush2.msra.mxu0 0.0
          %2778 = vmatprep.subr.mxu0 0.0
          %2779 = vmatpush2.msra.mxu0 0.0
          %2780 = vmatprep.subr.mxu0 0.0
          %2781 = vmatpush2.msra.mxu0 0.0
          %2782 = vmatprep.subr.mxu0 0.0
          %2783 = vmatpush2.msra.mxu0 0.0
          %2784 = vmatprep.subr.mxu0 0.0
          %2785 = vmatpush2.msra.mxu0 0.0
          %2786 = vmatprep.subr.mxu0 0.0
          %2787 = vmatpush2.msra.mxu0 0.0
          %2788 = vmatprep.subr.mxu0 0.0
          %2789 = vmatpush2.msra.mxu0 0.0
          %2790 = vmatprep.subr.mxu0 0.0
          %2791 = vmatpush2.msra.mxu0 0.0
          %2792 = vmatprep.subr.mxu0 0.0
          %2793 = vmatpush2.msra.mxu0 0.0
          %2794 = vmatprep.subr.mxu0 0.0
          %2795 = vmatpush2.msra.mxu0 0.0
          %2796 = vmatprep.mubr.f32.mxu0 0.0
          %2797 = vmatmul.mubr.f32.gmra.mxu0 %v2730
          %v2798 = vpop.f32.mrf.mxu0
          %v2799 = vadd.f32 0.0, %v2798
          %v2800 = vpop.f32.mrf.mxu0
          %2801 = vdwg.mxu0
          %v2802 = vld [vmem:[#allocation2] sm:$0xff]
          %v2803 = vmul.f32 %v2802, %v2799
          %v2804 = vpack.c.bf16 %v2803, %v2803
          %v2805 = vld [vmem:[%s11] sm:$0xf]
          %v2806 = vld [vmem:[%s11 + $0x4] sm:$0xf]
          %v2807 = vld [vmem:[%s11 + $0x8] sm:$0xf]
          %v2808 = vld [vmem:[%s11 + $0xc] sm:$0xf]
          %v2809 = vld [vmem:[%s11 + $0x10] sm:$0xf]
          %v2810 = vld [vmem:[%s11 + $0x14] sm:$0xf]
          %v2811 = vld [vmem:[%s11 + $0x18] sm:$0xf]
          %v2812 = vld [vmem:[%s11 + $0x1c] sm:$0xf]
          %v2813 = vld [vmem:[%s12] sm:$0x1]
          %v2815 = vlaneseq
          %v2816 = vshrl.u32 %v2815, 7
          %v2817 = vsub.s32 0, %v2816
          %v2818 = vrot.slane %v2813, %v2817
          %v2828 = vunpack.c.l.b16 %v2805
          %v2829 = vunpack.c.l.b16 %v2806
          %v2830 = vunpack.c.l.b16 %v2807
          %v2831 = vunpack.c.l.b16 %v2808
          %v2832 = vunpack.c.l.b16 %v2809
          %v2833 = vunpack.c.l.b16 %v2810
          %v2834 = vunpack.c.l.b16 %v2811
          %v2835 = vunpack.c.l.b16 %v2812
          %v2836 = vpack.c.b16 %v2829, %v2828
          %v2837 = vpack.c.b16 %v2831, %v2830
          %v2838 = vpack.c.b16 %v2833, %v2832
          %v2839 = vpack.c.b16 %v2835, %v2834
          %v2845 = vsel %vm1653, %v2804, 0
          %2847 = vmatprep.subr.bf16.mxu0 0
          %2848 = vmatpush1.bf16.msra.mxu0 0
          %2849 = vmatprep.subr.bf16.mxu0 0
          %2850 = vmatpush1.bf16.msra.mxu0 0
          %2851 = vmatprep.subr.bf16.mxu0 0
          %2852 = vmatpush1.bf16.msra.mxu0 0
          %2853 = vmatprep.subr.bf16.mxu0 0
          %2854 = vmatpush1.bf16.msra.mxu0 0
          %2855 = vmatprep.subr.bf16.mxu0 0
          %2856 = vmatpush1.bf16.msra.mxu0 %v2839
          %2857 = vmatprep.subr.bf16.mxu0 0
          %2858 = vmatpush1.bf16.msra.mxu0 %v2838
          %2859 = vmatprep.subr.bf16.mxu0 0
          %2860 = vmatpush1.bf16.msra.mxu0 %v2837
          %2861 = vmatprep.subr.bf16.mxu0 0
          %2862 = vmatpush1.bf16.msra.mxu0 %v2836
          %2863 = vmatprep.subr.bf16.mxu0 0
          %2864 = vmatpush2.bf16.msra.mxu0 0
          %2865 = vmatprep.subr.bf16.mxu0 0
          %2866 = vmatpush2.bf16.msra.mxu0 0
          %2867 = vmatprep.subr.bf16.mxu0 0
          %2868 = vmatpush2.bf16.msra.mxu0 0
          %2869 = vmatprep.subr.bf16.mxu0 0
          %2870 = vmatpush2.bf16.msra.mxu0 0
          %2871 = vmatprep.subr.bf16.mxu0 0
          %2872 = vmatpush2.bf16.msra.mxu0 0
          %2873 = vmatprep.subr.bf16.mxu0 0
          %2874 = vmatpush2.bf16.msra.mxu0 0
          %2875 = vmatprep.subr.bf16.mxu0 0
          %2876 = vmatpush2.bf16.msra.mxu0 0
          %2877 = vmatprep.subr.bf16.mxu0 0
          %2878 = vmatpush2.bf16.msra.mxu0 0
          %2879 = vmatprep.mubr.bf16.mxu0 0
          %2880 = vmatmul.mubr.bf16.gmra.mxu0 %v2845
          %v2881 = vpop.f32.mrf.mxu0
          %v2882 = vadd.f32 %v2818, %v2881
          %v2883 = vpop.f32.mrf.mxu0
          %v2884 = vpop.f32.mrf.mxu0
          %v2885 = vpop.f32.mrf.mxu0
          %2886 = vdwg.mxu0
          %v2887 = vld [vmem:[%s598] sm:$0xf]
          %v2888 = vld [vmem:[%s13] sm:$0xf]
          %v2889 = vld [vmem:[%s13 + $0x4] sm:$0xf]
          %v2890 = vld [vmem:[%s13 + $0x8] sm:$0xf]
          %v2891 = vld [vmem:[%s13 + $0xc] sm:$0xf]
          %v2892 = vld [vmem:[%s15] sm:$0x1]
          %v2894 = vlaneseq
          %v2895 = vshrl.u32 %v2894, 7
          %v2896 = vsub.s32 0, %v2895
          %v2897 = vrot.slane %v2892, %v2896
          %v2903 = vunpack.c.l.b16 %v2888
          %v2904 = vunpack.c.l.b16 %v2889
          %v2905 = vunpack.c.l.b16 %v2890
          %v2906 = vunpack.c.l.b16 %v2891
          %v2907 = vpack.c.b16 %v2904, %v2903
          %v2908 = vpack.c.b16 %v2906, %v2905
          %v2912 = vsel %vm1154, %v2887, 0
          %2914 = vmatprep.subr.bf16.mxu0 0
          %2915 = vmatpush1.bf16.msra.mxu0 0
          %2916 = vmatprep.subr.bf16.mxu0 0
          %2917 = vmatpush1.bf16.msra.mxu0 0
          %2918 = vmatprep.subr.bf16.mxu0 0
          %2919 = vmatpush1.bf16.msra.mxu0 0
          %2920 = vmatprep.subr.bf16.mxu0 0
          %2921 = vmatpush1.bf16.msra.mxu0 0
          %2922 = vmatprep.subr.bf16.mxu0 0
          %2923 = vmatpush1.bf16.msra.mxu0 0
          %2924 = vmatprep.subr.bf16.mxu0 0
          %2925 = vmatpush1.bf16.msra.mxu0 0
          %2926 = vmatprep.subr.bf16.mxu0 0
          %2927 = vmatpush1.bf16.msra.mxu0 %v2908
          %2928 = vmatprep.subr.bf16.mxu0 0
          %2929 = vmatpush1.bf16.msra.mxu0 %v2907
          %2930 = vmatprep.subr.bf16.mxu0 0
          %2931 = vmatpush2.bf16.msra.mxu0 0
          %2932 = vmatprep.subr.bf16.mxu0 0
          %2933 = vmatpush2.bf16.msra.mxu0 0
          %2934 = vmatprep.subr.bf16.mxu0 0
          %2935 = vmatpush2.bf16.msra.mxu0 0
          %2936 = vmatprep.subr.bf16.mxu0 0
          %2937 = vmatpush2.bf16.msra.mxu0 0
          %2938 = vmatprep.subr.bf16.mxu0 0
          %2939 = vmatpush2.bf16.msra.mxu0 0
          %2940 = vmatprep.subr.bf16.mxu0 0
          %2941 = vmatpush2.bf16.msra.mxu0 0
          %2942 = vmatprep.subr.bf16.mxu0 0
          %2943 = vmatpush2.bf16.msra.mxu0 0
          %2944 = vmatprep.subr.bf16.mxu0 0
          %2945 = vmatpush2.bf16.msra.mxu0 0
          %2946 = vmatprep.mubr.bf16.mxu0 0
          %2947 = vmatmul.mubr.bf16.gmra.mxu0 %v2912
          %v2948 = vpop.f32.mrf.mxu0
          %v2949 = vadd.f32 %v2897, %v2948
          %v2950 = vpop.f32.mrf.mxu0
          %v2951 = vpop.f32.mrf.mxu0
          %v2952 = vpop.f32.mrf.mxu0
          %2953 = vdwg.mxu0
          %v2954 = vpack.c.bf16 %v2882, %v2882
          %v2955 = vld [vmem:[%s14] sm:$0xf]
          %v2956 = vld [vmem:[%s14 + $0x4] sm:$0xf]
          %v2957 = vld [vmem:[%s14 + $0x8] sm:$0xf]
          %v2958 = vld [vmem:[%s14 + $0xc] sm:$0xf]
          %v2959 = vld [vmem:[%s16] sm:$0x1]
          %v2961 = vlaneseq
          %v2962 = vshrl.u32 %v2961, 7
          %v2963 = vsub.s32 0, %v2962
          %v2964 = vrot.slane %v2959, %v2963
          %v2970 = vunpack.c.l.b16 %v2955
          %v2971 = vunpack.c.l.b16 %v2956
          %v2972 = vunpack.c.l.b16 %v2957
          %v2973 = vunpack.c.l.b16 %v2958
          %v2974 = vpack.c.b16 %v2971, %v2970
          %v2975 = vpack.c.b16 %v2973, %v2972
          %v2979 = vsel %vm1154, %v2954, 0
          %2981 = vmatprep.subr.bf16.mxu0 0
          %2982 = vmatpush1.bf16.msra.mxu0 0
          %2983 = vmatprep.subr.bf16.mxu0 0
          %2984 = vmatpush1.bf16.msra.mxu0 0
          %2985 = vmatprep.subr.bf16.mxu0 0
          %2986 = vmatpush1.bf16.msra.mxu0 0
          %2987 = vmatprep.subr.bf16.mxu0 0
          %2988 = vmatpush1.bf16.msra.mxu0 0
          %2989 = vmatprep.subr.bf16.mxu0 0
          %2990 = vmatpush1.bf16.msra.mxu0 0
          %2991 = vmatprep.subr.bf16.mxu0 0
          %2992 = vmatpush1.bf16.msra.mxu0 0
          %2993 = vmatprep.subr.bf16.mxu0 0
          %2994 = vmatpush1.bf16.msra.mxu0 %v2975
          %2995 = vmatprep.subr.bf16.mxu0 0
          %2996 = vmatpush1.bf16.msra.mxu0 %v2974
          %2997 = vmatprep.subr.bf16.mxu0 0
          %2998 = vmatpush2.bf16.msra.mxu0 0
          %2999 = vmatprep.subr.bf16.mxu0 0
          %3000 = vmatpush2.bf16.msra.mxu0 0
          %3001 = vmatprep.subr.bf16.mxu0 0
          %3002 = vmatpush2.bf16.msra.mxu0 0
          %3003 = vmatprep.subr.bf16.mxu0 0
          %3004 = vmatpush2.bf16.msra.mxu0 0
          %3005 = vmatprep.subr.bf16.mxu0 0
          %3006 = vmatpush2.bf16.msra.mxu0 0
          %3007 = vmatprep.subr.bf16.mxu0 0
          %3008 = vmatpush2.bf16.msra.mxu0 0
          %3009 = vmatprep.subr.bf16.mxu0 0
          %3010 = vmatpush2.bf16.msra.mxu0 0
          %3011 = vmatprep.subr.bf16.mxu0 0
          %3012 = vmatpush2.bf16.msra.mxu0 0
          %3013 = vmatprep.mubr.bf16.mxu0 0
          %3014 = vmatmul.mubr.bf16.gmra.mxu0 %v2979
          %v3015 = vpop.f32.mrf.mxu0
          %v3016 = vadd.f32 %v2964, %v3015
          %v3017 = vpop.f32.mrf.mxu0
          %v3018 = vpop.f32.mrf.mxu0
          %v3019 = vpop.f32.mrf.mxu0
          %3020 = vdwg.mxu0
          %v3021 = vadd.f32 %v2949, %v3016
          %v3022 = vxor.u32 %v3021, 2147483648
          %v3023 = vmul.f32 %v3022, 1.442695
          %v3024 = vpow.pop %v3023
          %v3025 = vadd.f32 %v3024, 1.0
          %v3026 = vrcp.pop %v3025
          %v3027 = vmul.f32 1.0, %v3026
          %3029 = vrot.lane.b32.xlu0 %v3016, 64
          %v3030 = vpop.permute.xlu0 %3029
          %v3032 = vmul.f32 %v3027, %v3030
          %3034 = vrot.lane.b32.xlu0 %v3032, 64
          %v3035 = vpop.permute.xlu0 %3034
          %v3037 = vadd.f32 %v2949, %v3035
          %v3038 = vtanh.pop %v3037
          %v3039 = vsub.f32 1.0, %v3027
          %3041 = vrot.lane.b32.xlu0 %v3038, 96
          %v3042 = vpop.permute.xlu0 %3041
          %v3044 = vmul.f32 %v3039, %v3042
          %3046 = vrot.lane.b32.xlu0 %v2882, 32
          %v3047 = vpop.permute.xlu0 %3046
          %v3049 = vmul.f32 %v3027, %v3047
          %v3050 = vadd.f32 %v3044, %v3049
          %3052 = vrot.lane.b32.xlu0 %v3050, 96
          %v3053 = vpop.permute.xlu0 %3052
          %3055 = vst.msk [vmem:[%s594] sm:$0xff] %vm1154, %v3053
        $region96: #{tpu_custom_call.1} parent=87 // pred_fallthru
          _
        %s3056 = sand.u32 %s428, 1
        %s3057 = scalar_lea.sflag [#allocation6], %s3056
        %s3058 = sand.u32 %s428, 1
        %s3059 = smul.addr %s3058, 8
        %s3060 = scalar_lea.vmem [#allocation5], %s3059
        // Predicated region
        $region97: #{tpu_custom_call.1} parent=87 // pred_check
          %p3061 = pneg %p438
        $region98: #{tpu_custom_call.1} parent=87 // pred_check_branch
          %3063 = sbr.rel (%p3061) target = $region100
        $region99: #{tpu_custom_call.1} parent=87 // pred_region
          %s3065 = ssub.s32 128, 128
          %3066 = vsyncadd %s3057, %s3065
          %s3067 = smul.addr %s35, 128
          %s3068 = scalar_lea.hbm %s17, %s3067
          %s3070 = sshll.u32 %s3060, 4
          %s3071 = int_to_ptr.vmem [resolvable:$true] %s3070
          %3073 = dma.vmem_to_hbm [thread:$0]  %s3071, 128, %s3068, %s3057
        $region100: #{tpu_custom_call.1} parent=87 // pred_fallthru
          _
      $region88: #{tpu_custom_call.1} parent=5 // pred_fallthru
        _
      %p3074 = scmp.le.s32.totalorder 2, %s26
      // Predicated region
      $region101: #{tpu_custom_call.1} parent=5 // pred_check
        %p3075 = pneg %p3074
      $region102: #{tpu_custom_call.1} parent=5 // pred_check_branch
        %3077 = sbr.rel (%p3075) target = $region104
      $region103: #{tpu_custom_call.1} parent=5 // pred_region
        %s3078 = ssub.s32 %s26, 2
        // Predicated region
        $region105: #{tpu_custom_call.1} parent=103 // pred_check
          %p3079 = pneg %p444
        $region106: #{tpu_custom_call.1} parent=103 // pred_check_branch
          %3081 = sbr.rel (%p3079) target = $region108
        $region107: #{tpu_custom_call.1} parent=103 // pred_region
          %s3082 = sand.u32 %s429, 1
          %s3083 = scalar_lea.sflag [#allocation6], %s3082
          %s3084 = sand.u32 %s429, 1
          %s3085 = smul.addr %s3084, 8
          %s3086 = scalar_lea.vmem [#allocation5], %s3085
          %3087 = dma.done %s3083, 128
        $region108: #{tpu_custom_call.1} parent=103 // pred_fallthru
          _
      $region104: #{tpu_custom_call.1} parent=5 // pred_fallthru
        _
    $region6: #{tpu_custom_call.1} parent=1 // loop_footer
      %s30 = sadd.s32 1, %s26
    $region7: #{tpu_custom_call.1} parent=1 // loop_footer_branch
      %25 = sbr.rel target = $region3
    $region8: #{tpu_custom_call.1} parent=1 // loop_exit
      _
    %3088 = vsyncpa [#allocation6], 1
    %s3089 = scalar_lea.sflag [#allocation6], 1
    %3090 = vsyncpa %s3089, 1

</llo_original>
